<compile_context>
chip_gen: v7x
topology: tpu7x:2x2x1
jax: 0.10.0
libtpu: 0.0.40
codegen_flags: <defaults>
</compile_context>

<pallas_src>
import numpy as np
import jax
import jax.numpy as jnp
from jax import lax
from jax.experimental import pallas as pl
from jax.experimental.pallas import tpu as pltpu

EPS = 1e-5
# Tap order k = 3*(di+1) + (dj+1) -- used consistently everywhere below.
TAPS = tuple((di, dj) for di in (-1, 0, 1) for dj in (-1, 0, 1))


def rk4_integrate(f, y0, nsteps):
    """Fixed-step classical RK4 from t=0 to t=1 (plain-JAX reference helper)."""
    dt = 1.0 / nsteps
    y = y0
    for n in range(nsteps):
        t = n * dt
        k1 = f(t, y)
        k2 = f(t + 0.5 * dt, y + 0.5 * dt * k1)
        k3 = f(t + 0.5 * dt, y + 0.5 * dt * k2)
        k4 = f(t + dt, y + dt * k3)
        y = y + (dt / 6.0) * (k1 + 2.0 * k2 + 2.0 * k3 + k4)
    return y


def build_taps(H, W):
    """Flat-spatial shift offsets and zero-padding validity masks for 3x3 conv."""
    P = H * W
    shifts = []
    V = np.zeros((len(TAPS), P), np.float32)
    for k, (di, dj) in enumerate(TAPS):
        shifts.append(di * W + dj)
        for i in range(H):
            for j in range(W):
                if 0 <= i + di < H and 0 <= j + dj < W:
                    V[k, i * W + j] = 1.0
    return shifts, V


def build_mix_matrix(w, B):
    """ConcatConv2d weight (Cout, Cin+1, 3, 3) (input channel 0 = time) ->
    fused per-tap, batch-block-diagonal mixing matrix (B*Cout, 9*B*Cin)."""
    eye = jnp.eye(B, dtype=jnp.float32)
    blocks = []
    for (di, dj) in TAPS:
        wk = w[:, 1:, di + 1, dj + 1].astype(jnp.float32)   # (Cout, Cin)
        blocks.append(jnp.kron(eye, wk))                    # (B*Cout, B*Cin)
    return jnp.concatenate(blocks, axis=1)                  # (B*Cout, 9*B*Cin)


def build_time_term(w, V, B):
    """Coefficient of t in the conv output: T[b*C+co, p] = sum_k wt_k[co] * V[k, p]."""
    C = w.shape[0]
    wt = w[:, 0, :, :].reshape(C, 9).astype(jnp.float32)    # tap order == TAPS order
    T = wt @ jnp.asarray(V)                                 # (C, P)
    return jnp.tile(T, (B, 1))                              # (B*C, P)


def make_ode_kernel(BC, P, shifts, full_mask, nsteps):
    nk = len(shifts)
    dt = 1.0 / nsteps

    def kernel(x_ref, m_ref, w1_ref, w2_ref, t1_ref, t2_ref, cb_ref, gn_ref, o_ref):
        ones_col = jnp.ones((P, 1), jnp.float32)
        inv_p = jnp.float32(1.0 / P)

        def group_norm(y, idx):
            # groups == channels: per-(b, c) row normalization over the lane
            # (spatial) axis.  Both sums computed with ONE MXU dot against a
            # constant ones column; full-width work is just y*a + c.
            stacked = jnp.concatenate([y, y * y], axis=0)                     # (2*BC, P)
            sums = jnp.dot(stacked, ones_col,
                           preferred_element_type=jnp.float32)               # (2*BC, 1)
            mean = sums[:BC] * inv_p
            var = jnp.maximum(sums[BC:] * inv_p - mean * mean, 0.0)
            a = gn_ref[2 * idx] * lax.rsqrt(var + EPS)                        # (BC, 1)
            c = gn_ref[2 * idx + 1] - mean * a                                # (BC, 1)
            return y * a + c

        def concat_conv(y, w_ref, term):
            # 3x3 zero-padded conv with a constant-t input channel:
            # 9 spatial shifts via pltpu.roll on the flat spatial (lane) axis,
            # masked at image boundaries (mask loaded next to its use; center
            # tap's all-ones mask skipped), then ONE fused bf16 MXU matmul
            # that mixes all 9 taps; t-channel + bias folded into `term`.
            parts = []
            for k in range(nk):
                s = shifts[k]
                ysh = y if s == 0 else pltpu.roll(y, (-s) % P, 1)
                if full_mask[k]:
                    parts.append(ysh)
                else:
                    parts.append(m_ref[k] * ysh)
            ys = jnp.concatenate(parts, axis=0).astype(jnp.bfloat16)          # (9*BC, P)
            out = jnp.dot(w_ref[...], ys, preferred_element_type=jnp.float32)  # (BC, P)
            return out + term

        def odefunc(term1, term2, y):
            h = group_norm(y, 0)
            h = jnp.maximum(h, 0.0)
            h = concat_conv(h, w1_ref, term1)
            h = group_norm(h, 1)
            h = jnp.maximum(h, 0.0)
            h = concat_conv(h, w2_ref, term2)
            return group_norm(h, 2)

        def make_terms(t):
            # Per-time conv additive term: t * T + conv_bias (reused for k2/k3).
            return (t * t1_ref[...] + cb_ref[0],
                    t * t2_ref[...] + cb_ref[1])

        def rk4_step(n, y):
            t0 = n.astype(jnp.float32) * dt
            terms0 = make_terms(t0)
            termsh = make_terms(t0 + 0.5 * dt)   # shared by k2 and k3
            terms1 = make_terms(t0 + dt)
            k1 = odefunc(*terms0, y)
            k2 = odefunc(*termsh, y + (0.5 * dt) * k1)
            k3 = odefunc(*termsh, y + (0.5 * dt) * k2)
            k4 = odefunc(*terms1, y + dt * k3)
            return y + (dt / 6.0) * (k1 + 2.0 * k2 + 2.0 * k3 + k4)

        # Outer integration loop as fori_loop (bounds live ranges); the 4 RK
        # substeps remain unrolled inside the body.
        o_ref[...] = lax.fori_loop(0, nsteps, rk4_step, x_ref[...])

    return kernel


def ode_block_forward(x_nchw, params, nsteps=4):
    B, C, H, W = x_nchw.shape
    assert C <= 32, "GroupNorm groups == C assumption requires C <= 32"
    P = H * W
    BC = B * C
    (g1, b1, w1, cb1, g2, b2, w2, cb2, g3, b3) = params

    shifts, V = build_taps(H, W)
    full_mask = tuple(bool(np.all(V[k] == 1.0)) for k in range(len(TAPS)))

    # bf16 MXU operands for the fused conv matmuls (f32 accumulation).
    W1 = build_mix_matrix(w1, B).astype(jnp.bfloat16)        # (BC, 9*BC)
    W2 = build_mix_matrix(w2, B).astype(jnp.bfloat16)
    T1 = build_time_term(w1, V, B)                           # (BC, P) f32
    T2 = build_time_term(w2, V, B)

    # Pre-broadcast boundary masks: (9, BC, P) f32 (~72 KiB, negligible).
    masks = jnp.asarray(np.ascontiguousarray(
        np.broadcast_to(V[:, None, :], (9, BC, P))))

    def tile_c(v):                               # per-channel (C,) -> (B*C, 1)
        return jnp.tile(v.astype(jnp.float32), (B,)).reshape(BC, 1)

    cb = jnp.stack([tile_c(cb1), tile_c(cb2)])                            # (2, BC, 1)
    gn = jnp.stack([tile_c(g1), tile_c(b1), tile_c(g2), tile_c(b2),
                    tile_c(g3), tile_c(b3)])                              # (6, BC, 1)

    # NCHW -> (B*C, H*W): pure reshape; spatial lands on the lane axis.
    x2d = x_nchw.reshape(BC, P).astype(jnp.float32)

    # Single invocation, whole arrays resident in VMEM (total footprint < 1 MiB).
    out2d = pl.pallas_call(
        make_ode_kernel(BC, P, shifts, full_mask, nsteps),
        out_shape=jax.ShapeDtypeStruct((BC, P), jnp.float32),
    )(x2d, masks, W1, W2, T1, T2, cb, gn)

    # (B*C, H*W) -> NCHW: pure reshape.
    return out2d.reshape(B, C, H, W).astype(x_nchw.dtype)


def ode_block_reference(x_nchw, params, nsteps=4):
    """Plain-JAX NCHW reference with the same fixed-step RK4 integrator (all f32)."""
    (g1, b1, w1, cb1, g2, b2, w2, cb2, g3, b3) = params

    def gn(y, g, b):
        m = jnp.mean(y, axis=(2, 3), keepdims=True)
        v = jnp.mean((y - m) ** 2, axis=(2, 3), keepdims=True)
        return (y - m) * lax.rsqrt(v + EPS) * g[None, :, None, None] + b[None, :, None, None]

    def cconv(t, y, w, cbias):
        Bh, Ch, Hh, Wh = y.shape
        tt = jnp.full((Bh, 1, Hh, Wh), t, y.dtype)
        ttx = jnp.concatenate([tt, y], axis=1)
        out = lax.conv_general_dilated(
            ttx, w, window_strides=(1, 1), padding=((1, 1), (1, 1)),
            dimension_numbers=("NCHW", "OIHW", "NCHW"),
            precision=lax.Precision.HIGHEST)
        return out + cbias[None, :, None, None]

    def odefunc(t, y):
        out = gn(y, g1, b1)
        out = jnp.maximum(out, 0.0)
        out = cconv(t, out, w1, cb1)
        out = gn(out, g2, b2)
        out = jnp.maximum(out, 0.0)
        out = cconv(t, out, w2, cb2)
        return gn(out, g3, b3)

    return rk4_integrate(odefunc, x_nchw, nsteps)


if __name__ == "__main__":
    key = jax.random.PRNGKey(0)
    B, C, H, W = 2, 4, 16, 16   # PyTorch NCHW input shape
    keys = jax.random.split(key, 8)

    x = jax.random.normal(keys[0], (B, C, H, W), jnp.float32)

    # Deterministic parameter init (shapes from ODEfunc(dim=C)):
    g1 = jnp.ones((C,), jnp.float32)
    b1 = jnp.zeros((C,), jnp.float32)
    g2 = 1.0 + 0.1 * jax.random.normal(keys[1], (C,), jnp.float32)
    b2 = 0.1 * jax.random.normal(keys[2], (C,), jnp.float32)
    g3 = 1.0 + 0.1 * jax.random.normal(keys[3], (C,), jnp.float32)
    b3 = 0.1 * jax.random.normal(keys[4], (C,), jnp.float32)
    w1 = 0.1 * jax.random.normal(keys[5], (C, C + 1, 3, 3), jnp.float32)   # ConcatConv2d #1
    cb1 = 0.05 * jax.random.normal(keys[6], (C,), jnp.float32)
    w2 = 0.1 * jax.random.normal(keys[7], (C, C + 1, 3, 3), jnp.float32)   # ConcatConv2d #2
    cb2 = jnp.zeros((C,), jnp.float32)
    params = (g1, b1, w1, cb1, g2, b2, w2, cb2, g3, b3)

    out = jax.block_until_ready(ode_block_forward(x, params, nsteps=4))
    ref = jax.block_until_ready(ode_block_reference(x, params, nsteps=4))

    assert out.shape == x.shape and out.dtype == x.dtype
    err = float(jnp.max(jnp.abs(out - ref)))
    # Tolerance widened vs. the all-f32 version: the kernel's fused conv
    # matmuls use bf16 operands (f32 accumulate), the reference is f32 HIGHEST.
    assert err < 5e-2, f"max abs err vs reference: {err}"
    print("KERNEL_OK")
</pallas_src>

<mosaic_0001>
module attributes {stable_mosaic.version = 11 : i64} {
  func.func @kernel(%arg0: memref<8x256xf32, #tpu.memory_space<vmem>>, %arg1: memref<9x8x256xf32, #tpu.memory_space<vmem>>, %arg2: memref<8x72xbf16, #tpu.memory_space<vmem>>, %arg3: memref<8x72xbf16, #tpu.memory_space<vmem>>, %arg4: memref<8x256xf32, #tpu.memory_space<vmem>>, %arg5: memref<8x256xf32, #tpu.memory_space<vmem>>, %arg6: memref<2x8x1xf32, #tpu.memory_space<vmem>>, %arg7: memref<6x8x1xf32, #tpu.memory_space<vmem>>, %arg8: memref<8x256xf32, #tpu.memory_space<vmem>>) attributes {dimension_semantics = [], scalar_prefetch = 0 : i64, scratch_operands = 0 : i64, tpu.core_type = #tpu.core_type<tc>} {
    %cst = arith.constant 1.000000e+00 : f32
    %0 = vector.broadcast %cst : f32 to vector<256x1xf32>
    %c0 = arith.constant 0 : index
    %c0_0 = arith.constant 0 : index
    %1 = vector.load %arg0[%c0, %c0_0] : memref<8x256xf32, #tpu.memory_space<vmem>>, vector<8x256xf32>
    %cst_1 = arith.constant 3.906250e-03 : f32
    %c0_i32 = arith.constant 0 : i32
    %c4_i32 = arith.constant 4 : i32
    %2 = arith.addi %c0_i32, %c4_i32 : i32
    %c1_i32 = arith.constant 1 : i32
    %3 = scf.for %arg9 = %c0_i32 to %2 step %c1_i32 iter_args(%arg10 = %1) -> (vector<8x256xf32>)  : i32 {
      %5 = arith.sitofp %arg9 : i32 to f32
      %cst_5 = arith.constant 2.500000e-01 : f32
      %6 = arith.mulf %5, %cst_5 : f32
      %c0_6 = arith.constant 0 : index
      %c0_7 = arith.constant 0 : index
      %7 = vector.load %arg4[%c0_6, %c0_7] : memref<8x256xf32, #tpu.memory_space<vmem>>, vector<8x256xf32>
      %8 = vector.broadcast %6 : f32 to vector<8x256xf32>
      %9 = arith.mulf %8, %7 : vector<8x256xf32>
      %c0_8 = arith.constant 0 : index
      %c0_9 = arith.constant 0 : index
      %c0_10 = arith.constant 0 : index
      %10 = vector.load %arg6[%c0_8, %c0_9, %c0_10] : memref<2x8x1xf32, #tpu.memory_space<vmem>>, vector<1x8x1xf32>
      %11 = vector.shape_cast %10 : vector<1x8x1xf32> to vector<8x1xf32>
      %12 = vector.broadcast %11 : vector<8x1xf32> to vector<8x256xf32>
      %13 = arith.addf %9, %12 : vector<8x256xf32>
      %c0_11 = arith.constant 0 : index
      %c0_12 = arith.constant 0 : index
      %14 = vector.load %arg5[%c0_11, %c0_12] : memref<8x256xf32, #tpu.memory_space<vmem>>, vector<8x256xf32>
      %15 = vector.broadcast %6 : f32 to vector<8x256xf32>
      %16 = arith.mulf %15, %14 : vector<8x256xf32>
      %c1 = arith.constant 1 : index
      %c0_13 = arith.constant 0 : index
      %c0_14 = arith.constant 0 : index
      %17 = vector.load %arg6[%c1, %c0_13, %c0_14] : memref<2x8x1xf32, #tpu.memory_space<vmem>>, vector<1x8x1xf32>
      %18 = vector.shape_cast %17 : vector<1x8x1xf32> to vector<8x1xf32>
      %19 = vector.broadcast %18 : vector<8x1xf32> to vector<8x256xf32>
      %20 = arith.addf %16, %19 : vector<8x256xf32>
      %cst_15 = arith.constant 1.250000e-01 : f32
      %21 = arith.addf %6, %cst_15 : f32
      %c0_16 = arith.constant 0 : index
      %c0_17 = arith.constant 0 : index
      %22 = vector.load %arg4[%c0_16, %c0_17] : memref<8x256xf32, #tpu.memory_space<vmem>>, vector<8x256xf32>
      %23 = vector.broadcast %21 : f32 to vector<8x256xf32>
      %24 = arith.mulf %23, %22 : vector<8x256xf32>
      %c0_18 = arith.constant 0 : index
      %c0_19 = arith.constant 0 : index
      %c0_20 = arith.constant 0 : index
      %25 = vector.load %arg6[%c0_18, %c0_19, %c0_20] : memref<2x8x1xf32, #tpu.memory_space<vmem>>, vector<1x8x1xf32>
      %26 = vector.shape_cast %25 : vector<1x8x1xf32> to vector<8x1xf32>
      %27 = vector.broadcast %26 : vector<8x1xf32> to vector<8x256xf32>
      %28 = arith.addf %24, %27 : vector<8x256xf32>
      %c0_21 = arith.constant 0 : index
      %c0_22 = arith.constant 0 : index
      %29 = vector.load %arg5[%c0_21, %c0_22] : memref<8x256xf32, #tpu.memory_space<vmem>>, vector<8x256xf32>
      %30 = vector.broadcast %21 : f32 to vector<8x256xf32>
      %31 = arith.mulf %30, %29 : vector<8x256xf32>
      %c1_23 = arith.constant 1 : index
      %c0_24 = arith.constant 0 : index
      %c0_25 = arith.constant 0 : index
      %32 = vector.load %arg6[%c1_23, %c0_24, %c0_25] : memref<2x8x1xf32, #tpu.memory_space<vmem>>, vector<1x8x1xf32>
      %33 = vector.shape_cast %32 : vector<1x8x1xf32> to vector<8x1xf32>
      %34 = vector.broadcast %33 : vector<8x1xf32> to vector<8x256xf32>
      %35 = arith.addf %31, %34 : vector<8x256xf32>
      %cst_26 = arith.constant 2.500000e-01 : f32
      %36 = arith.addf %6, %cst_26 : f32
      %c0_27 = arith.constant 0 : index
      %c0_28 = arith.constant 0 : index
      %37 = vector.load %arg4[%c0_27, %c0_28] : memref<8x256xf32, #tpu.memory_space<vmem>>, vector<8x256xf32>
      %38 = vector.broadcast %36 : f32 to vector<8x256xf32>
      %39 = arith.mulf %38, %37 : vector<8x256xf32>
      %c0_29 = arith.constant 0 : index
      %c0_30 = arith.constant 0 : index
      %c0_31 = arith.constant 0 : index
      %40 = vector.load %arg6[%c0_29, %c0_30, %c0_31] : memref<2x8x1xf32, #tpu.memory_space<vmem>>, vector<1x8x1xf32>
      %41 = vector.shape_cast %40 : vector<1x8x1xf32> to vector<8x1xf32>
      %42 = vector.broadcast %41 : vector<8x1xf32> to vector<8x256xf32>
      %43 = arith.addf %39, %42 : vector<8x256xf32>
      %c0_32 = arith.constant 0 : index
      %c0_33 = arith.constant 0 : index
      %44 = vector.load %arg5[%c0_32, %c0_33] : memref<8x256xf32, #tpu.memory_space<vmem>>, vector<8x256xf32>
      %45 = vector.broadcast %36 : f32 to vector<8x256xf32>
      %46 = arith.mulf %45, %44 : vector<8x256xf32>
      %c1_34 = arith.constant 1 : index
      %c0_35 = arith.constant 0 : index
      %c0_36 = arith.constant 0 : index
      %47 = vector.load %arg6[%c1_34, %c0_35, %c0_36] : memref<2x8x1xf32, #tpu.memory_space<vmem>>, vector<1x8x1xf32>
      %48 = vector.shape_cast %47 : vector<1x8x1xf32> to vector<8x1xf32>
      %49 = vector.broadcast %48 : vector<8x1xf32> to vector<8x256xf32>
      %50 = arith.addf %46, %49 : vector<8x256xf32>
      %51 = arith.mulf %arg10, %arg10 : vector<8x256xf32>
      %52 = tpu.concatenate %arg10, %51 in 0 : vector<8x256xf32>, vector<8x256xf32> -> vector<16x256xf32>
      %cst_37 = arith.constant dense<0.000000e+00> : vector<16x1xf32>
      %53 = tpu.matmul %52, %0, %cst_37 {dimension_numbers = #tpu.dot_dimension_numbers<[1], [0], [0], [1], [0, 0, 1, 1], [], []>} : vector<16x256xf32>, vector<256x1xf32>, vector<16x1xf32> -> vector<16x1xf32>
      %54 = vector.extract_strided_slice %53 {offsets = [0, 0], sizes = [8, 1], strides = [1, 1]} : vector<16x1xf32> to vector<8x1xf32>
      %55 = vector.broadcast %cst_1 : f32 to vector<8x1xf32>
      %56 = arith.mulf %54, %55 : vector<8x1xf32>
      %57 = vector.extract_strided_slice %53 {offsets = [8, 0], sizes = [8, 1], strides = [1, 1]} : vector<16x1xf32> to vector<8x1xf32>
      %58 = vector.broadcast %cst_1 : f32 to vector<8x1xf32>
      %59 = arith.mulf %57, %58 : vector<8x1xf32>
      %60 = arith.mulf %56, %56 : vector<8x1xf32>
      %61 = arith.subf %59, %60 : vector<8x1xf32>
      %cst_38 = arith.constant 0.000000e+00 : f32
      %62 = vector.broadcast %cst_38 : f32 to vector<8x1xf32>
      %63 = arith.maximumf %61, %62 : vector<8x1xf32>
      %c0_39 = arith.constant 0 : index
      %c0_40 = arith.constant 0 : index
      %c0_41 = arith.constant 0 : index
      %64 = vector.load %arg7[%c0_39, %c0_40, %c0_41] : memref<6x8x1xf32, #tpu.memory_space<vmem>>, vector<1x8x1xf32>
      %65 = vector.shape_cast %64 : vector<1x8x1xf32> to vector<8x1xf32>
      %cst_42 = arith.constant 9.99999974E-6 : f32
      %66 = vector.broadcast %cst_42 : f32 to vector<8x1xf32>
      %67 = arith.addf %63, %66 : vector<8x1xf32>
      %68 = math.rsqrt %67 : vector<8x1xf32>
      %69 = arith.mulf %65, %68 : vector<8x1xf32>
      %c1_43 = arith.constant 1 : index
      %c0_44 = arith.constant 0 : index
      %c0_45 = arith.constant 0 : index
      %70 = vector.load %arg7[%c1_43, %c0_44, %c0_45] : memref<6x8x1xf32, #tpu.memory_space<vmem>>, vector<1x8x1xf32>
      %71 = vector.shape_cast %70 : vector<1x8x1xf32> to vector<8x1xf32>
      %72 = arith.mulf %56, %69 : vector<8x1xf32>
      %73 = arith.subf %71, %72 : vector<8x1xf32>
      %74 = vector.broadcast %69 : vector<8x1xf32> to vector<8x256xf32>
      %75 = arith.mulf %arg10, %74 : vector<8x256xf32>
      %76 = vector.broadcast %73 : vector<8x1xf32> to vector<8x256xf32>
      %77 = arith.addf %75, %76 : vector<8x256xf32>
      %cst_46 = arith.constant 0.000000e+00 : f32
      %78 = vector.broadcast %cst_46 : f32 to vector<8x256xf32>
      %79 = arith.maximumf %77, %78 : vector<8x256xf32>
      %c17_i32 = arith.constant 17 : i32
      %80 = tpu.dynamic_rotate %79 by %c17_i32 dim 1 : vector<8x256xf32>, i32 -> vector<8x256xf32>
      %c0_47 = arith.constant 0 : index
      %c0_48 = arith.constant 0 : index
      %c0_49 = arith.constant 0 : index
      %81 = vector.load %arg1[%c0_47, %c0_48, %c0_49] : memref<9x8x256xf32, #tpu.memory_space<vmem>>, vector<1x8x256xf32>
      %82 = vector.shape_cast %81 : vector<1x8x256xf32> to vector<8x256xf32>
      %83 = arith.mulf %82, %80 : vector<8x256xf32>
      %c16_i32 = arith.constant 16 : i32
      %84 = tpu.dynamic_rotate %79 by %c16_i32 dim 1 : vector<8x256xf32>, i32 -> vector<8x256xf32>
      %c1_50 = arith.constant 1 : index
      %c0_51 = arith.constant 0 : index
      %c0_52 = arith.constant 0 : index
      %85 = vector.load %arg1[%c1_50, %c0_51, %c0_52] : memref<9x8x256xf32, #tpu.memory_space<vmem>>, vector<1x8x256xf32>
      %86 = vector.shape_cast %85 : vector<1x8x256xf32> to vector<8x256xf32>
      %87 = arith.mulf %86, %84 : vector<8x256xf32>
      %c15_i32 = arith.constant 15 : i32
      %88 = tpu.dynamic_rotate %79 by %c15_i32 dim 1 : vector<8x256xf32>, i32 -> vector<8x256xf32>
      %c2 = arith.constant 2 : index
      %c0_53 = arith.constant 0 : index
      %c0_54 = arith.constant 0 : index
      %89 = vector.load %arg1[%c2, %c0_53, %c0_54] : memref<9x8x256xf32, #tpu.memory_space<vmem>>, vector<1x8x256xf32>
      %90 = vector.shape_cast %89 : vector<1x8x256xf32> to vector<8x256xf32>
      %91 = arith.mulf %90, %88 : vector<8x256xf32>
      %c1_i32_55 = arith.constant 1 : i32
      %92 = tpu.dynamic_rotate %79 by %c1_i32_55 dim 1 : vector<8x256xf32>, i32 -> vector<8x256xf32>
      %c3 = arith.constant 3 : index
      %c0_56 = arith.constant 0 : index
      %c0_57 = arith.constant 0 : index
      %93 = vector.load %arg1[%c3, %c0_56, %c0_57] : memref<9x8x256xf32, #tpu.memory_space<vmem>>, vector<1x8x256xf32>
      %94 = vector.shape_cast %93 : vector<1x8x256xf32> to vector<8x256xf32>
      %95 = arith.mulf %94, %92 : vector<8x256xf32>
      %c255_i32 = arith.constant 255 : i32
      %96 = tpu.dynamic_rotate %79 by %c255_i32 dim 1 : vector<8x256xf32>, i32 -> vector<8x256xf32>
      %c5 = arith.constant 5 : index
      %c0_58 = arith.constant 0 : index
      %c0_59 = arith.constant 0 : index
      %97 = vector.load %arg1[%c5, %c0_58, %c0_59] : memref<9x8x256xf32, #tpu.memory_space<vmem>>, vector<1x8x256xf32>
      %98 = vector.shape_cast %97 : vector<1x8x256xf32> to vector<8x256xf32>
      %99 = arith.mulf %98, %96 : vector<8x256xf32>
      %c241_i32 = arith.constant 241 : i32
      %100 = tpu.dynamic_rotate %79 by %c241_i32 dim 1 : vector<8x256xf32>, i32 -> vector<8x256xf32>
      %c6 = arith.constant 6 : index
      %c0_60 = arith.constant 0 : index
      %c0_61 = arith.constant 0 : index
      %101 = vector.load %arg1[%c6, %c0_60, %c0_61] : memref<9x8x256xf32, #tpu.memory_space<vmem>>, vector<1x8x256xf32>
      %102 = vector.shape_cast %101 : vector<1x8x256xf32> to vector<8x256xf32>
      %103 = arith.mulf %102, %100 : vector<8x256xf32>
      %c240_i32 = arith.constant 240 : i32
      %104 = tpu.dynamic_rotate %79 by %c240_i32 dim 1 : vector<8x256xf32>, i32 -> vector<8x256xf32>
      %c7 = arith.constant 7 : index
      %c0_62 = arith.constant 0 : index
      %c0_63 = arith.constant 0 : index
      %105 = vector.load %arg1[%c7, %c0_62, %c0_63] : memref<9x8x256xf32, #tpu.memory_space<vmem>>, vector<1x8x256xf32>
      %106 = vector.shape_cast %105 : vector<1x8x256xf32> to vector<8x256xf32>
      %107 = arith.mulf %106, %104 : vector<8x256xf32>
      %c239_i32 = arith.constant 239 : i32
      %108 = tpu.dynamic_rotate %79 by %c239_i32 dim 1 : vector<8x256xf32>, i32 -> vector<8x256xf32>
      %c8 = arith.constant 8 : index
      %c0_64 = arith.constant 0 : index
      %c0_65 = arith.constant 0 : index
      %109 = vector.load %arg1[%c8, %c0_64, %c0_65] : memref<9x8x256xf32, #tpu.memory_space<vmem>>, vector<1x8x256xf32>
      %110 = vector.shape_cast %109 : vector<1x8x256xf32> to vector<8x256xf32>
      %111 = arith.mulf %110, %108 : vector<8x256xf32>
      %112 = tpu.concatenate %83, %87, %91, %95, %79, %99, %103, %107, %111 in 0 : vector<8x256xf32>, vector<8x256xf32>, vector<8x256xf32>, vector<8x256xf32>, vector<8x256xf32>, vector<8x256xf32>, vector<8x256xf32>, vector<8x256xf32>, vector<8x256xf32> -> vector<72x256xf32>
      %113 = arith.truncf %112 : vector<72x256xf32> to vector<72x256xbf16>
      %c0_66 = arith.constant 0 : index
      %c0_67 = arith.constant 0 : index
      %114 = vector.load %arg2[%c0_66, %c0_67] : memref<8x72xbf16, #tpu.memory_space<vmem>>, vector<8x72xbf16>
      %cst_68 = arith.constant dense<0.000000e+00> : vector<8x256xf32>
      %115 = tpu.matmul %114, %113, %cst_68 {dimension_numbers = #tpu.dot_dimension_numbers<[1], [0], [0], [1], [0, 0, 1, 1], [], []>} : vector<8x72xbf16>, vector<72x256xbf16>, vector<8x256xf32> -> vector<8x256xf32>
      %116 = arith.addf %115, %13 : vector<8x256xf32>
      %117 = arith.mulf %116, %116 : vector<8x256xf32>
      %118 = tpu.concatenate %116, %117 in 0 : vector<8x256xf32>, vector<8x256xf32> -> vector<16x256xf32>
      %cst_69 = arith.constant dense<0.000000e+00> : vector<16x1xf32>
      %119 = tpu.matmul %118, %0, %cst_69 {dimension_numbers = #tpu.dot_dimension_numbers<[1], [0], [0], [1], [0, 0, 1, 1], [], []>} : vector<16x256xf32>, vector<256x1xf32>, vector<16x1xf32> -> vector<16x1xf32>
      %120 = vector.extract_strided_slice %119 {offsets = [0, 0], sizes = [8, 1], strides = [1, 1]} : vector<16x1xf32> to vector<8x1xf32>
      %121 = vector.broadcast %cst_1 : f32 to vector<8x1xf32>
      %122 = arith.mulf %120, %121 : vector<8x1xf32>
      %123 = vector.extract_strided_slice %119 {offsets = [8, 0], sizes = [8, 1], strides = [1, 1]} : vector<16x1xf32> to vector<8x1xf32>
      %124 = vector.broadcast %cst_1 : f32 to vector<8x1xf32>
      %125 = arith.mulf %123, %124 : vector<8x1xf32>
      %126 = arith.mulf %122, %122 : vector<8x1xf32>
      %127 = arith.subf %125, %126 : vector<8x1xf32>
      %cst_70 = arith.constant 0.000000e+00 : f32
      %128 = vector.broadcast %cst_70 : f32 to vector<8x1xf32>
      %129 = arith.maximumf %127, %128 : vector<8x1xf32>
      %c2_71 = arith.constant 2 : index
      %c0_72 = arith.constant 0 : index
      %c0_73 = arith.constant 0 : index
      %130 = vector.load %arg7[%c2_71, %c0_72, %c0_73] : memref<6x8x1xf32, #tpu.memory_space<vmem>>, vector<1x8x1xf32>
      %131 = vector.shape_cast %130 : vector<1x8x1xf32> to vector<8x1xf32>
      %cst_74 = arith.constant 9.99999974E-6 : f32
      %132 = vector.broadcast %cst_74 : f32 to vector<8x1xf32>
      %133 = arith.addf %129, %132 : vector<8x1xf32>
      %134 = math.rsqrt %133 : vector<8x1xf32>
      %135 = arith.mulf %131, %134 : vector<8x1xf32>
      %c3_75 = arith.constant 3 : index
      %c0_76 = arith.constant 0 : index
      %c0_77 = arith.constant 0 : index
      %136 = vector.load %arg7[%c3_75, %c0_76, %c0_77] : memref<6x8x1xf32, #tpu.memory_space<vmem>>, vector<1x8x1xf32>
      %137 = vector.shape_cast %136 : vector<1x8x1xf32> to vector<8x1xf32>
      %138 = arith.mulf %122, %135 : vector<8x1xf32>
      %139 = arith.subf %137, %138 : vector<8x1xf32>
      %140 = vector.broadcast %135 : vector<8x1xf32> to vector<8x256xf32>
      %141 = arith.mulf %116, %140 : vector<8x256xf32>
      %142 = vector.broadcast %139 : vector<8x1xf32> to vector<8x256xf32>
      %143 = arith.addf %141, %142 : vector<8x256xf32>
      %cst_78 = arith.constant 0.000000e+00 : f32
      %144 = vector.broadcast %cst_78 : f32 to vector<8x256xf32>
      %145 = arith.maximumf %143, %144 : vector<8x256xf32>
      %c17_i32_79 = arith.constant 17 : i32
      %146 = tpu.dynamic_rotate %145 by %c17_i32_79 dim 1 : vector<8x256xf32>, i32 -> vector<8x256xf32>
      %c0_80 = arith.constant 0 : index
      %c0_81 = arith.constant 0 : index
      %c0_82 = arith.constant 0 : index
      %147 = vector.load %arg1[%c0_80, %c0_81, %c0_82] : memref<9x8x256xf32, #tpu.memory_space<vmem>>, vector<1x8x256xf32>
      %148 = vector.shape_cast %147 : vector<1x8x256xf32> to vector<8x256xf32>
      %149 = arith.mulf %148, %146 : vector<8x256xf32>
      %c16_i32_83 = arith.constant 16 : i32
      %150 = tpu.dynamic_rotate %145 by %c16_i32_83 dim 1 : vector<8x256xf32>, i32 -> vector<8x256xf32>
      %c1_84 = arith.constant 1 : index
      %c0_85 = arith.constant 0 : index
      %c0_86 = arith.constant 0 : index
      %151 = vector.load %arg1[%c1_84, %c0_85, %c0_86] : memref<9x8x256xf32, #tpu.memory_space<vmem>>, vector<1x8x256xf32>
      %152 = vector.shape_cast %151 : vector<1x8x256xf32> to vector<8x256xf32>
      %153 = arith.mulf %152, %150 : vector<8x256xf32>
      %c15_i32_87 = arith.constant 15 : i32
      %154 = tpu.dynamic_rotate %145 by %c15_i32_87 dim 1 : vector<8x256xf32>, i32 -> vector<8x256xf32>
      %c2_88 = arith.constant 2 : index
      %c0_89 = arith.constant 0 : index
      %c0_90 = arith.constant 0 : index
      %155 = vector.load %arg1[%c2_88, %c0_89, %c0_90] : memref<9x8x256xf32, #tpu.memory_space<vmem>>, vector<1x8x256xf32>
      %156 = vector.shape_cast %155 : vector<1x8x256xf32> to vector<8x256xf32>
      %157 = arith.mulf %156, %154 : vector<8x256xf32>
      %c1_i32_91 = arith.constant 1 : i32
      %158 = tpu.dynamic_rotate %145 by %c1_i32_91 dim 1 : vector<8x256xf32>, i32 -> vector<8x256xf32>
      %c3_92 = arith.constant 3 : index
      %c0_93 = arith.constant 0 : index
      %c0_94 = arith.constant 0 : index
      %159 = vector.load %arg1[%c3_92, %c0_93, %c0_94] : memref<9x8x256xf32, #tpu.memory_space<vmem>>, vector<1x8x256xf32>
      %160 = vector.shape_cast %159 : vector<1x8x256xf32> to vector<8x256xf32>
      %161 = arith.mulf %160, %158 : vector<8x256xf32>
      %c255_i32_95 = arith.constant 255 : i32
      %162 = tpu.dynamic_rotate %145 by %c255_i32_95 dim 1 : vector<8x256xf32>, i32 -> vector<8x256xf32>
      %c5_96 = arith.constant 5 : index
      %c0_97 = arith.constant 0 : index
      %c0_98 = arith.constant 0 : index
      %163 = vector.load %arg1[%c5_96, %c0_97, %c0_98] : memref<9x8x256xf32, #tpu.memory_space<vmem>>, vector<1x8x256xf32>
      %164 = vector.shape_cast %163 : vector<1x8x256xf32> to vector<8x256xf32>
      %165 = arith.mulf %164, %162 : vector<8x256xf32>
      %c241_i32_99 = arith.constant 241 : i32
      %166 = tpu.dynamic_rotate %145 by %c241_i32_99 dim 1 : vector<8x256xf32>, i32 -> vector<8x256xf32>
      %c6_100 = arith.constant 6 : index
      %c0_101 = arith.constant 0 : index
      %c0_102 = arith.constant 0 : index
      %167 = vector.load %arg1[%c6_100, %c0_101, %c0_102] : memref<9x8x256xf32, #tpu.memory_space<vmem>>, vector<1x8x256xf32>
      %168 = vector.shape_cast %167 : vector<1x8x256xf32> to vector<8x256xf32>
      %169 = arith.mulf %168, %166 : vector<8x256xf32>
      %c240_i32_103 = arith.constant 240 : i32
      %170 = tpu.dynamic_rotate %145 by %c240_i32_103 dim 1 : vector<8x256xf32>, i32 -> vector<8x256xf32>
      %c7_104 = arith.constant 7 : index
      %c0_105 = arith.constant 0 : index
      %c0_106 = arith.constant 0 : index
      %171 = vector.load %arg1[%c7_104, %c0_105, %c0_106] : memref<9x8x256xf32, #tpu.memory_space<vmem>>, vector<1x8x256xf32>
      %172 = vector.shape_cast %171 : vector<1x8x256xf32> to vector<8x256xf32>
      %173 = arith.mulf %172, %170 : vector<8x256xf32>
      %c239_i32_107 = arith.constant 239 : i32
      %174 = tpu.dynamic_rotate %145 by %c239_i32_107 dim 1 : vector<8x256xf32>, i32 -> vector<8x256xf32>
      %c8_108 = arith.constant 8 : index
      %c0_109 = arith.constant 0 : index
      %c0_110 = arith.constant 0 : index
      %175 = vector.load %arg1[%c8_108, %c0_109, %c0_110] : memref<9x8x256xf32, #tpu.memory_space<vmem>>, vector<1x8x256xf32>
      %176 = vector.shape_cast %175 : vector<1x8x256xf32> to vector<8x256xf32>
      %177 = arith.mulf %176, %174 : vector<8x256xf32>
      %178 = tpu.concatenate %149, %153, %157, %161, %145, %165, %169, %173, %177 in 0 : vector<8x256xf32>, vector<8x256xf32>, vector<8x256xf32>, vector<8x256xf32>, vector<8x256xf32>, vector<8x256xf32>, vector<8x256xf32>, vector<8x256xf32>, vector<8x256xf32> -> vector<72x256xf32>
      %179 = arith.truncf %178 : vector<72x256xf32> to vector<72x256xbf16>
      %c0_111 = arith.constant 0 : index
      %c0_112 = arith.constant 0 : index
      %180 = vector.load %arg3[%c0_111, %c0_112] : memref<8x72xbf16, #tpu.memory_space<vmem>>, vector<8x72xbf16>
      %cst_113 = arith.constant dense<0.000000e+00> : vector<8x256xf32>
      %181 = tpu.matmul %180, %179, %cst_113 {dimension_numbers = #tpu.dot_dimension_numbers<[1], [0], [0], [1], [0, 0, 1, 1], [], []>} : vector<8x72xbf16>, vector<72x256xbf16>, vector<8x256xf32> -> vector<8x256xf32>
      %182 = arith.addf %181, %20 : vector<8x256xf32>
      %183 = arith.mulf %182, %182 : vector<8x256xf32>
      %184 = tpu.concatenate %182, %183 in 0 : vector<8x256xf32>, vector<8x256xf32> -> vector<16x256xf32>
      %cst_114 = arith.constant dense<0.000000e+00> : vector<16x1xf32>
      %185 = tpu.matmul %184, %0, %cst_114 {dimension_numbers = #tpu.dot_dimension_numbers<[1], [0], [0], [1], [0, 0, 1, 1], [], []>} : vector<16x256xf32>, vector<256x1xf32>, vector<16x1xf32> -> vector<16x1xf32>
      %186 = vector.extract_strided_slice %185 {offsets = [0, 0], sizes = [8, 1], strides = [1, 1]} : vector<16x1xf32> to vector<8x1xf32>
      %187 = vector.broadcast %cst_1 : f32 to vector<8x1xf32>
      %188 = arith.mulf %186, %187 : vector<8x1xf32>
      %189 = vector.extract_strided_slice %185 {offsets = [8, 0], sizes = [8, 1], strides = [1, 1]} : vector<16x1xf32> to vector<8x1xf32>
      %190 = vector.broadcast %cst_1 : f32 to vector<8x1xf32>
      %191 = arith.mulf %189, %190 : vector<8x1xf32>
      %192 = arith.mulf %188, %188 : vector<8x1xf32>
      %193 = arith.subf %191, %192 : vector<8x1xf32>
      %cst_115 = arith.constant 0.000000e+00 : f32
      %194 = vector.broadcast %cst_115 : f32 to vector<8x1xf32>
      %195 = arith.maximumf %193, %194 : vector<8x1xf32>
      %c4 = arith.constant 4 : index
      %c0_116 = arith.constant 0 : index
      %c0_117 = arith.constant 0 : index
      %196 = vector.load %arg7[%c4, %c0_116, %c0_117] : memref<6x8x1xf32, #tpu.memory_space<vmem>>, vector<1x8x1xf32>
      %197 = vector.shape_cast %196 : vector<1x8x1xf32> to vector<8x1xf32>
      %cst_118 = arith.constant 9.99999974E-6 : f32
      %198 = vector.broadcast %cst_118 : f32 to vector<8x1xf32>
      %199 = arith.addf %195, %198 : vector<8x1xf32>
      %200 = math.rsqrt %199 : vector<8x1xf32>
      %201 = arith.mulf %197, %200 : vector<8x1xf32>
      %c5_119 = arith.constant 5 : index
      %c0_120 = arith.constant 0 : index
      %c0_121 = arith.constant 0 : index
      %202 = vector.load %arg7[%c5_119, %c0_120, %c0_121] : memref<6x8x1xf32, #tpu.memory_space<vmem>>, vector<1x8x1xf32>
      %203 = vector.shape_cast %202 : vector<1x8x1xf32> to vector<8x1xf32>
      %204 = arith.mulf %188, %201 : vector<8x1xf32>
      %205 = arith.subf %203, %204 : vector<8x1xf32>
      %206 = vector.broadcast %201 : vector<8x1xf32> to vector<8x256xf32>
      %207 = arith.mulf %182, %206 : vector<8x256xf32>
      %208 = vector.broadcast %205 : vector<8x1xf32> to vector<8x256xf32>
      %209 = arith.addf %207, %208 : vector<8x256xf32>
      %cst_122 = arith.constant 1.250000e-01 : f32
      %210 = vector.broadcast %cst_122 : f32 to vector<8x256xf32>
      %211 = arith.mulf %210, %209 : vector<8x256xf32>
      %212 = arith.addf %arg10, %211 : vector<8x256xf32>
      %213 = arith.mulf %212, %212 : vector<8x256xf32>
      %214 = tpu.concatenate %212, %213 in 0 : vector<8x256xf32>, vector<8x256xf32> -> vector<16x256xf32>
      %cst_123 = arith.constant dense<0.000000e+00> : vector<16x1xf32>
      %215 = tpu.matmul %214, %0, %cst_123 {dimension_numbers = #tpu.dot_dimension_numbers<[1], [0], [0], [1], [0, 0, 1, 1], [], []>} : vector<16x256xf32>, vector<256x1xf32>, vector<16x1xf32> -> vector<16x1xf32>
      %216 = vector.extract_strided_slice %215 {offsets = [0, 0], sizes = [8, 1], strides = [1, 1]} : vector<16x1xf32> to vector<8x1xf32>
      %217 = vector.broadcast %cst_1 : f32 to vector<8x1xf32>
      %218 = arith.mulf %216, %217 : vector<8x1xf32>
      %219 = vector.extract_strided_slice %215 {offsets = [8, 0], sizes = [8, 1], strides = [1, 1]} : vector<16x1xf32> to vector<8x1xf32>
      %220 = vector.broadcast %cst_1 : f32 to vector<8x1xf32>
      %221 = arith.mulf %219, %220 : vector<8x1xf32>
      %222 = arith.mulf %218, %218 : vector<8x1xf32>
      %223 = arith.subf %221, %222 : vector<8x1xf32>
      %cst_124 = arith.constant 0.000000e+00 : f32
      %224 = vector.broadcast %cst_124 : f32 to vector<8x1xf32>
      %225 = arith.maximumf %223, %224 : vector<8x1xf32>
      %c0_125 = arith.constant 0 : index
      %c0_126 = arith.constant 0 : index
      %c0_127 = arith.constant 0 : index
      %226 = vector.load %arg7[%c0_125, %c0_126, %c0_127] : memref<6x8x1xf32, #tpu.memory_space<vmem>>, vector<1x8x1xf32>
      %227 = vector.shape_cast %226 : vector<1x8x1xf32> to vector<8x1xf32>
      %cst_128 = arith.constant 9.99999974E-6 : f32
      %228 = vector.broadcast %cst_128 : f32 to vector<8x1xf32>
      %229 = arith.addf %225, %228 : vector<8x1xf32>
      %230 = math.rsqrt %229 : vector<8x1xf32>
      %231 = arith.mulf %227, %230 : vector<8x1xf32>
      %c1_129 = arith.constant 1 : index
      %c0_130 = arith.constant 0 : index
      %c0_131 = arith.constant 0 : index
      %232 = vector.load %arg7[%c1_129, %c0_130, %c0_131] : memref<6x8x1xf32, #tpu.memory_space<vmem>>, vector<1x8x1xf32>
      %233 = vector.shape_cast %232 : vector<1x8x1xf32> to vector<8x1xf32>
      %234 = arith.mulf %218, %231 : vector<8x1xf32>
      %235 = arith.subf %233, %234 : vector<8x1xf32>
      %236 = vector.broadcast %231 : vector<8x1xf32> to vector<8x256xf32>
      %237 = arith.mulf %212, %236 : vector<8x256xf32>
      %238 = vector.broadcast %235 : vector<8x1xf32> to vector<8x256xf32>
      %239 = arith.addf %237, %238 : vector<8x256xf32>
      %cst_132 = arith.constant 0.000000e+00 : f32
      %240 = vector.broadcast %cst_132 : f32 to vector<8x256xf32>
      %241 = arith.maximumf %239, %240 : vector<8x256xf32>
      %c17_i32_133 = arith.constant 17 : i32
      %242 = tpu.dynamic_rotate %241 by %c17_i32_133 dim 1 : vector<8x256xf32>, i32 -> vector<8x256xf32>
      %c0_134 = arith.constant 0 : index
      %c0_135 = arith.constant 0 : index
      %c0_136 = arith.constant 0 : index
      %243 = vector.load %arg1[%c0_134, %c0_135, %c0_136] : memref<9x8x256xf32, #tpu.memory_space<vmem>>, vector<1x8x256xf32>
      %244 = vector.shape_cast %243 : vector<1x8x256xf32> to vector<8x256xf32>
      %245 = arith.mulf %244, %242 : vector<8x256xf32>
      %c16_i32_137 = arith.constant 16 : i32
      %246 = tpu.dynamic_rotate %241 by %c16_i32_137 dim 1 : vector<8x256xf32>, i32 -> vector<8x256xf32>
      %c1_138 = arith.constant 1 : index
      %c0_139 = arith.constant 0 : index
      %c0_140 = arith.constant 0 : index
      %247 = vector.load %arg1[%c1_138, %c0_139, %c0_140] : memref<9x8x256xf32, #tpu.memory_space<vmem>>, vector<1x8x256xf32>
      %248 = vector.shape_cast %247 : vector<1x8x256xf32> to vector<8x256xf32>
      %249 = arith.mulf %248, %246 : vector<8x256xf32>
      %c15_i32_141 = arith.constant 15 : i32
      %250 = tpu.dynamic_rotate %241 by %c15_i32_141 dim 1 : vector<8x256xf32>, i32 -> vector<8x256xf32>
      %c2_142 = arith.constant 2 : index
      %c0_143 = arith.constant 0 : index
      %c0_144 = arith.constant 0 : index
      %251 = vector.load %arg1[%c2_142, %c0_143, %c0_144] : memref<9x8x256xf32, #tpu.memory_space<vmem>>, vector<1x8x256xf32>
      %252 = vector.shape_cast %251 : vector<1x8x256xf32> to vector<8x256xf32>
      %253 = arith.mulf %252, %250 : vector<8x256xf32>
      %c1_i32_145 = arith.constant 1 : i32
      %254 = tpu.dynamic_rotate %241 by %c1_i32_145 dim 1 : vector<8x256xf32>, i32 -> vector<8x256xf32>
      %c3_146 = arith.constant 3 : index
      %c0_147 = arith.constant 0 : index
      %c0_148 = arith.constant 0 : index
      %255 = vector.load %arg1[%c3_146, %c0_147, %c0_148] : memref<9x8x256xf32, #tpu.memory_space<vmem>>, vector<1x8x256xf32>
      %256 = vector.shape_cast %255 : vector<1x8x256xf32> to vector<8x256xf32>
      %257 = arith.mulf %256, %254 : vector<8x256xf32>
      %c255_i32_149 = arith.constant 255 : i32
      %258 = tpu.dynamic_rotate %241 by %c255_i32_149 dim 1 : vector<8x256xf32>, i32 -> vector<8x256xf32>
      %c5_150 = arith.constant 5 : index
      %c0_151 = arith.constant 0 : index
      %c0_152 = arith.constant 0 : index
      %259 = vector.load %arg1[%c5_150, %c0_151, %c0_152] : memref<9x8x256xf32, #tpu.memory_space<vmem>>, vector<1x8x256xf32>
      %260 = vector.shape_cast %259 : vector<1x8x256xf32> to vector<8x256xf32>
      %261 = arith.mulf %260, %258 : vector<8x256xf32>
      %c241_i32_153 = arith.constant 241 : i32
      %262 = tpu.dynamic_rotate %241 by %c241_i32_153 dim 1 : vector<8x256xf32>, i32 -> vector<8x256xf32>
      %c6_154 = arith.constant 6 : index
      %c0_155 = arith.constant 0 : index
      %c0_156 = arith.constant 0 : index
      %263 = vector.load %arg1[%c6_154, %c0_155, %c0_156] : memref<9x8x256xf32, #tpu.memory_space<vmem>>, vector<1x8x256xf32>
      %264 = vector.shape_cast %263 : vector<1x8x256xf32> to vector<8x256xf32>
      %265 = arith.mulf %264, %262 : vector<8x256xf32>
      %c240_i32_157 = arith.constant 240 : i32
      %266 = tpu.dynamic_rotate %241 by %c240_i32_157 dim 1 : vector<8x256xf32>, i32 -> vector<8x256xf32>
      %c7_158 = arith.constant 7 : index
      %c0_159 = arith.constant 0 : index
      %c0_160 = arith.constant 0 : index
      %267 = vector.load %arg1[%c7_158, %c0_159, %c0_160] : memref<9x8x256xf32, #tpu.memory_space<vmem>>, vector<1x8x256xf32>
      %268 = vector.shape_cast %267 : vector<1x8x256xf32> to vector<8x256xf32>
      %269 = arith.mulf %268, %266 : vector<8x256xf32>
      %c239_i32_161 = arith.constant 239 : i32
      %270 = tpu.dynamic_rotate %241 by %c239_i32_161 dim 1 : vector<8x256xf32>, i32 -> vector<8x256xf32>
      %c8_162 = arith.constant 8 : index
      %c0_163 = arith.constant 0 : index
      %c0_164 = arith.constant 0 : index
      %271 = vector.load %arg1[%c8_162, %c0_163, %c0_164] : memref<9x8x256xf32, #tpu.memory_space<vmem>>, vector<1x8x256xf32>
      %272 = vector.shape_cast %271 : vector<1x8x256xf32> to vector<8x256xf32>
      %273 = arith.mulf %272, %270 : vector<8x256xf32>
      %274 = tpu.concatenate %245, %249, %253, %257, %241, %261, %265, %269, %273 in 0 : vector<8x256xf32>, vector<8x256xf32>, vector<8x256xf32>, vector<8x256xf32>, vector<8x256xf32>, vector<8x256xf32>, vector<8x256xf32>, vector<8x256xf32>, vector<8x256xf32> -> vector<72x256xf32>
      %275 = arith.truncf %274 : vector<72x256xf32> to vector<72x256xbf16>
      %c0_165 = arith.constant 0 : index
      %c0_166 = arith.constant 0 : index
      %276 = vector.load %arg2[%c0_165, %c0_166] : memref<8x72xbf16, #tpu.memory_space<vmem>>, vector<8x72xbf16>
      %cst_167 = arith.constant dense<0.000000e+00> : vector<8x256xf32>
      %277 = tpu.matmul %276, %275, %cst_167 {dimension_numbers = #tpu.dot_dimension_numbers<[1], [0], [0], [1], [0, 0, 1, 1], [], []>} : vector<8x72xbf16>, vector<72x256xbf16>, vector<8x256xf32> -> vector<8x256xf32>
      %278 = arith.addf %277, %28 : vector<8x256xf32>
      %279 = arith.mulf %278, %278 : vector<8x256xf32>
      %280 = tpu.concatenate %278, %279 in 0 : vector<8x256xf32>, vector<8x256xf32> -> vector<16x256xf32>
      %cst_168 = arith.constant dense<0.000000e+00> : vector<16x1xf32>
      %281 = tpu.matmul %280, %0, %cst_168 {dimension_numbers = #tpu.dot_dimension_numbers<[1], [0], [0], [1], [0, 0, 1, 1], [], []>} : vector<16x256xf32>, vector<256x1xf32>, vector<16x1xf32> -> vector<16x1xf32>
      %282 = vector.extract_strided_slice %281 {offsets = [0, 0], sizes = [8, 1], strides = [1, 1]} : vector<16x1xf32> to vector<8x1xf32>
      %283 = vector.broadcast %cst_1 : f32 to vector<8x1xf32>
      %284 = arith.mulf %282, %283 : vector<8x1xf32>
      %285 = vector.extract_strided_slice %281 {offsets = [8, 0], sizes = [8, 1], strides = [1, 1]} : vector<16x1xf32> to vector<8x1xf32>
      %286 = vector.broadcast %cst_1 : f32 to vector<8x1xf32>
      %287 = arith.mulf %285, %286 : vector<8x1xf32>
      %288 = arith.mulf %284, %284 : vector<8x1xf32>
      %289 = arith.subf %287, %288 : vector<8x1xf32>
      %cst_169 = arith.constant 0.000000e+00 : f32
      %290 = vector.broadcast %cst_169 : f32 to vector<8x1xf32>
      %291 = arith.maximumf %289, %290 : vector<8x1xf32>
      %c2_170 = arith.constant 2 : index
      %c0_171 = arith.constant 0 : index
      %c0_172 = arith.constant 0 : index
      %292 = vector.load %arg7[%c2_170, %c0_171, %c0_172] : memref<6x8x1xf32, #tpu.memory_space<vmem>>, vector<1x8x1xf32>
      %293 = vector.shape_cast %292 : vector<1x8x1xf32> to vector<8x1xf32>
      %cst_173 = arith.constant 9.99999974E-6 : f32
      %294 = vector.broadcast %cst_173 : f32 to vector<8x1xf32>
      %295 = arith.addf %291, %294 : vector<8x1xf32>
      %296 = math.rsqrt %295 : vector<8x1xf32>
      %297 = arith.mulf %293, %296 : vector<8x1xf32>
      %c3_174 = arith.constant 3 : index
      %c0_175 = arith.constant 0 : index
      %c0_176 = arith.constant 0 : index
      %298 = vector.load %arg7[%c3_174, %c0_175, %c0_176] : memref<6x8x1xf32, #tpu.memory_space<vmem>>, vector<1x8x1xf32>
      %299 = vector.shape_cast %298 : vector<1x8x1xf32> to vector<8x1xf32>
      %300 = arith.mulf %284, %297 : vector<8x1xf32>
      %301 = arith.subf %299, %300 : vector<8x1xf32>
      %302 = vector.broadcast %297 : vector<8x1xf32> to vector<8x256xf32>
      %303 = arith.mulf %278, %302 : vector<8x256xf32>
      %304 = vector.broadcast %301 : vector<8x1xf32> to vector<8x256xf32>
      %305 = arith.addf %303, %304 : vector<8x256xf32>
      %cst_177 = arith.constant 0.000000e+00 : f32
      %306 = vector.broadcast %cst_177 : f32 to vector<8x256xf32>
      %307 = arith.maximumf %305, %306 : vector<8x256xf32>
      %c17_i32_178 = arith.constant 17 : i32
      %308 = tpu.dynamic_rotate %307 by %c17_i32_178 dim 1 : vector<8x256xf32>, i32 -> vector<8x256xf32>
      %c0_179 = arith.constant 0 : index
      %c0_180 = arith.constant 0 : index
      %c0_181 = arith.constant 0 : index
      %309 = vector.load %arg1[%c0_179, %c0_180, %c0_181] : memref<9x8x256xf32, #tpu.memory_space<vmem>>, vector<1x8x256xf32>
      %310 = vector.shape_cast %309 : vector<1x8x256xf32> to vector<8x256xf32>
      %311 = arith.mulf %310, %308 : vector<8x256xf32>
      %c16_i32_182 = arith.constant 16 : i32
      %312 = tpu.dynamic_rotate %307 by %c16_i32_182 dim 1 : vector<8x256xf32>, i32 -> vector<8x256xf32>
      %c1_183 = arith.constant 1 : index
      %c0_184 = arith.constant 0 : index
      %c0_185 = arith.constant 0 : index
      %313 = vector.load %arg1[%c1_183, %c0_184, %c0_185] : memref<9x8x256xf32, #tpu.memory_space<vmem>>, vector<1x8x256xf32>
      %314 = vector.shape_cast %313 : vector<1x8x256xf32> to vector<8x256xf32>
      %315 = arith.mulf %314, %312 : vector<8x256xf32>
      %c15_i32_186 = arith.constant 15 : i32
      %316 = tpu.dynamic_rotate %307 by %c15_i32_186 dim 1 : vector<8x256xf32>, i32 -> vector<8x256xf32>
      %c2_187 = arith.constant 2 : index
      %c0_188 = arith.constant 0 : index
      %c0_189 = arith.constant 0 : index
      %317 = vector.load %arg1[%c2_187, %c0_188, %c0_189] : memref<9x8x256xf32, #tpu.memory_space<vmem>>, vector<1x8x256xf32>
      %318 = vector.shape_cast %317 : vector<1x8x256xf32> to vector<8x256xf32>
      %319 = arith.mulf %318, %316 : vector<8x256xf32>
      %c1_i32_190 = arith.constant 1 : i32
      %320 = tpu.dynamic_rotate %307 by %c1_i32_190 dim 1 : vector<8x256xf32>, i32 -> vector<8x256xf32>
      %c3_191 = arith.constant 3 : index
      %c0_192 = arith.constant 0 : index
      %c0_193 = arith.constant 0 : index
      %321 = vector.load %arg1[%c3_191, %c0_192, %c0_193] : memref<9x8x256xf32, #tpu.memory_space<vmem>>, vector<1x8x256xf32>
      %322 = vector.shape_cast %321 : vector<1x8x256xf32> to vector<8x256xf32>
      %323 = arith.mulf %322, %320 : vector<8x256xf32>
      %c255_i32_194 = arith.constant 255 : i32
      %324 = tpu.dynamic_rotate %307 by %c255_i32_194 dim 1 : vector<8x256xf32>, i32 -> vector<8x256xf32>
      %c5_195 = arith.constant 5 : index
      %c0_196 = arith.constant 0 : index
      %c0_197 = arith.constant 0 : index
      %325 = vector.load %arg1[%c5_195, %c0_196, %c0_197] : memref<9x8x256xf32, #tpu.memory_space<vmem>>, vector<1x8x256xf32>
      %326 = vector.shape_cast %325 : vector<1x8x256xf32> to vector<8x256xf32>
      %327 = arith.mulf %326, %324 : vector<8x256xf32>
      %c241_i32_198 = arith.constant 241 : i32
      %328 = tpu.dynamic_rotate %307 by %c241_i32_198 dim 1 : vector<8x256xf32>, i32 -> vector<8x256xf32>
      %c6_199 = arith.constant 6 : index
      %c0_200 = arith.constant 0 : index
      %c0_201 = arith.constant 0 : index
      %329 = vector.load %arg1[%c6_199, %c0_200, %c0_201] : memref<9x8x256xf32, #tpu.memory_space<vmem>>, vector<1x8x256xf32>
      %330 = vector.shape_cast %329 : vector<1x8x256xf32> to vector<8x256xf32>
      %331 = arith.mulf %330, %328 : vector<8x256xf32>
      %c240_i32_202 = arith.constant 240 : i32
      %332 = tpu.dynamic_rotate %307 by %c240_i32_202 dim 1 : vector<8x256xf32>, i32 -> vector<8x256xf32>
      %c7_203 = arith.constant 7 : index
      %c0_204 = arith.constant 0 : index
      %c0_205 = arith.constant 0 : index
      %333 = vector.load %arg1[%c7_203, %c0_204, %c0_205] : memref<9x8x256xf32, #tpu.memory_space<vmem>>, vector<1x8x256xf32>
      %334 = vector.shape_cast %333 : vector<1x8x256xf32> to vector<8x256xf32>
      %335 = arith.mulf %334, %332 : vector<8x256xf32>
      %c239_i32_206 = arith.constant 239 : i32
      %336 = tpu.dynamic_rotate %307 by %c239_i32_206 dim 1 : vector<8x256xf32>, i32 -> vector<8x256xf32>
      %c8_207 = arith.constant 8 : index
      %c0_208 = arith.constant 0 : index
      %c0_209 = arith.constant 0 : index
      %337 = vector.load %arg1[%c8_207, %c0_208, %c0_209] : memref<9x8x256xf32, #tpu.memory_space<vmem>>, vector<1x8x256xf32>
      %338 = vector.shape_cast %337 : vector<1x8x256xf32> to vector<8x256xf32>
      %339 = arith.mulf %338, %336 : vector<8x256xf32>
      %340 = tpu.concatenate %311, %315, %319, %323, %307, %327, %331, %335, %339 in 0 : vector<8x256xf32>, vector<8x256xf32>, vector<8x256xf32>, vector<8x256xf32>, vector<8x256xf32>, vector<8x256xf32>, vector<8x256xf32>, vector<8x256xf32>, vector<8x256xf32> -> vector<72x256xf32>
      %341 = arith.truncf %340 : vector<72x256xf32> to vector<72x256xbf16>
      %c0_210 = arith.constant 0 : index
      %c0_211 = arith.constant 0 : index
      %342 = vector.load %arg3[%c0_210, %c0_211] : memref<8x72xbf16, #tpu.memory_space<vmem>>, vector<8x72xbf16>
      %cst_212 = arith.constant dense<0.000000e+00> : vector<8x256xf32>
      %343 = tpu.matmul %342, %341, %cst_212 {dimension_numbers = #tpu.dot_dimension_numbers<[1], [0], [0], [1], [0, 0, 1, 1], [], []>} : vector<8x72xbf16>, vector<72x256xbf16>, vector<8x256xf32> -> vector<8x256xf32>
      %344 = arith.addf %343, %35 : vector<8x256xf32>
      %345 = arith.mulf %344, %344 : vector<8x256xf32>
      %346 = tpu.concatenate %344, %345 in 0 : vector<8x256xf32>, vector<8x256xf32> -> vector<16x256xf32>
      %cst_213 = arith.constant dense<0.000000e+00> : vector<16x1xf32>
      %347 = tpu.matmul %346, %0, %cst_213 {dimension_numbers = #tpu.dot_dimension_numbers<[1], [0], [0], [1], [0, 0, 1, 1], [], []>} : vector<16x256xf32>, vector<256x1xf32>, vector<16x1xf32> -> vector<16x1xf32>
      %348 = vector.extract_strided_slice %347 {offsets = [0, 0], sizes = [8, 1], strides = [1, 1]} : vector<16x1xf32> to vector<8x1xf32>
      %349 = vector.broadcast %cst_1 : f32 to vector<8x1xf32>
      %350 = arith.mulf %348, %349 : vector<8x1xf32>
      %351 = vector.extract_strided_slice %347 {offsets = [8, 0], sizes = [8, 1], strides = [1, 1]} : vector<16x1xf32> to vector<8x1xf32>
      %352 = vector.broadcast %cst_1 : f32 to vector<8x1xf32>
      %353 = arith.mulf %351, %352 : vector<8x1xf32>
      %354 = arith.mulf %350, %350 : vector<8x1xf32>
      %355 = arith.subf %353, %354 : vector<8x1xf32>
      %cst_214 = arith.constant 0.000000e+00 : f32
      %356 = vector.broadcast %cst_214 : f32 to vector<8x1xf32>
      %357 = arith.maximumf %355, %356 : vector<8x1xf32>
      %c4_215 = arith.constant 4 : index
      %c0_216 = arith.constant 0 : index
      %c0_217 = arith.constant 0 : index
      %358 = vector.load %arg7[%c4_215, %c0_216, %c0_217] : memref<6x8x1xf32, #tpu.memory_space<vmem>>, vector<1x8x1xf32>
      %359 = vector.shape_cast %358 : vector<1x8x1xf32> to vector<8x1xf32>
      %cst_218 = arith.constant 9.99999974E-6 : f32
      %360 = vector.broadcast %cst_218 : f32 to vector<8x1xf32>
      %361 = arith.addf %357, %360 : vector<8x1xf32>
      %362 = math.rsqrt %361 : vector<8x1xf32>
      %363 = arith.mulf %359, %362 : vector<8x1xf32>
      %c5_219 = arith.constant 5 : index
      %c0_220 = arith.constant 0 : index
      %c0_221 = arith.constant 0 : index
      %364 = vector.load %arg7[%c5_219, %c0_220, %c0_221] : memref<6x8x1xf32, #tpu.memory_space<vmem>>, vector<1x8x1xf32>
      %365 = vector.shape_cast %364 : vector<1x8x1xf32> to vector<8x1xf32>
      %366 = arith.mulf %350, %363 : vector<8x1xf32>
      %367 = arith.subf %365, %366 : vector<8x1xf32>
      %368 = vector.broadcast %363 : vector<8x1xf32> to vector<8x256xf32>
      %369 = arith.mulf %344, %368 : vector<8x256xf32>
      %370 = vector.broadcast %367 : vector<8x1xf32> to vector<8x256xf32>
      %371 = arith.addf %369, %370 : vector<8x256xf32>
      %cst_222 = arith.constant 1.250000e-01 : f32
      %372 = vector.broadcast %cst_222 : f32 to vector<8x256xf32>
      %373 = arith.mulf %372, %371 : vector<8x256xf32>
      %374 = arith.addf %arg10, %373 : vector<8x256xf32>
      %375 = arith.mulf %374, %374 : vector<8x256xf32>
      %376 = tpu.concatenate %374, %375 in 0 : vector<8x256xf32>, vector<8x256xf32> -> vector<16x256xf32>
      %cst_223 = arith.constant dense<0.000000e+00> : vector<16x1xf32>
      %377 = tpu.matmul %376, %0, %cst_223 {dimension_numbers = #tpu.dot_dimension_numbers<[1], [0], [0], [1], [0, 0, 1, 1], [], []>} : vector<16x256xf32>, vector<256x1xf32>, vector<16x1xf32> -> vector<16x1xf32>
      %378 = vector.extract_strided_slice %377 {offsets = [0, 0], sizes = [8, 1], strides = [1, 1]} : vector<16x1xf32> to vector<8x1xf32>
      %379 = vector.broadcast %cst_1 : f32 to vector<8x1xf32>
      %380 = arith.mulf %378, %379 : vector<8x1xf32>
      %381 = vector.extract_strided_slice %377 {offsets = [8, 0], sizes = [8, 1], strides = [1, 1]} : vector<16x1xf32> to vector<8x1xf32>
      %382 = vector.broadcast %cst_1 : f32 to vector<8x1xf32>
      %383 = arith.mulf %381, %382 : vector<8x1xf32>
      %384 = arith.mulf %380, %380 : vector<8x1xf32>
      %385 = arith.subf %383, %384 : vector<8x1xf32>
      %cst_224 = arith.constant 0.000000e+00 : f32
      %386 = vector.broadcast %cst_224 : f32 to vector<8x1xf32>
      %387 = arith.maximumf %385, %386 : vector<8x1xf32>
      %c0_225 = arith.constant 0 : index
      %c0_226 = arith.constant 0 : index
      %c0_227 = arith.constant 0 : index
      %388 = vector.load %arg7[%c0_225, %c0_226, %c0_227] : memref<6x8x1xf32, #tpu.memory_space<vmem>>, vector<1x8x1xf32>
      %389 = vector.shape_cast %388 : vector<1x8x1xf32> to vector<8x1xf32>
      %cst_228 = arith.constant 9.99999974E-6 : f32
      %390 = vector.broadcast %cst_228 : f32 to vector<8x1xf32>
      %391 = arith.addf %387, %390 : vector<8x1xf32>
      %392 = math.rsqrt %391 : vector<8x1xf32>
      %393 = arith.mulf %389, %392 : vector<8x1xf32>
      %c1_229 = arith.constant 1 : index
      %c0_230 = arith.constant 0 : index
      %c0_231 = arith.constant 0 : index
      %394 = vector.load %arg7[%c1_229, %c0_230, %c0_231] : memref<6x8x1xf32, #tpu.memory_space<vmem>>, vector<1x8x1xf32>
      %395 = vector.shape_cast %394 : vector<1x8x1xf32> to vector<8x1xf32>
      %396 = arith.mulf %380, %393 : vector<8x1xf32>
      %397 = arith.subf %395, %396 : vector<8x1xf32>
      %398 = vector.broadcast %393 : vector<8x1xf32> to vector<8x256xf32>
      %399 = arith.mulf %374, %398 : vector<8x256xf32>
      %400 = vector.broadcast %397 : vector<8x1xf32> to vector<8x256xf32>
      %401 = arith.addf %399, %400 : vector<8x256xf32>
      %cst_232 = arith.constant 0.000000e+00 : f32
      %402 = vector.broadcast %cst_232 : f32 to vector<8x256xf32>
      %403 = arith.maximumf %401, %402 : vector<8x256xf32>
      %c17_i32_233 = arith.constant 17 : i32
      %404 = tpu.dynamic_rotate %403 by %c17_i32_233 dim 1 : vector<8x256xf32>, i32 -> vector<8x256xf32>
      %c0_234 = arith.constant 0 : index
      %c0_235 = arith.constant 0 : index
      %c0_236 = arith.constant 0 : index
      %405 = vector.load %arg1[%c0_234, %c0_235, %c0_236] : memref<9x8x256xf32, #tpu.memory_space<vmem>>, vector<1x8x256xf32>
      %406 = vector.shape_cast %405 : vector<1x8x256xf32> to vector<8x256xf32>
      %407 = arith.mulf %406, %404 : vector<8x256xf32>
      %c16_i32_237 = arith.constant 16 : i32
      %408 = tpu.dynamic_rotate %403 by %c16_i32_237 dim 1 : vector<8x256xf32>, i32 -> vector<8x256xf32>
      %c1_238 = arith.constant 1 : index
      %c0_239 = arith.constant 0 : index
      %c0_240 = arith.constant 0 : index
      %409 = vector.load %arg1[%c1_238, %c0_239, %c0_240] : memref<9x8x256xf32, #tpu.memory_space<vmem>>, vector<1x8x256xf32>
      %410 = vector.shape_cast %409 : vector<1x8x256xf32> to vector<8x256xf32>
      %411 = arith.mulf %410, %408 : vector<8x256xf32>
      %c15_i32_241 = arith.constant 15 : i32
      %412 = tpu.dynamic_rotate %403 by %c15_i32_241 dim 1 : vector<8x256xf32>, i32 -> vector<8x256xf32>
      %c2_242 = arith.constant 2 : index
      %c0_243 = arith.constant 0 : index
      %c0_244 = arith.constant 0 : index
      %413 = vector.load %arg1[%c2_242, %c0_243, %c0_244] : memref<9x8x256xf32, #tpu.memory_space<vmem>>, vector<1x8x256xf32>
      %414 = vector.shape_cast %413 : vector<1x8x256xf32> to vector<8x256xf32>
      %415 = arith.mulf %414, %412 : vector<8x256xf32>
      %c1_i32_245 = arith.constant 1 : i32
      %416 = tpu.dynamic_rotate %403 by %c1_i32_245 dim 1 : vector<8x256xf32>, i32 -> vector<8x256xf32>
      %c3_246 = arith.constant 3 : index
      %c0_247 = arith.constant 0 : index
      %c0_248 = arith.constant 0 : index
      %417 = vector.load %arg1[%c3_246, %c0_247, %c0_248] : memref<9x8x256xf32, #tpu.memory_space<vmem>>, vector<1x8x256xf32>
      %418 = vector.shape_cast %417 : vector<1x8x256xf32> to vector<8x256xf32>
      %419 = arith.mulf %418, %416 : vector<8x256xf32>
      %c255_i32_249 = arith.constant 255 : i32
      %420 = tpu.dynamic_rotate %403 by %c255_i32_249 dim 1 : vector<8x256xf32>, i32 -> vector<8x256xf32>
      %c5_250 = arith.constant 5 : index
      %c0_251 = arith.constant 0 : index
      %c0_252 = arith.constant 0 : index
      %421 = vector.load %arg1[%c5_250, %c0_251, %c0_252] : memref<9x8x256xf32, #tpu.memory_space<vmem>>, vector<1x8x256xf32>
      %422 = vector.shape_cast %421 : vector<1x8x256xf32> to vector<8x256xf32>
      %423 = arith.mulf %422, %420 : vector<8x256xf32>
      %c241_i32_253 = arith.constant 241 : i32
      %424 = tpu.dynamic_rotate %403 by %c241_i32_253 dim 1 : vector<8x256xf32>, i32 -> vector<8x256xf32>
      %c6_254 = arith.constant 6 : index
      %c0_255 = arith.constant 0 : index
      %c0_256 = arith.constant 0 : index
      %425 = vector.load %arg1[%c6_254, %c0_255, %c0_256] : memref<9x8x256xf32, #tpu.memory_space<vmem>>, vector<1x8x256xf32>
      %426 = vector.shape_cast %425 : vector<1x8x256xf32> to vector<8x256xf32>
      %427 = arith.mulf %426, %424 : vector<8x256xf32>
      %c240_i32_257 = arith.constant 240 : i32
      %428 = tpu.dynamic_rotate %403 by %c240_i32_257 dim 1 : vector<8x256xf32>, i32 -> vector<8x256xf32>
      %c7_258 = arith.constant 7 : index
      %c0_259 = arith.constant 0 : index
      %c0_260 = arith.constant 0 : index
      %429 = vector.load %arg1[%c7_258, %c0_259, %c0_260] : memref<9x8x256xf32, #tpu.memory_space<vmem>>, vector<1x8x256xf32>
      %430 = vector.shape_cast %429 : vector<1x8x256xf32> to vector<8x256xf32>
      %431 = arith.mulf %430, %428 : vector<8x256xf32>
      %c239_i32_261 = arith.constant 239 : i32
      %432 = tpu.dynamic_rotate %403 by %c239_i32_261 dim 1 : vector<8x256xf32>, i32 -> vector<8x256xf32>
      %c8_262 = arith.constant 8 : index
      %c0_263 = arith.constant 0 : index
      %c0_264 = arith.constant 0 : index
      %433 = vector.load %arg1[%c8_262, %c0_263, %c0_264] : memref<9x8x256xf32, #tpu.memory_space<vmem>>, vector<1x8x256xf32>
      %434 = vector.shape_cast %433 : vector<1x8x256xf32> to vector<8x256xf32>
      %435 = arith.mulf %434, %432 : vector<8x256xf32>
      %436 = tpu.concatenate %407, %411, %415, %419, %403, %423, %427, %431, %435 in 0 : vector<8x256xf32>, vector<8x256xf32>, vector<8x256xf32>, vector<8x256xf32>, vector<8x256xf32>, vector<8x256xf32>, vector<8x256xf32>, vector<8x256xf32>, vector<8x256xf32> -> vector<72x256xf32>
      %437 = arith.truncf %436 : vector<72x256xf32> to vector<72x256xbf16>
      %c0_265 = arith.constant 0 : index
      %c0_266 = arith.constant 0 : index
      %438 = vector.load %arg2[%c0_265, %c0_266] : memref<8x72xbf16, #tpu.memory_space<vmem>>, vector<8x72xbf16>
      %cst_267 = arith.constant dense<0.000000e+00> : vector<8x256xf32>
      %439 = tpu.matmul %438, %437, %cst_267 {dimension_numbers = #tpu.dot_dimension_numbers<[1], [0], [0], [1], [0, 0, 1, 1], [], []>} : vector<8x72xbf16>, vector<72x256xbf16>, vector<8x256xf32> -> vector<8x256xf32>
      %440 = arith.addf %439, %28 : vector<8x256xf32>
      %441 = arith.mulf %440, %440 : vector<8x256xf32>
      %442 = tpu.concatenate %440, %441 in 0 : vector<8x256xf32>, vector<8x256xf32> -> vector<16x256xf32>
      %cst_268 = arith.constant dense<0.000000e+00> : vector<16x1xf32>
      %443 = tpu.matmul %442, %0, %cst_268 {dimension_numbers = #tpu.dot_dimension_numbers<[1], [0], [0], [1], [0, 0, 1, 1], [], []>} : vector<16x256xf32>, vector<256x1xf32>, vector<16x1xf32> -> vector<16x1xf32>
      %444 = vector.extract_strided_slice %443 {offsets = [0, 0], sizes = [8, 1], strides = [1, 1]} : vector<16x1xf32> to vector<8x1xf32>
      %445 = vector.broadcast %cst_1 : f32 to vector<8x1xf32>
      %446 = arith.mulf %444, %445 : vector<8x1xf32>
      %447 = vector.extract_strided_slice %443 {offsets = [8, 0], sizes = [8, 1], strides = [1, 1]} : vector<16x1xf32> to vector<8x1xf32>
      %448 = vector.broadcast %cst_1 : f32 to vector<8x1xf32>
      %449 = arith.mulf %447, %448 : vector<8x1xf32>
      %450 = arith.mulf %446, %446 : vector<8x1xf32>
      %451 = arith.subf %449, %450 : vector<8x1xf32>
      %cst_269 = arith.constant 0.000000e+00 : f32
      %452 = vector.broadcast %cst_269 : f32 to vector<8x1xf32>
      %453 = arith.maximumf %451, %452 : vector<8x1xf32>
      %c2_270 = arith.constant 2 : index
      %c0_271 = arith.constant 0 : index
      %c0_272 = arith.constant 0 : index
      %454 = vector.load %arg7[%c2_270, %c0_271, %c0_272] : memref<6x8x1xf32, #tpu.memory_space<vmem>>, vector<1x8x1xf32>
      %455 = vector.shape_cast %454 : vector<1x8x1xf32> to vector<8x1xf32>
      %cst_273 = arith.constant 9.99999974E-6 : f32
      %456 = vector.broadcast %cst_273 : f32 to vector<8x1xf32>
      %457 = arith.addf %453, %456 : vector<8x1xf32>
      %458 = math.rsqrt %457 : vector<8x1xf32>
      %459 = arith.mulf %455, %458 : vector<8x1xf32>
      %c3_274 = arith.constant 3 : index
      %c0_275 = arith.constant 0 : index
      %c0_276 = arith.constant 0 : index
      %460 = vector.load %arg7[%c3_274, %c0_275, %c0_276] : memref<6x8x1xf32, #tpu.memory_space<vmem>>, vector<1x8x1xf32>
      %461 = vector.shape_cast %460 : vector<1x8x1xf32> to vector<8x1xf32>
      %462 = arith.mulf %446, %459 : vector<8x1xf32>
      %463 = arith.subf %461, %462 : vector<8x1xf32>
      %464 = vector.broadcast %459 : vector<8x1xf32> to vector<8x256xf32>
      %465 = arith.mulf %440, %464 : vector<8x256xf32>
      %466 = vector.broadcast %463 : vector<8x1xf32> to vector<8x256xf32>
      %467 = arith.addf %465, %466 : vector<8x256xf32>
      %cst_277 = arith.constant 0.000000e+00 : f32
      %468 = vector.broadcast %cst_277 : f32 to vector<8x256xf32>
      %469 = arith.maximumf %467, %468 : vector<8x256xf32>
      %c17_i32_278 = arith.constant 17 : i32
      %470 = tpu.dynamic_rotate %469 by %c17_i32_278 dim 1 : vector<8x256xf32>, i32 -> vector<8x256xf32>
      %c0_279 = arith.constant 0 : index
      %c0_280 = arith.constant 0 : index
      %c0_281 = arith.constant 0 : index
      %471 = vector.load %arg1[%c0_279, %c0_280, %c0_281] : memref<9x8x256xf32, #tpu.memory_space<vmem>>, vector<1x8x256xf32>
      %472 = vector.shape_cast %471 : vector<1x8x256xf32> to vector<8x256xf32>
      %473 = arith.mulf %472, %470 : vector<8x256xf32>
      %c16_i32_282 = arith.constant 16 : i32
      %474 = tpu.dynamic_rotate %469 by %c16_i32_282 dim 1 : vector<8x256xf32>, i32 -> vector<8x256xf32>
      %c1_283 = arith.constant 1 : index
      %c0_284 = arith.constant 0 : index
      %c0_285 = arith.constant 0 : index
      %475 = vector.load %arg1[%c1_283, %c0_284, %c0_285] : memref<9x8x256xf32, #tpu.memory_space<vmem>>, vector<1x8x256xf32>
      %476 = vector.shape_cast %475 : vector<1x8x256xf32> to vector<8x256xf32>
      %477 = arith.mulf %476, %474 : vector<8x256xf32>
      %c15_i32_286 = arith.constant 15 : i32
      %478 = tpu.dynamic_rotate %469 by %c15_i32_286 dim 1 : vector<8x256xf32>, i32 -> vector<8x256xf32>
      %c2_287 = arith.constant 2 : index
      %c0_288 = arith.constant 0 : index
      %c0_289 = arith.constant 0 : index
      %479 = vector.load %arg1[%c2_287, %c0_288, %c0_289] : memref<9x8x256xf32, #tpu.memory_space<vmem>>, vector<1x8x256xf32>
      %480 = vector.shape_cast %479 : vector<1x8x256xf32> to vector<8x256xf32>
      %481 = arith.mulf %480, %478 : vector<8x256xf32>
      %c1_i32_290 = arith.constant 1 : i32
      %482 = tpu.dynamic_rotate %469 by %c1_i32_290 dim 1 : vector<8x256xf32>, i32 -> vector<8x256xf32>
      %c3_291 = arith.constant 3 : index
      %c0_292 = arith.constant 0 : index
      %c0_293 = arith.constant 0 : index
      %483 = vector.load %arg1[%c3_291, %c0_292, %c0_293] : memref<9x8x256xf32, #tpu.memory_space<vmem>>, vector<1x8x256xf32>
      %484 = vector.shape_cast %483 : vector<1x8x256xf32> to vector<8x256xf32>
      %485 = arith.mulf %484, %482 : vector<8x256xf32>
      %c255_i32_294 = arith.constant 255 : i32
      %486 = tpu.dynamic_rotate %469 by %c255_i32_294 dim 1 : vector<8x256xf32>, i32 -> vector<8x256xf32>
      %c5_295 = arith.constant 5 : index
      %c0_296 = arith.constant 0 : index
      %c0_297 = arith.constant 0 : index
      %487 = vector.load %arg1[%c5_295, %c0_296, %c0_297] : memref<9x8x256xf32, #tpu.memory_space<vmem>>, vector<1x8x256xf32>
      %488 = vector.shape_cast %487 : vector<1x8x256xf32> to vector<8x256xf32>
      %489 = arith.mulf %488, %486 : vector<8x256xf32>
      %c241_i32_298 = arith.constant 241 : i32
      %490 = tpu.dynamic_rotate %469 by %c241_i32_298 dim 1 : vector<8x256xf32>, i32 -> vector<8x256xf32>
      %c6_299 = arith.constant 6 : index
      %c0_300 = arith.constant 0 : index
      %c0_301 = arith.constant 0 : index
      %491 = vector.load %arg1[%c6_299, %c0_300, %c0_301] : memref<9x8x256xf32, #tpu.memory_space<vmem>>, vector<1x8x256xf32>
      %492 = vector.shape_cast %491 : vector<1x8x256xf32> to vector<8x256xf32>
      %493 = arith.mulf %492, %490 : vector<8x256xf32>
      %c240_i32_302 = arith.constant 240 : i32
      %494 = tpu.dynamic_rotate %469 by %c240_i32_302 dim 1 : vector<8x256xf32>, i32 -> vector<8x256xf32>
      %c7_303 = arith.constant 7 : index
      %c0_304 = arith.constant 0 : index
      %c0_305 = arith.constant 0 : index
      %495 = vector.load %arg1[%c7_303, %c0_304, %c0_305] : memref<9x8x256xf32, #tpu.memory_space<vmem>>, vector<1x8x256xf32>
      %496 = vector.shape_cast %495 : vector<1x8x256xf32> to vector<8x256xf32>
      %497 = arith.mulf %496, %494 : vector<8x256xf32>
      %c239_i32_306 = arith.constant 239 : i32
      %498 = tpu.dynamic_rotate %469 by %c239_i32_306 dim 1 : vector<8x256xf32>, i32 -> vector<8x256xf32>
      %c8_307 = arith.constant 8 : index
      %c0_308 = arith.constant 0 : index
      %c0_309 = arith.constant 0 : index
      %499 = vector.load %arg1[%c8_307, %c0_308, %c0_309] : memref<9x8x256xf32, #tpu.memory_space<vmem>>, vector<1x8x256xf32>
      %500 = vector.shape_cast %499 : vector<1x8x256xf32> to vector<8x256xf32>
      %501 = arith.mulf %500, %498 : vector<8x256xf32>
      %502 = tpu.concatenate %473, %477, %481, %485, %469, %489, %493, %497, %501 in 0 : vector<8x256xf32>, vector<8x256xf32>, vector<8x256xf32>, vector<8x256xf32>, vector<8x256xf32>, vector<8x256xf32>, vector<8x256xf32>, vector<8x256xf32>, vector<8x256xf32> -> vector<72x256xf32>
      %503 = arith.truncf %502 : vector<72x256xf32> to vector<72x256xbf16>
      %c0_310 = arith.constant 0 : index
      %c0_311 = arith.constant 0 : index
      %504 = vector.load %arg3[%c0_310, %c0_311] : memref<8x72xbf16, #tpu.memory_space<vmem>>, vector<8x72xbf16>
      %cst_312 = arith.constant dense<0.000000e+00> : vector<8x256xf32>
      %505 = tpu.matmul %504, %503, %cst_312 {dimension_numbers = #tpu.dot_dimension_numbers<[1], [0], [0], [1], [0, 0, 1, 1], [], []>} : vector<8x72xbf16>, vector<72x256xbf16>, vector<8x256xf32> -> vector<8x256xf32>
      %506 = arith.addf %505, %35 : vector<8x256xf32>
      %507 = arith.mulf %506, %506 : vector<8x256xf32>
      %508 = tpu.concatenate %506, %507 in 0 : vector<8x256xf32>, vector<8x256xf32> -> vector<16x256xf32>
      %cst_313 = arith.constant dense<0.000000e+00> : vector<16x1xf32>
      %509 = tpu.matmul %508, %0, %cst_313 {dimension_numbers = #tpu.dot_dimension_numbers<[1], [0], [0], [1], [0, 0, 1, 1], [], []>} : vector<16x256xf32>, vector<256x1xf32>, vector<16x1xf32> -> vector<16x1xf32>
      %510 = vector.extract_strided_slice %509 {offsets = [0, 0], sizes = [8, 1], strides = [1, 1]} : vector<16x1xf32> to vector<8x1xf32>
      %511 = vector.broadcast %cst_1 : f32 to vector<8x1xf32>
      %512 = arith.mulf %510, %511 : vector<8x1xf32>
      %513 = vector.extract_strided_slice %509 {offsets = [8, 0], sizes = [8, 1], strides = [1, 1]} : vector<16x1xf32> to vector<8x1xf32>
      %514 = vector.broadcast %cst_1 : f32 to vector<8x1xf32>
      %515 = arith.mulf %513, %514 : vector<8x1xf32>
      %516 = arith.mulf %512, %512 : vector<8x1xf32>
      %517 = arith.subf %515, %516 : vector<8x1xf32>
      %cst_314 = arith.constant 0.000000e+00 : f32
      %518 = vector.broadcast %cst_314 : f32 to vector<8x1xf32>
      %519 = arith.maximumf %517, %518 : vector<8x1xf32>
      %c4_315 = arith.constant 4 : index
      %c0_316 = arith.constant 0 : index
      %c0_317 = arith.constant 0 : index
      %520 = vector.load %arg7[%c4_315, %c0_316, %c0_317] : memref<6x8x1xf32, #tpu.memory_space<vmem>>, vector<1x8x1xf32>
      %521 = vector.shape_cast %520 : vector<1x8x1xf32> to vector<8x1xf32>
      %cst_318 = arith.constant 9.99999974E-6 : f32
      %522 = vector.broadcast %cst_318 : f32 to vector<8x1xf32>
      %523 = arith.addf %519, %522 : vector<8x1xf32>
      %524 = math.rsqrt %523 : vector<8x1xf32>
      %525 = arith.mulf %521, %524 : vector<8x1xf32>
      %c5_319 = arith.constant 5 : index
      %c0_320 = arith.constant 0 : index
      %c0_321 = arith.constant 0 : index
      %526 = vector.load %arg7[%c5_319, %c0_320, %c0_321] : memref<6x8x1xf32, #tpu.memory_space<vmem>>, vector<1x8x1xf32>
      %527 = vector.shape_cast %526 : vector<1x8x1xf32> to vector<8x1xf32>
      %528 = arith.mulf %512, %525 : vector<8x1xf32>
      %529 = arith.subf %527, %528 : vector<8x1xf32>
      %530 = vector.broadcast %525 : vector<8x1xf32> to vector<8x256xf32>
      %531 = arith.mulf %506, %530 : vector<8x256xf32>
      %532 = vector.broadcast %529 : vector<8x1xf32> to vector<8x256xf32>
      %533 = arith.addf %531, %532 : vector<8x256xf32>
      %cst_322 = arith.constant 2.500000e-01 : f32
      %534 = vector.broadcast %cst_322 : f32 to vector<8x256xf32>
      %535 = arith.mulf %534, %533 : vector<8x256xf32>
      %536 = arith.addf %arg10, %535 : vector<8x256xf32>
      %537 = arith.mulf %536, %536 : vector<8x256xf32>
      %538 = tpu.concatenate %536, %537 in 0 : vector<8x256xf32>, vector<8x256xf32> -> vector<16x256xf32>
      %cst_323 = arith.constant dense<0.000000e+00> : vector<16x1xf32>
      %539 = tpu.matmul %538, %0, %cst_323 {dimension_numbers = #tpu.dot_dimension_numbers<[1], [0], [0], [1], [0, 0, 1, 1], [], []>} : vector<16x256xf32>, vector<256x1xf32>, vector<16x1xf32> -> vector<16x1xf32>
      %540 = vector.extract_strided_slice %539 {offsets = [0, 0], sizes = [8, 1], strides = [1, 1]} : vector<16x1xf32> to vector<8x1xf32>
      %541 = vector.broadcast %cst_1 : f32 to vector<8x1xf32>
      %542 = arith.mulf %540, %541 : vector<8x1xf32>
      %543 = vector.extract_strided_slice %539 {offsets = [8, 0], sizes = [8, 1], strides = [1, 1]} : vector<16x1xf32> to vector<8x1xf32>
      %544 = vector.broadcast %cst_1 : f32 to vector<8x1xf32>
      %545 = arith.mulf %543, %544 : vector<8x1xf32>
      %546 = arith.mulf %542, %542 : vector<8x1xf32>
      %547 = arith.subf %545, %546 : vector<8x1xf32>
      %cst_324 = arith.constant 0.000000e+00 : f32
      %548 = vector.broadcast %cst_324 : f32 to vector<8x1xf32>
      %549 = arith.maximumf %547, %548 : vector<8x1xf32>
      %c0_325 = arith.constant 0 : index
      %c0_326 = arith.constant 0 : index
      %c0_327 = arith.constant 0 : index
      %550 = vector.load %arg7[%c0_325, %c0_326, %c0_327] : memref<6x8x1xf32, #tpu.memory_space<vmem>>, vector<1x8x1xf32>
      %551 = vector.shape_cast %550 : vector<1x8x1xf32> to vector<8x1xf32>
      %cst_328 = arith.constant 9.99999974E-6 : f32
      %552 = vector.broadcast %cst_328 : f32 to vector<8x1xf32>
      %553 = arith.addf %549, %552 : vector<8x1xf32>
      %554 = math.rsqrt %553 : vector<8x1xf32>
      %555 = arith.mulf %551, %554 : vector<8x1xf32>
      %c1_329 = arith.constant 1 : index
      %c0_330 = arith.constant 0 : index
      %c0_331 = arith.constant 0 : index
      %556 = vector.load %arg7[%c1_329, %c0_330, %c0_331] : memref<6x8x1xf32, #tpu.memory_space<vmem>>, vector<1x8x1xf32>
      %557 = vector.shape_cast %556 : vector<1x8x1xf32> to vector<8x1xf32>
      %558 = arith.mulf %542, %555 : vector<8x1xf32>
      %559 = arith.subf %557, %558 : vector<8x1xf32>
      %560 = vector.broadcast %555 : vector<8x1xf32> to vector<8x256xf32>
      %561 = arith.mulf %536, %560 : vector<8x256xf32>
      %562 = vector.broadcast %559 : vector<8x1xf32> to vector<8x256xf32>
      %563 = arith.addf %561, %562 : vector<8x256xf32>
      %cst_332 = arith.constant 0.000000e+00 : f32
      %564 = vector.broadcast %cst_332 : f32 to vector<8x256xf32>
      %565 = arith.maximumf %563, %564 : vector<8x256xf32>
      %c17_i32_333 = arith.constant 17 : i32
      %566 = tpu.dynamic_rotate %565 by %c17_i32_333 dim 1 : vector<8x256xf32>, i32 -> vector<8x256xf32>
      %c0_334 = arith.constant 0 : index
      %c0_335 = arith.constant 0 : index
      %c0_336 = arith.constant 0 : index
      %567 = vector.load %arg1[%c0_334, %c0_335, %c0_336] : memref<9x8x256xf32, #tpu.memory_space<vmem>>, vector<1x8x256xf32>
      %568 = vector.shape_cast %567 : vector<1x8x256xf32> to vector<8x256xf32>
      %569 = arith.mulf %568, %566 : vector<8x256xf32>
      %c16_i32_337 = arith.constant 16 : i32
      %570 = tpu.dynamic_rotate %565 by %c16_i32_337 dim 1 : vector<8x256xf32>, i32 -> vector<8x256xf32>
      %c1_338 = arith.constant 1 : index
      %c0_339 = arith.constant 0 : index
      %c0_340 = arith.constant 0 : index
      %571 = vector.load %arg1[%c1_338, %c0_339, %c0_340] : memref<9x8x256xf32, #tpu.memory_space<vmem>>, vector<1x8x256xf32>
      %572 = vector.shape_cast %571 : vector<1x8x256xf32> to vector<8x256xf32>
      %573 = arith.mulf %572, %570 : vector<8x256xf32>
      %c15_i32_341 = arith.constant 15 : i32
      %574 = tpu.dynamic_rotate %565 by %c15_i32_341 dim 1 : vector<8x256xf32>, i32 -> vector<8x256xf32>
      %c2_342 = arith.constant 2 : index
      %c0_343 = arith.constant 0 : index
      %c0_344 = arith.constant 0 : index
      %575 = vector.load %arg1[%c2_342, %c0_343, %c0_344] : memref<9x8x256xf32, #tpu.memory_space<vmem>>, vector<1x8x256xf32>
      %576 = vector.shape_cast %575 : vector<1x8x256xf32> to vector<8x256xf32>
      %577 = arith.mulf %576, %574 : vector<8x256xf32>
      %c1_i32_345 = arith.constant 1 : i32
      %578 = tpu.dynamic_rotate %565 by %c1_i32_345 dim 1 : vector<8x256xf32>, i32 -> vector<8x256xf32>
      %c3_346 = arith.constant 3 : index
      %c0_347 = arith.constant 0 : index
      %c0_348 = arith.constant 0 : index
      %579 = vector.load %arg1[%c3_346, %c0_347, %c0_348] : memref<9x8x256xf32, #tpu.memory_space<vmem>>, vector<1x8x256xf32>
      %580 = vector.shape_cast %579 : vector<1x8x256xf32> to vector<8x256xf32>
      %581 = arith.mulf %580, %578 : vector<8x256xf32>
      %c255_i32_349 = arith.constant 255 : i32
      %582 = tpu.dynamic_rotate %565 by %c255_i32_349 dim 1 : vector<8x256xf32>, i32 -> vector<8x256xf32>
      %c5_350 = arith.constant 5 : index
      %c0_351 = arith.constant 0 : index
      %c0_352 = arith.constant 0 : index
      %583 = vector.load %arg1[%c5_350, %c0_351, %c0_352] : memref<9x8x256xf32, #tpu.memory_space<vmem>>, vector<1x8x256xf32>
      %584 = vector.shape_cast %583 : vector<1x8x256xf32> to vector<8x256xf32>
      %585 = arith.mulf %584, %582 : vector<8x256xf32>
      %c241_i32_353 = arith.constant 241 : i32
      %586 = tpu.dynamic_rotate %565 by %c241_i32_353 dim 1 : vector<8x256xf32>, i32 -> vector<8x256xf32>
      %c6_354 = arith.constant 6 : index
      %c0_355 = arith.constant 0 : index
      %c0_356 = arith.constant 0 : index
      %587 = vector.load %arg1[%c6_354, %c0_355, %c0_356] : memref<9x8x256xf32, #tpu.memory_space<vmem>>, vector<1x8x256xf32>
      %588 = vector.shape_cast %587 : vector<1x8x256xf32> to vector<8x256xf32>
      %589 = arith.mulf %588, %586 : vector<8x256xf32>
      %c240_i32_357 = arith.constant 240 : i32
      %590 = tpu.dynamic_rotate %565 by %c240_i32_357 dim 1 : vector<8x256xf32>, i32 -> vector<8x256xf32>
      %c7_358 = arith.constant 7 : index
      %c0_359 = arith.constant 0 : index
      %c0_360 = arith.constant 0 : index
      %591 = vector.load %arg1[%c7_358, %c0_359, %c0_360] : memref<9x8x256xf32, #tpu.memory_space<vmem>>, vector<1x8x256xf32>
      %592 = vector.shape_cast %591 : vector<1x8x256xf32> to vector<8x256xf32>
      %593 = arith.mulf %592, %590 : vector<8x256xf32>
      %c239_i32_361 = arith.constant 239 : i32
      %594 = tpu.dynamic_rotate %565 by %c239_i32_361 dim 1 : vector<8x256xf32>, i32 -> vector<8x256xf32>
      %c8_362 = arith.constant 8 : index
      %c0_363 = arith.constant 0 : index
      %c0_364 = arith.constant 0 : index
      %595 = vector.load %arg1[%c8_362, %c0_363, %c0_364] : memref<9x8x256xf32, #tpu.memory_space<vmem>>, vector<1x8x256xf32>
      %596 = vector.shape_cast %595 : vector<1x8x256xf32> to vector<8x256xf32>
      %597 = arith.mulf %596, %594 : vector<8x256xf32>
      %598 = tpu.concatenate %569, %573, %577, %581, %565, %585, %589, %593, %597 in 0 : vector<8x256xf32>, vector<8x256xf32>, vector<8x256xf32>, vector<8x256xf32>, vector<8x256xf32>, vector<8x256xf32>, vector<8x256xf32>, vector<8x256xf32>, vector<8x256xf32> -> vector<72x256xf32>
      %599 = arith.truncf %598 : vector<72x256xf32> to vector<72x256xbf16>
      %c0_365 = arith.constant 0 : index
      %c0_366 = arith.constant 0 : index
      %600 = vector.load %arg2[%c0_365, %c0_366] : memref<8x72xbf16, #tpu.memory_space<vmem>>, vector<8x72xbf16>
      %cst_367 = arith.constant dense<0.000000e+00> : vector<8x256xf32>
      %601 = tpu.matmul %600, %599, %cst_367 {dimension_numbers = #tpu.dot_dimension_numbers<[1], [0], [0], [1], [0, 0, 1, 1], [], []>} : vector<8x72xbf16>, vector<72x256xbf16>, vector<8x256xf32> -> vector<8x256xf32>
      %602 = arith.addf %601, %43 : vector<8x256xf32>
      %603 = arith.mulf %602, %602 : vector<8x256xf32>
      %604 = tpu.concatenate %602, %603 in 0 : vector<8x256xf32>, vector<8x256xf32> -> vector<16x256xf32>
      %cst_368 = arith.constant dense<0.000000e+00> : vector<16x1xf32>
      %605 = tpu.matmul %604, %0, %cst_368 {dimension_numbers = #tpu.dot_dimension_numbers<[1], [0], [0], [1], [0, 0, 1, 1], [], []>} : vector<16x256xf32>, vector<256x1xf32>, vector<16x1xf32> -> vector<16x1xf32>
      %606 = vector.extract_strided_slice %605 {offsets = [0, 0], sizes = [8, 1], strides = [1, 1]} : vector<16x1xf32> to vector<8x1xf32>
      %607 = vector.broadcast %cst_1 : f32 to vector<8x1xf32>
      %608 = arith.mulf %606, %607 : vector<8x1xf32>
      %609 = vector.extract_strided_slice %605 {offsets = [8, 0], sizes = [8, 1], strides = [1, 1]} : vector<16x1xf32> to vector<8x1xf32>
      %610 = vector.broadcast %cst_1 : f32 to vector<8x1xf32>
      %611 = arith.mulf %609, %610 : vector<8x1xf32>
      %612 = arith.mulf %608, %608 : vector<8x1xf32>
      %613 = arith.subf %611, %612 : vector<8x1xf32>
      %cst_369 = arith.constant 0.000000e+00 : f32
      %614 = vector.broadcast %cst_369 : f32 to vector<8x1xf32>
      %615 = arith.maximumf %613, %614 : vector<8x1xf32>
      %c2_370 = arith.constant 2 : index
      %c0_371 = arith.constant 0 : index
      %c0_372 = arith.constant 0 : index
      %616 = vector.load %arg7[%c2_370, %c0_371, %c0_372] : memref<6x8x1xf32, #tpu.memory_space<vmem>>, vector<1x8x1xf32>
      %617 = vector.shape_cast %616 : vector<1x8x1xf32> to vector<8x1xf32>
      %cst_373 = arith.constant 9.99999974E-6 : f32
      %618 = vector.broadcast %cst_373 : f32 to vector<8x1xf32>
      %619 = arith.addf %615, %618 : vector<8x1xf32>
      %620 = math.rsqrt %619 : vector<8x1xf32>
      %621 = arith.mulf %617, %620 : vector<8x1xf32>
      %c3_374 = arith.constant 3 : index
      %c0_375 = arith.constant 0 : index
      %c0_376 = arith.constant 0 : index
      %622 = vector.load %arg7[%c3_374, %c0_375, %c0_376] : memref<6x8x1xf32, #tpu.memory_space<vmem>>, vector<1x8x1xf32>
      %623 = vector.shape_cast %622 : vector<1x8x1xf32> to vector<8x1xf32>
      %624 = arith.mulf %608, %621 : vector<8x1xf32>
      %625 = arith.subf %623, %624 : vector<8x1xf32>
      %626 = vector.broadcast %621 : vector<8x1xf32> to vector<8x256xf32>
      %627 = arith.mulf %602, %626 : vector<8x256xf32>
      %628 = vector.broadcast %625 : vector<8x1xf32> to vector<8x256xf32>
      %629 = arith.addf %627, %628 : vector<8x256xf32>
      %cst_377 = arith.constant 0.000000e+00 : f32
      %630 = vector.broadcast %cst_377 : f32 to vector<8x256xf32>
      %631 = arith.maximumf %629, %630 : vector<8x256xf32>
      %c17_i32_378 = arith.constant 17 : i32
      %632 = tpu.dynamic_rotate %631 by %c17_i32_378 dim 1 : vector<8x256xf32>, i32 -> vector<8x256xf32>
      %c0_379 = arith.constant 0 : index
      %c0_380 = arith.constant 0 : index
      %c0_381 = arith.constant 0 : index
      %633 = vector.load %arg1[%c0_379, %c0_380, %c0_381] : memref<9x8x256xf32, #tpu.memory_space<vmem>>, vector<1x8x256xf32>
      %634 = vector.shape_cast %633 : vector<1x8x256xf32> to vector<8x256xf32>
      %635 = arith.mulf %634, %632 : vector<8x256xf32>
      %c16_i32_382 = arith.constant 16 : i32
      %636 = tpu.dynamic_rotate %631 by %c16_i32_382 dim 1 : vector<8x256xf32>, i32 -> vector<8x256xf32>
      %c1_383 = arith.constant 1 : index
      %c0_384 = arith.constant 0 : index
      %c0_385 = arith.constant 0 : index
      %637 = vector.load %arg1[%c1_383, %c0_384, %c0_385] : memref<9x8x256xf32, #tpu.memory_space<vmem>>, vector<1x8x256xf32>
      %638 = vector.shape_cast %637 : vector<1x8x256xf32> to vector<8x256xf32>
      %639 = arith.mulf %638, %636 : vector<8x256xf32>
      %c15_i32_386 = arith.constant 15 : i32
      %640 = tpu.dynamic_rotate %631 by %c15_i32_386 dim 1 : vector<8x256xf32>, i32 -> vector<8x256xf32>
      %c2_387 = arith.constant 2 : index
      %c0_388 = arith.constant 0 : index
      %c0_389 = arith.constant 0 : index
      %641 = vector.load %arg1[%c2_387, %c0_388, %c0_389] : memref<9x8x256xf32, #tpu.memory_space<vmem>>, vector<1x8x256xf32>
      %642 = vector.shape_cast %641 : vector<1x8x256xf32> to vector<8x256xf32>
      %643 = arith.mulf %642, %640 : vector<8x256xf32>
      %c1_i32_390 = arith.constant 1 : i32
      %644 = tpu.dynamic_rotate %631 by %c1_i32_390 dim 1 : vector<8x256xf32>, i32 -> vector<8x256xf32>
      %c3_391 = arith.constant 3 : index
      %c0_392 = arith.constant 0 : index
      %c0_393 = arith.constant 0 : index
      %645 = vector.load %arg1[%c3_391, %c0_392, %c0_393] : memref<9x8x256xf32, #tpu.memory_space<vmem>>, vector<1x8x256xf32>
      %646 = vector.shape_cast %645 : vector<1x8x256xf32> to vector<8x256xf32>
      %647 = arith.mulf %646, %644 : vector<8x256xf32>
      %c255_i32_394 = arith.constant 255 : i32
      %648 = tpu.dynamic_rotate %631 by %c255_i32_394 dim 1 : vector<8x256xf32>, i32 -> vector<8x256xf32>
      %c5_395 = arith.constant 5 : index
      %c0_396 = arith.constant 0 : index
      %c0_397 = arith.constant 0 : index
      %649 = vector.load %arg1[%c5_395, %c0_396, %c0_397] : memref<9x8x256xf32, #tpu.memory_space<vmem>>, vector<1x8x256xf32>
      %650 = vector.shape_cast %649 : vector<1x8x256xf32> to vector<8x256xf32>
      %651 = arith.mulf %650, %648 : vector<8x256xf32>
      %c241_i32_398 = arith.constant 241 : i32
      %652 = tpu.dynamic_rotate %631 by %c241_i32_398 dim 1 : vector<8x256xf32>, i32 -> vector<8x256xf32>
      %c6_399 = arith.constant 6 : index
      %c0_400 = arith.constant 0 : index
      %c0_401 = arith.constant 0 : index
      %653 = vector.load %arg1[%c6_399, %c0_400, %c0_401] : memref<9x8x256xf32, #tpu.memory_space<vmem>>, vector<1x8x256xf32>
      %654 = vector.shape_cast %653 : vector<1x8x256xf32> to vector<8x256xf32>
      %655 = arith.mulf %654, %652 : vector<8x256xf32>
      %c240_i32_402 = arith.constant 240 : i32
      %656 = tpu.dynamic_rotate %631 by %c240_i32_402 dim 1 : vector<8x256xf32>, i32 -> vector<8x256xf32>
      %c7_403 = arith.constant 7 : index
      %c0_404 = arith.constant 0 : index
      %c0_405 = arith.constant 0 : index
      %657 = vector.load %arg1[%c7_403, %c0_404, %c0_405] : memref<9x8x256xf32, #tpu.memory_space<vmem>>, vector<1x8x256xf32>
      %658 = vector.shape_cast %657 : vector<1x8x256xf32> to vector<8x256xf32>
      %659 = arith.mulf %658, %656 : vector<8x256xf32>
      %c239_i32_406 = arith.constant 239 : i32
      %660 = tpu.dynamic_rotate %631 by %c239_i32_406 dim 1 : vector<8x256xf32>, i32 -> vector<8x256xf32>
      %c8_407 = arith.constant 8 : index
      %c0_408 = arith.constant 0 : index
      %c0_409 = arith.constant 0 : index
      %661 = vector.load %arg1[%c8_407, %c0_408, %c0_409] : memref<9x8x256xf32, #tpu.memory_space<vmem>>, vector<1x8x256xf32>
      %662 = vector.shape_cast %661 : vector<1x8x256xf32> to vector<8x256xf32>
      %663 = arith.mulf %662, %660 : vector<8x256xf32>
      %664 = tpu.concatenate %635, %639, %643, %647, %631, %651, %655, %659, %663 in 0 : vector<8x256xf32>, vector<8x256xf32>, vector<8x256xf32>, vector<8x256xf32>, vector<8x256xf32>, vector<8x256xf32>, vector<8x256xf32>, vector<8x256xf32>, vector<8x256xf32> -> vector<72x256xf32>
      %665 = arith.truncf %664 : vector<72x256xf32> to vector<72x256xbf16>
      %c0_410 = arith.constant 0 : index
      %c0_411 = arith.constant 0 : index
      %666 = vector.load %arg3[%c0_410, %c0_411] : memref<8x72xbf16, #tpu.memory_space<vmem>>, vector<8x72xbf16>
      %cst_412 = arith.constant dense<0.000000e+00> : vector<8x256xf32>
      %667 = tpu.matmul %666, %665, %cst_412 {dimension_numbers = #tpu.dot_dimension_numbers<[1], [0], [0], [1], [0, 0, 1, 1], [], []>} : vector<8x72xbf16>, vector<72x256xbf16>, vector<8x256xf32> -> vector<8x256xf32>
      %668 = arith.addf %667, %50 : vector<8x256xf32>
      %669 = arith.mulf %668, %668 : vector<8x256xf32>
      %670 = tpu.concatenate %668, %669 in 0 : vector<8x256xf32>, vector<8x256xf32> -> vector<16x256xf32>
      %cst_413 = arith.constant dense<0.000000e+00> : vector<16x1xf32>
      %671 = tpu.matmul %670, %0, %cst_413 {dimension_numbers = #tpu.dot_dimension_numbers<[1], [0], [0], [1], [0, 0, 1, 1], [], []>} : vector<16x256xf32>, vector<256x1xf32>, vector<16x1xf32> -> vector<16x1xf32>
      %672 = vector.extract_strided_slice %671 {offsets = [0, 0], sizes = [8, 1], strides = [1, 1]} : vector<16x1xf32> to vector<8x1xf32>
      %673 = vector.broadcast %cst_1 : f32 to vector<8x1xf32>
      %674 = arith.mulf %672, %673 : vector<8x1xf32>
      %675 = vector.extract_strided_slice %671 {offsets = [8, 0], sizes = [8, 1], strides = [1, 1]} : vector<16x1xf32> to vector<8x1xf32>
      %676 = vector.broadcast %cst_1 : f32 to vector<8x1xf32>
      %677 = arith.mulf %675, %676 : vector<8x1xf32>
      %678 = arith.mulf %674, %674 : vector<8x1xf32>
      %679 = arith.subf %677, %678 : vector<8x1xf32>
      %cst_414 = arith.constant 0.000000e+00 : f32
      %680 = vector.broadcast %cst_414 : f32 to vector<8x1xf32>
      %681 = arith.maximumf %679, %680 : vector<8x1xf32>
      %c4_415 = arith.constant 4 : index
      %c0_416 = arith.constant 0 : index
      %c0_417 = arith.constant 0 : index
      %682 = vector.load %arg7[%c4_415, %c0_416, %c0_417] : memref<6x8x1xf32, #tpu.memory_space<vmem>>, vector<1x8x1xf32>
      %683 = vector.shape_cast %682 : vector<1x8x1xf32> to vector<8x1xf32>
      %cst_418 = arith.constant 9.99999974E-6 : f32
      %684 = vector.broadcast %cst_418 : f32 to vector<8x1xf32>
      %685 = arith.addf %681, %684 : vector<8x1xf32>
      %686 = math.rsqrt %685 : vector<8x1xf32>
      %687 = arith.mulf %683, %686 : vector<8x1xf32>
      %c5_419 = arith.constant 5 : index
      %c0_420 = arith.constant 0 : index
      %c0_421 = arith.constant 0 : index
      %688 = vector.load %arg7[%c5_419, %c0_420, %c0_421] : memref<6x8x1xf32, #tpu.memory_space<vmem>>, vector<1x8x1xf32>
      %689 = vector.shape_cast %688 : vector<1x8x1xf32> to vector<8x1xf32>
      %690 = arith.mulf %674, %687 : vector<8x1xf32>
      %691 = arith.subf %689, %690 : vector<8x1xf32>
      %692 = vector.broadcast %687 : vector<8x1xf32> to vector<8x256xf32>
      %693 = arith.mulf %668, %692 : vector<8x256xf32>
      %694 = vector.broadcast %691 : vector<8x1xf32> to vector<8x256xf32>
      %695 = arith.addf %693, %694 : vector<8x256xf32>
      %cst_422 = arith.constant 2.000000e+00 : f32
      %696 = vector.broadcast %cst_422 : f32 to vector<8x256xf32>
      %697 = arith.mulf %696, %371 : vector<8x256xf32>
      %698 = arith.addf %209, %697 : vector<8x256xf32>
      %cst_423 = arith.constant 2.000000e+00 : f32
      %699 = vector.broadcast %cst_423 : f32 to vector<8x256xf32>
      %700 = arith.mulf %699, %533 : vector<8x256xf32>
      %701 = arith.addf %698, %700 : vector<8x256xf32>
      %702 = arith.addf %701, %695 : vector<8x256xf32>
      %cst_424 = arith.constant 0.0416666679 : f32
      %703 = vector.broadcast %cst_424 : f32 to vector<8x256xf32>
      %704 = arith.mulf %703, %702 : vector<8x256xf32>
      %705 = arith.addf %arg10, %704 : vector<8x256xf32>
      scf.yield %705 : vector<8x256xf32>
    }
    %c4_i32_2 = arith.constant 4 : i32
    %c0_3 = arith.constant 0 : index
    %c0_4 = arith.constant 0 : index
    %4 = vector.load %arg8[%c0_3, %c0_4] : memref<8x256xf32, #tpu.memory_space<vmem>>, vector<8x256xf32>
    tpu.vector_store %arg8[%c0_3, %c0_4], %3 {strides = array<i32>} : memref<8x256xf32, #tpu.memory_space<vmem>>, vector<8x256xf32>,
    return
  }
}

</mosaic_0001>

<llo_original>
// kernel: tpu_custom_call.1
$region0: #{tpu_custom_call.1}
  #allocation0 [shape = 'u32[]', space=smem, size = 0x4, offset = 0x4, fixed_abs, tag = 'smem constant byte address 0x4 - core index']
  #allocation1 [shape = 'u32[144,128]{1,0:T(1,128)}', space=vmem, size = 0x12000, scoped, tag = 'internal scratch']
  %s0 = inlined_call_operand.vmem [shape: f32[8,256], index: 0, kind: input, shape index: {}]
  %s1 = inlined_call_operand.hbm [shape: f32[9,8,256], index: 1, kind: input, shape index: {}]
  %s2 = inlined_call_operand.vmem [shape: bf16[8,72], index: 2, kind: input, shape index: {}]
  %s3 = inlined_call_operand.vmem [shape: bf16[8,72], index: 3, kind: input, shape index: {}]
  %s4 = inlined_call_operand.vmem [shape: f32[8,256], index: 4, kind: input, shape index: {}]
  %s5 = inlined_call_operand.vmem [shape: f32[8,256], index: 5, kind: input, shape index: {}]
  %s6 = inlined_call_operand.vmem [shape: f32[2,8,1], index: 6, kind: input, shape index: {}]
  %s7 = inlined_call_operand.vmem [shape: f32[6,8,1], index: 7, kind: input, shape index: {}]
  %s8 = inlined_call_operand.hbm [shape: f32[8,256], index: 8, kind: output, shape index: {}]
  %s9 = sld [smem:[#allocation0]]
  $region53: #{tpu_custom_call.1} parent=0
    _
  %s11 = ssub.s32 1, %s9
  %s12 = scalar_select 0, %s11, %s9
  $region1: #{tpu_custom_call.1} parent=0
    #allocation2 [shape = 'u8[73728]{0}', space=vmem, size = 0x12000, scoped, tag = 'input window, operand 1, single buffered']
    #allocation3 [shape = 's32[1]{0}', space=sflag, size = 0x4, scoped, tag = 'scoped memory for tpu_custom_call.1']
    #allocation4 [shape = 's32[1]{0}', space=sflag, size = 0x4, scoped, tag = 'scoped memory for tpu_custom_call.1']
    #allocation5 [shape = 'u8[8192]{0}', space=vmem, size = 0x2000, scoped, tag = 'output window, operand 0, single buffered']
    %13 = vsyncpa [#allocation3], 0
    %14 = vsyncpa [#allocation4], 0
    // Predicated region
    $region2: #{tpu_custom_call.1} parent=1 // pred_check
      _
    $region3: #{tpu_custom_call.1} parent=1 // pred_check_branch
      %16 = sbr.rel (0) target = $region5
    $region4: #{tpu_custom_call.1} parent=1 // pred_region
      _
    $region5: #{tpu_custom_call.1} parent=1 // pred_fallthru
      _
    // Predicated region
    $region6: #{tpu_custom_call.1} parent=1 // pred_check
      _
    $region7: #{tpu_custom_call.1} parent=1 // pred_check_branch
      %18 = sbr.rel (0) target = $region9
    $region8: #{tpu_custom_call.1} parent=1 // pred_region
      %s20 = ssub.s32 2304, 2304
      %21 = vsyncadd [#allocation3], %s20
      %s22 = sshll.u32 [#allocation2], 4
      %s23 = int_to_ptr.vmem [resolvable:$true] %s22
      %28 = dma.hbm_to_vmem [thread:$0]  %s1, 2304, %s23, [#allocation3], 256, 256, 16
    $region9: #{tpu_custom_call.1} parent=1 // pred_fallthru
      _
    // Predicated region
    $region10: #{tpu_custom_call.1} parent=1 // pred_check
      _
    $region11: #{tpu_custom_call.1} parent=1 // pred_check_branch
      %30 = sbr.rel (0) target = $region13
    $region12: #{tpu_custom_call.1} parent=1 // pred_region
      _
    $region13: #{tpu_custom_call.1} parent=1 // pred_fallthru
      _
    // Predicated region
    $region14: #{tpu_custom_call.1} parent=1 // pred_check
      _
    $region15: #{tpu_custom_call.1} parent=1 // pred_check_branch
      %32 = sbr.rel (0) target = $region17
    $region16: #{tpu_custom_call.1} parent=1 // pred_region
      _
    $region17: #{tpu_custom_call.1} parent=1 // pred_fallthru
      _
    // Predicated region
    $region18: #{tpu_custom_call.1} parent=1 // pred_check
      _
    $region19: #{tpu_custom_call.1} parent=1 // pred_check_branch
      %34 = sbr.rel (0) target = $region21
    $region20: #{tpu_custom_call.1} parent=1 // pred_region
      _
    $region21: #{tpu_custom_call.1} parent=1 // pred_fallthru
      _
    // Predicated region
    $region22: #{tpu_custom_call.1} parent=1 // pred_check
      _
    $region23: #{tpu_custom_call.1} parent=1 // pred_check_branch
      %36 = sbr.rel (0) target = $region25
    $region24: #{tpu_custom_call.1} parent=1 // pred_region
      _
    $region25: #{tpu_custom_call.1} parent=1 // pred_fallthru
      _
    // Predicated region
    $region26: #{tpu_custom_call.1} parent=1 // pred_check
      _
    $region27: #{tpu_custom_call.1} parent=1 // pred_check_branch
      %38 = sbr.rel (0) target = $region29
    $region28: #{tpu_custom_call.1} parent=1 // pred_region
      _
    $region29: #{tpu_custom_call.1} parent=1 // pred_fallthru
      _
    // Predicated region
    $region30: #{tpu_custom_call.1} parent=1 // pred_check
      _
    $region31: #{tpu_custom_call.1} parent=1 // pred_check_branch
      %40 = sbr.rel (0) target = $region33
    $region32: #{tpu_custom_call.1} parent=1 // pred_region
      _
    $region33: #{tpu_custom_call.1} parent=1 // pred_fallthru
      _
    // Predicated region
    $region34: #{tpu_custom_call.1} parent=1 // pred_check
      _
    $region35: #{tpu_custom_call.1} parent=1 // pred_check_branch
      %42 = sbr.rel (0) target = $region37
    $region36: #{tpu_custom_call.1} parent=1 // pred_region
      %43 = dma.done [#allocation3], 2304
    $region37: #{tpu_custom_call.1} parent=1 // pred_fallthru
      _
    %v45 = vld [vmem:[%s0] sm:$0xff]
    %v46 = vld [vmem:[%s0 + $0x8] sm:$0xff]
    loop: start=0, step=1, limit=4
    $region38: #{tpu_custom_call.1} parent=1 // loop_pre_header
      _
    $region39: #{tpu_custom_call.1} parent=1 // loop_header
      %s48 = sphi 0, %s52
      %p49 = scmp.ge.s32.totalorder %s48, 4
      %v53 = vphi %v45, %v2377
      %v54 = vphi %v46, %v2378
    $region40: #{tpu_custom_call.1} parent=1 // loop_header_branch
      %51 = sbr.rel (%p49) target = $region44
    $region41: #{tpu_custom_call.1} parent=1 // loop_body
      %s55 = scvt.s32.f32 %s48
      %s56 = smul.f32 %s55, 0.25
      %v57 = vld [vmem:[%s4] sm:$0xff]
      %v58 = vld [vmem:[%s4 + $0x8] sm:$0xff]
      %v59 = vstv %s56
      %v60 = vmul.f32 %v59, %v57
      %v61 = vmul.f32 %v59, %v58
      %v62 = vld [vmem:[%s6] sm:$0xff]
      %64 = vset.pattern.permute.xlu0 0
      %65 = vperm.xlu0 %64, %v62
      %v66 = vpop.permute.xlu0 %65
      %v68 = vadd.f32 %v60, %v66
      %v69 = vadd.f32 %v61, %v66
      %v70 = vld [vmem:[%s5] sm:$0xff]
      %v71 = vld [vmem:[%s5 + $0x8] sm:$0xff]
      %v72 = vmul.f32 %v59, %v70
      %v73 = vmul.f32 %v59, %v71
      %s74 = scalar_lea.vmem %s6, 8
      %v75 = vld [vmem:[%s74] sm:$0xff]
      %77 = vset.pattern.permute.xlu0 0
      %78 = vperm.xlu0 %77, %v75
      %v79 = vpop.permute.xlu0 %78
      %v81 = vadd.f32 %v72, %v79
      %v82 = vadd.f32 %v73, %v79
      %s83 = sadd.f32 %s56, 0.125
      %v84 = vstv %s83
      %v85 = vmul.f32 %v84, %v57
      %v86 = vmul.f32 %v84, %v58
      %v87 = vadd.f32 %v85, %v66
      %v88 = vadd.f32 %v86, %v66
      %v89 = vmul.f32 %v84, %v70
      %v90 = vmul.f32 %v84, %v71
      %v91 = vadd.f32 %v89, %v79
      %v92 = vadd.f32 %v90, %v79
      %s93 = sadd.f32 %s56, 0.25
      %v94 = vstv %s93
      %v95 = vmul.f32 %v94, %v57
      %v96 = vmul.f32 %v94, %v58
      %v97 = vadd.f32 %v95, %v66
      %v98 = vadd.f32 %v96, %v66
      %v99 = vmul.f32 %v94, %v70
      %v100 = vmul.f32 %v94, %v71
      %v101 = vadd.f32 %v99, %v79
      %v102 = vadd.f32 %v100, %v79
      %v103 = vmul.f32 %v53, %v53
      %v104 = vmul.f32 %v54, %v54
      %105 = vmatprep.subr.mxu0 0.0
      %106 = vmatpush1.msra.mxu0 1.0
      %107 = vmatprep.subr.mxu0 0.0
      %108 = vmatpush1.msra.mxu0 1.0
      %109 = vmatprep.subr.mxu0 0.0
      %110 = vmatpush1.msra.mxu0 1.0
      %111 = vmatprep.subr.mxu0 0.0
      %112 = vmatpush1.msra.mxu0 1.0
      %113 = vmatprep.subr.mxu0 0.0
      %114 = vmatpush1.msra.mxu0 1.0
      %115 = vmatprep.subr.mxu0 0.0
      %116 = vmatpush1.msra.mxu0 1.0
      %117 = vmatprep.subr.mxu0 0.0
      %118 = vmatpush1.msra.mxu0 1.0
      %119 = vmatprep.subr.mxu0 0.0
      %120 = vmatpush1.msra.mxu0 1.0
      %121 = vmatprep.subr.mxu0 0.0
      %122 = vmatpush1.msra.mxu0 1.0
      %123 = vmatprep.subr.mxu0 0.0
      %124 = vmatpush1.msra.mxu0 1.0
      %125 = vmatprep.subr.mxu0 0.0
      %126 = vmatpush1.msra.mxu0 1.0
      %127 = vmatprep.subr.mxu0 0.0
      %128 = vmatpush1.msra.mxu0 1.0
      %129 = vmatprep.subr.mxu0 0.0
      %130 = vmatpush1.msra.mxu0 1.0
      %131 = vmatprep.subr.mxu0 0.0
      %132 = vmatpush1.msra.mxu0 1.0
      %133 = vmatprep.subr.mxu0 0.0
      %134 = vmatpush1.msra.mxu0 1.0
      %135 = vmatprep.subr.mxu0 0.0
      %136 = vmatpush1.msra.mxu0 1.0
      %137 = vmatprep.subr.mxu0 0.0
      %138 = vmatpush1.msra.mxu0 1.0
      %139 = vmatprep.subr.mxu0 0.0
      %140 = vmatpush1.msra.mxu0 1.0
      %141 = vmatprep.subr.mxu0 0.0
      %142 = vmatpush1.msra.mxu0 1.0
      %143 = vmatprep.subr.mxu0 0.0
      %144 = vmatpush1.msra.mxu0 1.0
      %145 = vmatprep.subr.mxu0 0.0
      %146 = vmatpush1.msra.mxu0 1.0
      %147 = vmatprep.subr.mxu0 0.0
      %148 = vmatpush1.msra.mxu0 1.0
      %149 = vmatprep.subr.mxu0 0.0
      %150 = vmatpush1.msra.mxu0 1.0
      %151 = vmatprep.subr.mxu0 0.0
      %152 = vmatpush1.msra.mxu0 1.0
      %153 = vmatprep.subr.mxu0 0.0
      %154 = vmatpush1.msra.mxu0 1.0
      %155 = vmatprep.subr.mxu0 0.0
      %156 = vmatpush1.msra.mxu0 1.0
      %157 = vmatprep.subr.mxu0 0.0
      %158 = vmatpush1.msra.mxu0 1.0
      %159 = vmatprep.subr.mxu0 0.0
      %160 = vmatpush1.msra.mxu0 1.0
      %161 = vmatprep.subr.mxu0 0.0
      %162 = vmatpush1.msra.mxu0 1.0
      %163 = vmatprep.subr.mxu0 0.0
      %164 = vmatpush1.msra.mxu0 1.0
      %165 = vmatprep.subr.mxu0 0.0
      %166 = vmatpush1.msra.mxu0 1.0
      %167 = vmatprep.subr.mxu0 0.0
      %168 = vmatpush1.msra.mxu0 1.0
      %169 = vmatprep.mubr.f32.mxu0 %v54
      %170 = vmatmul.mubr.f32.gmra.mrb[0].mxu0 %v53
      %v171 = vpop.f32.mrb[0].mxu0
      %v172 = vadd.f32 0.0, %v171
      %v173 = vpop.f32.mrb[0].mxu0
      %174 = vmatprep.mubr.f32.mxu0 %v104
      %175 = vmatmul.mubr.f32.gmra.mrb[0].mxu0 %v103
      %v176 = vpop.f32.mrb[0].mxu0
      %v177 = vadd.f32 0.0, %v176
      %v178 = vpop.f32.mrb[0].mxu0
      %179 = vdwg.mxu0
      %v180 = vmul.f32 %v172, 0.00390625
      %v181 = vmul.f32 %v177, 0.00390625
      %v182 = vmul.f32 %v180, %v180
      %v183 = vsub.f32 %v181, %v182
      %v184 = vmax.f32 %v183, 0.0
      %v185 = vld [vmem:[%s7] sm:$0xff]
      %v186 = vadd.f32 %v184, 1e-05
      %v187 = vrsqrt.pop %v186
      %v188 = vmul.f32 %v185, %v187
      %s189 = scalar_lea.vmem %s7, 8
      %v190 = vld [vmem:[%s189] sm:$0xff]
      %v191 = vmul.f32 %v180, %v188
      %v192 = vsub.f32 %v190, %v191
      %194 = vset.pattern.permute.xlu0 0
      %195 = vperm.xlu0 %194, %v188
      %v196 = vpop.permute.xlu0 %195
      %v198 = vmul.f32 %v53, %v196
      %v199 = vmul.f32 %v54, %v196
      %201 = vset.pattern.permute.xlu0 0
      %202 = vperm.xlu0 %201, %v192
      %v203 = vpop.permute.xlu0 %202
      %v205 = vadd.f32 %v198, %v203
      %v206 = vadd.f32 %v199, %v203
      %v207 = vmax.f32 %v205, 0.0
      %v208 = vmax.f32 %v206, 0.0
      %209 = vrot.lane.b32.xlu0 %v207, 17
      %v210 = vpop.permute.xlu0 %209
      %211 = vrot.lane.b32.xlu0 %v208, 17
      %v212 = vpop.permute.xlu0 %211
      %v213 = vlaneseq
      %v214 = vand.u32 %v213, 127
      %vm215 = vcmp.lt.s32.totalorder %v214, 17
      %v216 = vsel %vm215, %v210, %v212
      %v217 = vsel %vm215, %v212, %v210
      %v218 = vld [vmem:[#allocation2] sm:$0xff]
      %v219 = vld [vmem:[#allocation2 + $0x8] sm:$0xff]
      %v220 = vmul.f32 %v218, %v217
      %v221 = vmul.f32 %v219, %v216
      %222 = vrot.lane.b32.xlu0 %v207, 16
      %v223 = vpop.permute.xlu0 %222
      %224 = vrot.lane.b32.xlu0 %v208, 16
      %v225 = vpop.permute.xlu0 %224
      %vm226 = vcmp.lt.s32.totalorder %v214, 16
      %v227 = vsel %vm226, %v223, %v225
      %v228 = vsel %vm226, %v225, %v223
      %s229 = scalar_lea.vmem [#allocation2], 16
      %v230 = vld [vmem:[%s229] sm:$0xff]
      %v231 = vld [vmem:[%s229 + $0x8] sm:$0xff]
      %v232 = vmul.f32 %v230, %v228
      %v233 = vmul.f32 %v231, %v227
      %234 = vrot.lane.b32.xlu0 %v207, 15
      %v235 = vpop.permute.xlu0 %234
      %236 = vrot.lane.b32.xlu0 %v208, 15
      %v237 = vpop.permute.xlu0 %236
      %vm238 = vcmp.lt.s32.totalorder %v214, 15
      %v239 = vsel %vm238, %v235, %v237
      %v240 = vsel %vm238, %v237, %v235
      %s241 = scalar_lea.vmem [#allocation2], 32
      %v242 = vld [vmem:[%s241] sm:$0xff]
      %v243 = vld [vmem:[%s241 + $0x8] sm:$0xff]
      %v244 = vmul.f32 %v242, %v240
      %v245 = vmul.f32 %v243, %v239
      %246 = vrot.lane.b32.xlu0 %v207, 1
      %v247 = vpop.permute.xlu0 %246
      %248 = vrot.lane.b32.xlu0 %v208, 1
      %v249 = vpop.permute.xlu0 %248
      %vm250 = vcmp.lt.s32.totalorder %v214, 1
      %v251 = vsel %vm250, %v247, %v249
      %v252 = vsel %vm250, %v249, %v247
      %s253 = scalar_lea.vmem [#allocation2], 48
      %v254 = vld [vmem:[%s253] sm:$0xff]
      %v255 = vld [vmem:[%s253 + $0x8] sm:$0xff]
      %v256 = vmul.f32 %v254, %v252
      %v257 = vmul.f32 %v255, %v251
      %258 = vrot.lane.b32.xlu0 %v207, 127
      %v259 = vpop.permute.xlu0 %258
      %260 = vrot.lane.b32.xlu0 %v208, 127
      %v261 = vpop.permute.xlu0 %260
      %vm262 = vcmp.lt.s32.totalorder %v214, 127
      %v263 = vsel %vm262, %v259, %v261
      %v264 = vsel %vm262, %v261, %v259
      %s265 = scalar_lea.vmem [#allocation2], 80
      %v266 = vld [vmem:[%s265] sm:$0xff]
      %v267 = vld [vmem:[%s265 + $0x8] sm:$0xff]
      %v268 = vmul.f32 %v266, %v263
      %v269 = vmul.f32 %v267, %v264
      %270 = vrot.lane.b32.xlu0 %v207, 113
      %v271 = vpop.permute.xlu0 %270
      %272 = vrot.lane.b32.xlu0 %v208, 113
      %v273 = vpop.permute.xlu0 %272
      %vm274 = vcmp.lt.s32.totalorder %v214, 113
      %v275 = vsel %vm274, %v271, %v273
      %v276 = vsel %vm274, %v273, %v271
      %s277 = scalar_lea.vmem [#allocation2], 96
      %v278 = vld [vmem:[%s277] sm:$0xff]
      %v279 = vld [vmem:[%s277 + $0x8] sm:$0xff]
      %v280 = vmul.f32 %v278, %v275
      %v281 = vmul.f32 %v279, %v276
      %282 = vrot.lane.b32.xlu0 %v207, 112
      %v283 = vpop.permute.xlu0 %282
      %284 = vrot.lane.b32.xlu0 %v208, 112
      %v285 = vpop.permute.xlu0 %284
      %vm286 = vcmp.lt.s32.totalorder %v214, 112
      %v287 = vsel %vm286, %v283, %v285
      %v288 = vsel %vm286, %v285, %v283
      %s289 = scalar_lea.vmem [#allocation2], 112
      %v290 = vld [vmem:[%s289] sm:$0xff]
      %v291 = vld [vmem:[%s289 + $0x8] sm:$0xff]
      %v292 = vmul.f32 %v290, %v287
      %v293 = vmul.f32 %v291, %v288
      %294 = vrot.lane.b32.xlu0 %v207, 111
      %v295 = vpop.permute.xlu0 %294
      %296 = vrot.lane.b32.xlu0 %v208, 111
      %v297 = vpop.permute.xlu0 %296
      %vm298 = vcmp.lt.s32.totalorder %v214, 111
      %v299 = vsel %vm298, %v295, %v297
      %v300 = vsel %vm298, %v297, %v295
      %s301 = scalar_lea.vmem [#allocation2], 128
      %v302 = vld [vmem:[%s301] sm:$0xff]
      %v303 = vld [vmem:[%s301 + $0x8] sm:$0xff]
      %v304 = vmul.f32 %v302, %v299
      %v305 = vmul.f32 %v303, %v300
      %v306 = vpack.c.bf16 %v232, %v220
      %v307 = vpack.c.bf16 %v233, %v221
      %v308 = vpack.c.bf16 %v256, %v244
      %v309 = vpack.c.bf16 %v257, %v245
      %v310 = vpack.c.bf16 %v268, %v207
      %v311 = vpack.c.bf16 %v269, %v208
      %v312 = vpack.c.bf16 %v292, %v280
      %v313 = vpack.c.bf16 %v293, %v281
      %v314 = vpack.c.bf16 %v304, %v304
      %v315 = vpack.c.bf16 %v305, %v305
      %v316 = vld [vmem:[%s2] sm:$0xf]
      %vm317 = vcmask 588800
      %v319 = vsel %vm317, %v316, 0
      %vm321 = vcmask 1043456
      %v323 = vsel %vm321, %v314, 0
      %v326 = vsel %vm321, %v315, 0
      %328 = vmatprep.subr.bf16.mxu0 %v307
      %329 = vmatpush1.bf16.msra.mxu0 %v306
      %330 = vmatprep.subr.bf16.mxu0 %v309
      %331 = vmatpush1.bf16.msra.mxu0 %v308
      %332 = vmatprep.subr.bf16.mxu0 %v311
      %333 = vmatpush1.bf16.msra.mxu0 %v310
      %334 = vmatprep.subr.bf16.mxu0 %v313
      %335 = vmatpush1.bf16.msra.mxu0 %v312
      %336 = vmatprep.subr.bf16.mxu0 %v326
      %337 = vmatpush1.bf16.msra.mxu0 %v323
      %338 = vmatprep.subr.bf16.mxu0 0
      %339 = vmatpush1.bf16.msra.mxu0 0
      %340 = vmatprep.subr.bf16.mxu0 0
      %341 = vmatpush1.bf16.msra.mxu0 0
      %342 = vmatprep.subr.bf16.mxu0 0
      %343 = vmatpush1.bf16.msra.mxu0 0
      %344 = vmatprep.subr.bf16.mxu0 0
      %345 = vmatpush1.bf16.msra.mxu0 0
      %346 = vmatprep.subr.bf16.mxu0 0
      %347 = vmatpush1.bf16.msra.mxu0 0
      %348 = vmatprep.subr.bf16.mxu0 0
      %349 = vmatpush1.bf16.msra.mxu0 0
      %350 = vmatprep.subr.bf16.mxu0 0
      %351 = vmatpush1.bf16.msra.mxu0 0
      %352 = vmatprep.subr.bf16.mxu0 0
      %353 = vmatpush1.bf16.msra.mxu0 0
      %354 = vmatprep.subr.bf16.mxu0 0
      %355 = vmatpush1.bf16.msra.mxu0 0
      %356 = vmatprep.subr.bf16.mxu0 0
      %357 = vmatpush1.bf16.msra.mxu0 0
      %358 = vmatprep.subr.bf16.mxu0 0
      %359 = vmatpush1.bf16.msra.mxu0 0
      %360 = vmatprep.mubr.bf16.mxu0 0
      %361 = vmatmul.mubr.bf16.gmra.mrb[0].mxu0 %v319
      %v362 = vpop.f32.mrb[0].mxu0
      %v363 = vadd.f32 %v68, %v362
      %v364 = vpop.f32.mrb[0].mxu0
      %v365 = vadd.f32 %v69, %v364
      %v366 = vpop.f32.mrb[0].mxu0
      %v367 = vpop.f32.mrb[0].mxu0
      %368 = vdwg.mxu0
      %v369 = vmul.f32 %v363, %v363
      %v370 = vmul.f32 %v365, %v365
      %371 = vmatprep.subr.mxu0 0.0
      %372 = vmatpush1.msra.mxu0 1.0
      %373 = vmatprep.subr.mxu0 0.0
      %374 = vmatpush1.msra.mxu0 1.0
      %375 = vmatprep.subr.mxu0 0.0
      %376 = vmatpush1.msra.mxu0 1.0
      %377 = vmatprep.subr.mxu0 0.0
      %378 = vmatpush1.msra.mxu0 1.0
      %379 = vmatprep.subr.mxu0 0.0
      %380 = vmatpush1.msra.mxu0 1.0
      %381 = vmatprep.subr.mxu0 0.0
      %382 = vmatpush1.msra.mxu0 1.0
      %383 = vmatprep.subr.mxu0 0.0
      %384 = vmatpush1.msra.mxu0 1.0
      %385 = vmatprep.subr.mxu0 0.0
      %386 = vmatpush1.msra.mxu0 1.0
      %387 = vmatprep.subr.mxu0 0.0
      %388 = vmatpush1.msra.mxu0 1.0
      %389 = vmatprep.subr.mxu0 0.0
      %390 = vmatpush1.msra.mxu0 1.0
      %391 = vmatprep.subr.mxu0 0.0
      %392 = vmatpush1.msra.mxu0 1.0
      %393 = vmatprep.subr.mxu0 0.0
      %394 = vmatpush1.msra.mxu0 1.0
      %395 = vmatprep.subr.mxu0 0.0
      %396 = vmatpush1.msra.mxu0 1.0
      %397 = vmatprep.subr.mxu0 0.0
      %398 = vmatpush1.msra.mxu0 1.0
      %399 = vmatprep.subr.mxu0 0.0
      %400 = vmatpush1.msra.mxu0 1.0
      %401 = vmatprep.subr.mxu0 0.0
      %402 = vmatpush1.msra.mxu0 1.0
      %403 = vmatprep.subr.mxu0 0.0
      %404 = vmatpush1.msra.mxu0 1.0
      %405 = vmatprep.subr.mxu0 0.0
      %406 = vmatpush1.msra.mxu0 1.0
      %407 = vmatprep.subr.mxu0 0.0
      %408 = vmatpush1.msra.mxu0 1.0
      %409 = vmatprep.subr.mxu0 0.0
      %410 = vmatpush1.msra.mxu0 1.0
      %411 = vmatprep.subr.mxu0 0.0
      %412 = vmatpush1.msra.mxu0 1.0
      %413 = vmatprep.subr.mxu0 0.0
      %414 = vmatpush1.msra.mxu0 1.0
      %415 = vmatprep.subr.mxu0 0.0
      %416 = vmatpush1.msra.mxu0 1.0
      %417 = vmatprep.subr.mxu0 0.0
      %418 = vmatpush1.msra.mxu0 1.0
      %419 = vmatprep.subr.mxu0 0.0
      %420 = vmatpush1.msra.mxu0 1.0
      %421 = vmatprep.subr.mxu0 0.0
      %422 = vmatpush1.msra.mxu0 1.0
      %423 = vmatprep.subr.mxu0 0.0
      %424 = vmatpush1.msra.mxu0 1.0
      %425 = vmatprep.subr.mxu0 0.0
      %426 = vmatpush1.msra.mxu0 1.0
      %427 = vmatprep.subr.mxu0 0.0
      %428 = vmatpush1.msra.mxu0 1.0
      %429 = vmatprep.subr.mxu0 0.0
      %430 = vmatpush1.msra.mxu0 1.0
      %431 = vmatprep.subr.mxu0 0.0
      %432 = vmatpush1.msra.mxu0 1.0
      %433 = vmatprep.subr.mxu0 0.0
      %434 = vmatpush1.msra.mxu0 1.0
      %435 = vmatprep.mubr.f32.mxu0 %v365
      %436 = vmatmul.mubr.f32.gmra.mrb[0].mxu0 %v363
      %v437 = vpop.f32.mrb[0].mxu0
      %v438 = vadd.f32 0.0, %v437
      %v439 = vpop.f32.mrb[0].mxu0
      %440 = vmatprep.mubr.f32.mxu0 %v370
      %441 = vmatmul.mubr.f32.gmra.mrb[0].mxu0 %v369
      %v442 = vpop.f32.mrb[0].mxu0
      %v443 = vadd.f32 0.0, %v442
      %v444 = vpop.f32.mrb[0].mxu0
      %445 = vdwg.mxu0
      %v446 = vmul.f32 %v438, 0.00390625
      %v447 = vmul.f32 %v443, 0.00390625
      %v448 = vmul.f32 %v446, %v446
      %v449 = vsub.f32 %v447, %v448
      %v450 = vmax.f32 %v449, 0.0
      %s451 = scalar_lea.vmem %s7, 16
      %v452 = vld [vmem:[%s451] sm:$0xff]
      %v453 = vadd.f32 %v450, 1e-05
      %v454 = vrsqrt.pop %v453
      %v455 = vmul.f32 %v452, %v454
      %s456 = scalar_lea.vmem %s7, 24
      %v457 = vld [vmem:[%s456] sm:$0xff]
      %v458 = vmul.f32 %v446, %v455
      %v459 = vsub.f32 %v457, %v458
      %461 = vset.pattern.permute.xlu0 0
      %462 = vperm.xlu0 %461, %v455
      %v463 = vpop.permute.xlu0 %462
      %v465 = vmul.f32 %v363, %v463
      %v466 = vmul.f32 %v365, %v463
      %468 = vset.pattern.permute.xlu0 0
      %469 = vperm.xlu0 %468, %v459
      %v470 = vpop.permute.xlu0 %469
      %v472 = vadd.f32 %v465, %v470
      %v473 = vadd.f32 %v466, %v470
      %v474 = vmax.f32 %v472, 0.0
      %v475 = vmax.f32 %v473, 0.0
      %476 = vrot.lane.b32.xlu0 %v474, 17
      %v477 = vpop.permute.xlu0 %476
      %478 = vrot.lane.b32.xlu0 %v475, 17
      %v479 = vpop.permute.xlu0 %478
      %v480 = vsel %vm215, %v477, %v479
      %v481 = vsel %vm215, %v479, %v477
      %v482 = vmul.f32 %v218, %v481
      %v483 = vmul.f32 %v219, %v480
      %484 = vrot.lane.b32.xlu0 %v474, 16
      %v485 = vpop.permute.xlu0 %484
      %486 = vrot.lane.b32.xlu0 %v475, 16
      %v487 = vpop.permute.xlu0 %486
      %v488 = vsel %vm226, %v485, %v487
      %v489 = vsel %vm226, %v487, %v485
      %v490 = vmul.f32 %v230, %v489
      %v491 = vmul.f32 %v231, %v488
      %492 = vrot.lane.b32.xlu0 %v474, 15
      %v493 = vpop.permute.xlu0 %492
      %494 = vrot.lane.b32.xlu0 %v475, 15
      %v495 = vpop.permute.xlu0 %494
      %v496 = vsel %vm238, %v493, %v495
      %v497 = vsel %vm238, %v495, %v493
      %v498 = vmul.f32 %v242, %v497
      %v499 = vmul.f32 %v243, %v496
      %500 = vrot.lane.b32.xlu0 %v474, 1
      %v501 = vpop.permute.xlu0 %500
      %502 = vrot.lane.b32.xlu0 %v475, 1
      %v503 = vpop.permute.xlu0 %502
      %v504 = vsel %vm250, %v501, %v503
      %v505 = vsel %vm250, %v503, %v501
      %v506 = vmul.f32 %v254, %v505
      %v507 = vmul.f32 %v255, %v504
      %508 = vrot.lane.b32.xlu0 %v474, 127
      %v509 = vpop.permute.xlu0 %508
      %510 = vrot.lane.b32.xlu0 %v475, 127
      %v511 = vpop.permute.xlu0 %510
      %v512 = vsel %vm262, %v509, %v511
      %v513 = vsel %vm262, %v511, %v509
      %v514 = vmul.f32 %v266, %v512
      %v515 = vmul.f32 %v267, %v513
      %516 = vrot.lane.b32.xlu0 %v474, 113
      %v517 = vpop.permute.xlu0 %516
      %518 = vrot.lane.b32.xlu0 %v475, 113
      %v519 = vpop.permute.xlu0 %518
      %v520 = vsel %vm274, %v517, %v519
      %v521 = vsel %vm274, %v519, %v517
      %v522 = vmul.f32 %v278, %v520
      %v523 = vmul.f32 %v279, %v521
      %524 = vrot.lane.b32.xlu0 %v474, 112
      %v525 = vpop.permute.xlu0 %524
      %526 = vrot.lane.b32.xlu0 %v475, 112
      %v527 = vpop.permute.xlu0 %526
      %v528 = vsel %vm286, %v525, %v527
      %v529 = vsel %vm286, %v527, %v525
      %v530 = vmul.f32 %v290, %v528
      %v531 = vmul.f32 %v291, %v529
      %532 = vrot.lane.b32.xlu0 %v474, 111
      %v533 = vpop.permute.xlu0 %532
      %534 = vrot.lane.b32.xlu0 %v475, 111
      %v535 = vpop.permute.xlu0 %534
      %v536 = vsel %vm298, %v533, %v535
      %v537 = vsel %vm298, %v535, %v533
      %v538 = vmul.f32 %v302, %v536
      %v539 = vmul.f32 %v303, %v537
      %v540 = vpack.c.bf16 %v490, %v482
      %v541 = vpack.c.bf16 %v491, %v483
      %v542 = vpack.c.bf16 %v506, %v498
      %v543 = vpack.c.bf16 %v507, %v499
      %v544 = vpack.c.bf16 %v514, %v474
      %v545 = vpack.c.bf16 %v515, %v475
      %v546 = vpack.c.bf16 %v530, %v522
      %v547 = vpack.c.bf16 %v531, %v523
      %v548 = vpack.c.bf16 %v538, %v538
      %v549 = vpack.c.bf16 %v539, %v539
      %v550 = vld [vmem:[%s3] sm:$0xf]
      %v552 = vsel %vm317, %v550, 0
      %v555 = vsel %vm321, %v548, 0
      %v558 = vsel %vm321, %v549, 0
      %560 = vmatprep.subr.bf16.mxu0 %v541
      %561 = vmatpush1.bf16.msra.mxu0 %v540
      %562 = vmatprep.subr.bf16.mxu0 %v543
      %563 = vmatpush1.bf16.msra.mxu0 %v542
      %564 = vmatprep.subr.bf16.mxu0 %v545
      %565 = vmatpush1.bf16.msra.mxu0 %v544
      %566 = vmatprep.subr.bf16.mxu0 %v547
      %567 = vmatpush1.bf16.msra.mxu0 %v546
      %568 = vmatprep.subr.bf16.mxu0 %v558
      %569 = vmatpush1.bf16.msra.mxu0 %v555
      %570 = vmatprep.subr.bf16.mxu0 0
      %571 = vmatpush1.bf16.msra.mxu0 0
      %572 = vmatprep.subr.bf16.mxu0 0
      %573 = vmatpush1.bf16.msra.mxu0 0
      %574 = vmatprep.subr.bf16.mxu0 0
      %575 = vmatpush1.bf16.msra.mxu0 0
      %576 = vmatprep.subr.bf16.mxu0 0
      %577 = vmatpush1.bf16.msra.mxu0 0
      %578 = vmatprep.subr.bf16.mxu0 0
      %579 = vmatpush1.bf16.msra.mxu0 0
      %580 = vmatprep.subr.bf16.mxu0 0
      %581 = vmatpush1.bf16.msra.mxu0 0
      %582 = vmatprep.subr.bf16.mxu0 0
      %583 = vmatpush1.bf16.msra.mxu0 0
      %584 = vmatprep.subr.bf16.mxu0 0
      %585 = vmatpush1.bf16.msra.mxu0 0
      %586 = vmatprep.subr.bf16.mxu0 0
      %587 = vmatpush1.bf16.msra.mxu0 0
      %588 = vmatprep.subr.bf16.mxu0 0
      %589 = vmatpush1.bf16.msra.mxu0 0
      %590 = vmatprep.subr.bf16.mxu0 0
      %591 = vmatpush1.bf16.msra.mxu0 0
      %592 = vmatprep.mubr.bf16.mxu0 0
      %593 = vmatmul.mubr.bf16.gmra.mrb[0].mxu0 %v552
      %v594 = vpop.f32.mrb[0].mxu0
      %v595 = vadd.f32 %v81, %v594
      %v596 = vpop.f32.mrb[0].mxu0
      %v597 = vadd.f32 %v82, %v596
      %v598 = vpop.f32.mrb[0].mxu0
      %v599 = vpop.f32.mrb[0].mxu0
      %600 = vdwg.mxu0
      %v601 = vmul.f32 %v595, %v595
      %v602 = vmul.f32 %v597, %v597
      %603 = vmatprep.subr.mxu0 0.0
      %604 = vmatpush1.msra.mxu0 1.0
      %605 = vmatprep.subr.mxu0 0.0
      %606 = vmatpush1.msra.mxu0 1.0
      %607 = vmatprep.subr.mxu0 0.0
      %608 = vmatpush1.msra.mxu0 1.0
      %609 = vmatprep.subr.mxu0 0.0
      %610 = vmatpush1.msra.mxu0 1.0
      %611 = vmatprep.subr.mxu0 0.0
      %612 = vmatpush1.msra.mxu0 1.0
      %613 = vmatprep.subr.mxu0 0.0
      %614 = vmatpush1.msra.mxu0 1.0
      %615 = vmatprep.subr.mxu0 0.0
      %616 = vmatpush1.msra.mxu0 1.0
      %617 = vmatprep.subr.mxu0 0.0
      %618 = vmatpush1.msra.mxu0 1.0
      %619 = vmatprep.subr.mxu0 0.0
      %620 = vmatpush1.msra.mxu0 1.0
      %621 = vmatprep.subr.mxu0 0.0
      %622 = vmatpush1.msra.mxu0 1.0
      %623 = vmatprep.subr.mxu0 0.0
      %624 = vmatpush1.msra.mxu0 1.0
      %625 = vmatprep.subr.mxu0 0.0
      %626 = vmatpush1.msra.mxu0 1.0
      %627 = vmatprep.subr.mxu0 0.0
      %628 = vmatpush1.msra.mxu0 1.0
      %629 = vmatprep.subr.mxu0 0.0
      %630 = vmatpush1.msra.mxu0 1.0
      %631 = vmatprep.subr.mxu0 0.0
      %632 = vmatpush1.msra.mxu0 1.0
      %633 = vmatprep.subr.mxu0 0.0
      %634 = vmatpush1.msra.mxu0 1.0
      %635 = vmatprep.subr.mxu0 0.0
      %636 = vmatpush1.msra.mxu0 1.0
      %637 = vmatprep.subr.mxu0 0.0
      %638 = vmatpush1.msra.mxu0 1.0
      %639 = vmatprep.subr.mxu0 0.0
      %640 = vmatpush1.msra.mxu0 1.0
      %641 = vmatprep.subr.mxu0 0.0
      %642 = vmatpush1.msra.mxu0 1.0
      %643 = vmatprep.subr.mxu0 0.0
      %644 = vmatpush1.msra.mxu0 1.0
      %645 = vmatprep.subr.mxu0 0.0
      %646 = vmatpush1.msra.mxu0 1.0
      %647 = vmatprep.subr.mxu0 0.0
      %648 = vmatpush1.msra.mxu0 1.0
      %649 = vmatprep.subr.mxu0 0.0
      %650 = vmatpush1.msra.mxu0 1.0
      %651 = vmatprep.subr.mxu0 0.0
      %652 = vmatpush1.msra.mxu0 1.0
      %653 = vmatprep.subr.mxu0 0.0
      %654 = vmatpush1.msra.mxu0 1.0
      %655 = vmatprep.subr.mxu0 0.0
      %656 = vmatpush1.msra.mxu0 1.0
      %657 = vmatprep.subr.mxu0 0.0
      %658 = vmatpush1.msra.mxu0 1.0
      %659 = vmatprep.subr.mxu0 0.0
      %660 = vmatpush1.msra.mxu0 1.0
      %661 = vmatprep.subr.mxu0 0.0
      %662 = vmatpush1.msra.mxu0 1.0
      %663 = vmatprep.subr.mxu0 0.0
      %664 = vmatpush1.msra.mxu0 1.0
      %665 = vmatprep.subr.mxu0 0.0
      %666 = vmatpush1.msra.mxu0 1.0
      %667 = vmatprep.mubr.f32.mxu0 %v597
      %668 = vmatmul.mubr.f32.gmra.mrb[0].mxu0 %v595
      %v669 = vpop.f32.mrb[0].mxu0
      %v670 = vadd.f32 0.0, %v669
      %v671 = vpop.f32.mrb[0].mxu0
      %672 = vmatprep.mubr.f32.mxu0 %v602
      %673 = vmatmul.mubr.f32.gmra.mrb[0].mxu0 %v601
      %v674 = vpop.f32.mrb[0].mxu0
      %v675 = vadd.f32 0.0, %v674
      %v676 = vpop.f32.mrb[0].mxu0
      %677 = vdwg.mxu0
      %v678 = vmul.f32 %v670, 0.00390625
      %v679 = vmul.f32 %v675, 0.00390625
      %v680 = vmul.f32 %v678, %v678
      %v681 = vsub.f32 %v679, %v680
      %v682 = vmax.f32 %v681, 0.0
      %s683 = scalar_lea.vmem %s7, 32
      %v684 = vld [vmem:[%s683] sm:$0xff]
      %v685 = vadd.f32 %v682, 1e-05
      %v686 = vrsqrt.pop %v685
      %v687 = vmul.f32 %v684, %v686
      %s688 = scalar_lea.vmem %s7, 40
      %v689 = vld [vmem:[%s688] sm:$0xff]
      %v690 = vmul.f32 %v678, %v687
      %v691 = vsub.f32 %v689, %v690
      %693 = vset.pattern.permute.xlu0 0
      %694 = vperm.xlu0 %693, %v687
      %v695 = vpop.permute.xlu0 %694
      %v697 = vmul.f32 %v595, %v695
      %v698 = vmul.f32 %v597, %v695
      %700 = vset.pattern.permute.xlu0 0
      %701 = vperm.xlu0 %700, %v691
      %v702 = vpop.permute.xlu0 %701
      %v704 = vadd.f32 %v697, %v702
      %v705 = vadd.f32 %v698, %v702
      %v706 = vmul.f32 %v704, 0.125
      %v707 = vmul.f32 %v705, 0.125
      %v708 = vadd.f32 %v53, %v706
      %v709 = vadd.f32 %v54, %v707
      %v710 = vmul.f32 %v708, %v708
      %v711 = vmul.f32 %v709, %v709
      %712 = vmatprep.subr.mxu0 0.0
      %713 = vmatpush1.msra.mxu0 1.0
      %714 = vmatprep.subr.mxu0 0.0
      %715 = vmatpush1.msra.mxu0 1.0
      %716 = vmatprep.subr.mxu0 0.0
      %717 = vmatpush1.msra.mxu0 1.0
      %718 = vmatprep.subr.mxu0 0.0
      %719 = vmatpush1.msra.mxu0 1.0
      %720 = vmatprep.subr.mxu0 0.0
      %721 = vmatpush1.msra.mxu0 1.0
      %722 = vmatprep.subr.mxu0 0.0
      %723 = vmatpush1.msra.mxu0 1.0
      %724 = vmatprep.subr.mxu0 0.0
      %725 = vmatpush1.msra.mxu0 1.0
      %726 = vmatprep.subr.mxu0 0.0
      %727 = vmatpush1.msra.mxu0 1.0
      %728 = vmatprep.subr.mxu0 0.0
      %729 = vmatpush1.msra.mxu0 1.0
      %730 = vmatprep.subr.mxu0 0.0
      %731 = vmatpush1.msra.mxu0 1.0
      %732 = vmatprep.subr.mxu0 0.0
      %733 = vmatpush1.msra.mxu0 1.0
      %734 = vmatprep.subr.mxu0 0.0
      %735 = vmatpush1.msra.mxu0 1.0
      %736 = vmatprep.subr.mxu0 0.0
      %737 = vmatpush1.msra.mxu0 1.0
      %738 = vmatprep.subr.mxu0 0.0
      %739 = vmatpush1.msra.mxu0 1.0
      %740 = vmatprep.subr.mxu0 0.0
      %741 = vmatpush1.msra.mxu0 1.0
      %742 = vmatprep.subr.mxu0 0.0
      %743 = vmatpush1.msra.mxu0 1.0
      %744 = vmatprep.subr.mxu0 0.0
      %745 = vmatpush1.msra.mxu0 1.0
      %746 = vmatprep.subr.mxu0 0.0
      %747 = vmatpush1.msra.mxu0 1.0
      %748 = vmatprep.subr.mxu0 0.0
      %749 = vmatpush1.msra.mxu0 1.0
      %750 = vmatprep.subr.mxu0 0.0
      %751 = vmatpush1.msra.mxu0 1.0
      %752 = vmatprep.subr.mxu0 0.0
      %753 = vmatpush1.msra.mxu0 1.0
      %754 = vmatprep.subr.mxu0 0.0
      %755 = vmatpush1.msra.mxu0 1.0
      %756 = vmatprep.subr.mxu0 0.0
      %757 = vmatpush1.msra.mxu0 1.0
      %758 = vmatprep.subr.mxu0 0.0
      %759 = vmatpush1.msra.mxu0 1.0
      %760 = vmatprep.subr.mxu0 0.0
      %761 = vmatpush1.msra.mxu0 1.0
      %762 = vmatprep.subr.mxu0 0.0
      %763 = vmatpush1.msra.mxu0 1.0
      %764 = vmatprep.subr.mxu0 0.0
      %765 = vmatpush1.msra.mxu0 1.0
      %766 = vmatprep.subr.mxu0 0.0
      %767 = vmatpush1.msra.mxu0 1.0
      %768 = vmatprep.subr.mxu0 0.0
      %769 = vmatpush1.msra.mxu0 1.0
      %770 = vmatprep.subr.mxu0 0.0
      %771 = vmatpush1.msra.mxu0 1.0
      %772 = vmatprep.subr.mxu0 0.0
      %773 = vmatpush1.msra.mxu0 1.0
      %774 = vmatprep.subr.mxu0 0.0
      %775 = vmatpush1.msra.mxu0 1.0
      %776 = vmatprep.mubr.f32.mxu0 %v709
      %777 = vmatmul.mubr.f32.gmra.mrb[0].mxu0 %v708
      %v778 = vpop.f32.mrb[0].mxu0
      %v779 = vadd.f32 0.0, %v778
      %v780 = vpop.f32.mrb[0].mxu0
      %781 = vmatprep.mubr.f32.mxu0 %v711
      %782 = vmatmul.mubr.f32.gmra.mrb[0].mxu0 %v710
      %v783 = vpop.f32.mrb[0].mxu0
      %v784 = vadd.f32 0.0, %v783
      %v785 = vpop.f32.mrb[0].mxu0
      %786 = vdwg.mxu0
      %v787 = vmul.f32 %v779, 0.00390625
      %v788 = vmul.f32 %v784, 0.00390625
      %v789 = vmul.f32 %v787, %v787
      %v790 = vsub.f32 %v788, %v789
      %v791 = vmax.f32 %v790, 0.0
      %v792 = vadd.f32 %v791, 1e-05
      %v793 = vrsqrt.pop %v792
      %v794 = vmul.f32 %v185, %v793
      %v795 = vmul.f32 %v787, %v794
      %v796 = vsub.f32 %v190, %v795
      %798 = vset.pattern.permute.xlu0 0
      %799 = vperm.xlu0 %798, %v794
      %v800 = vpop.permute.xlu0 %799
      %v802 = vmul.f32 %v708, %v800
      %v803 = vmul.f32 %v709, %v800
      %805 = vset.pattern.permute.xlu0 0
      %806 = vperm.xlu0 %805, %v796
      %v807 = vpop.permute.xlu0 %806
      %v809 = vadd.f32 %v802, %v807
      %v810 = vadd.f32 %v803, %v807
      %v811 = vmax.f32 %v809, 0.0
      %v812 = vmax.f32 %v810, 0.0
      %813 = vrot.lane.b32.xlu0 %v811, 17
      %v814 = vpop.permute.xlu0 %813
      %815 = vrot.lane.b32.xlu0 %v812, 17
      %v816 = vpop.permute.xlu0 %815
      %v817 = vsel %vm215, %v814, %v816
      %v818 = vsel %vm215, %v816, %v814
      %v819 = vmul.f32 %v218, %v818
      %v820 = vmul.f32 %v219, %v817
      %821 = vrot.lane.b32.xlu0 %v811, 16
      %v822 = vpop.permute.xlu0 %821
      %823 = vrot.lane.b32.xlu0 %v812, 16
      %v824 = vpop.permute.xlu0 %823
      %v825 = vsel %vm226, %v822, %v824
      %v826 = vsel %vm226, %v824, %v822
      %v827 = vmul.f32 %v230, %v826
      %v828 = vmul.f32 %v231, %v825
      %829 = vrot.lane.b32.xlu0 %v811, 15
      %v830 = vpop.permute.xlu0 %829
      %831 = vrot.lane.b32.xlu0 %v812, 15
      %v832 = vpop.permute.xlu0 %831
      %v833 = vsel %vm238, %v830, %v832
      %v834 = vsel %vm238, %v832, %v830
      %v835 = vmul.f32 %v242, %v834
      %v836 = vmul.f32 %v243, %v833
      %837 = vrot.lane.b32.xlu0 %v811, 1
      %v838 = vpop.permute.xlu0 %837
      %839 = vrot.lane.b32.xlu0 %v812, 1
      %v840 = vpop.permute.xlu0 %839
      %v841 = vsel %vm250, %v838, %v840
      %v842 = vsel %vm250, %v840, %v838
      %v843 = vmul.f32 %v254, %v842
      %v844 = vmul.f32 %v255, %v841
      %845 = vrot.lane.b32.xlu0 %v811, 127
      %v846 = vpop.permute.xlu0 %845
      %847 = vrot.lane.b32.xlu0 %v812, 127
      %v848 = vpop.permute.xlu0 %847
      %v849 = vsel %vm262, %v846, %v848
      %v850 = vsel %vm262, %v848, %v846
      %v851 = vmul.f32 %v266, %v849
      %v852 = vmul.f32 %v267, %v850
      %853 = vrot.lane.b32.xlu0 %v811, 113
      %v854 = vpop.permute.xlu0 %853
      %855 = vrot.lane.b32.xlu0 %v812, 113
      %v856 = vpop.permute.xlu0 %855
      %v857 = vsel %vm274, %v854, %v856
      %v858 = vsel %vm274, %v856, %v854
      %v859 = vmul.f32 %v278, %v857
      %v860 = vmul.f32 %v279, %v858
      %861 = vrot.lane.b32.xlu0 %v811, 112
      %v862 = vpop.permute.xlu0 %861
      %863 = vrot.lane.b32.xlu0 %v812, 112
      %v864 = vpop.permute.xlu0 %863
      %v865 = vsel %vm286, %v862, %v864
      %v866 = vsel %vm286, %v864, %v862
      %v867 = vmul.f32 %v290, %v865
      %v868 = vmul.f32 %v291, %v866
      %869 = vrot.lane.b32.xlu0 %v811, 111
      %v870 = vpop.permute.xlu0 %869
      %871 = vrot.lane.b32.xlu0 %v812, 111
      %v872 = vpop.permute.xlu0 %871
      %v873 = vsel %vm298, %v870, %v872
      %v874 = vsel %vm298, %v872, %v870
      %v875 = vmul.f32 %v302, %v873
      %v876 = vmul.f32 %v303, %v874
      %v877 = vpack.c.bf16 %v827, %v819
      %v878 = vpack.c.bf16 %v828, %v820
      %v879 = vpack.c.bf16 %v843, %v835
      %v880 = vpack.c.bf16 %v844, %v836
      %v881 = vpack.c.bf16 %v851, %v811
      %v882 = vpack.c.bf16 %v852, %v812
      %v883 = vpack.c.bf16 %v867, %v859
      %v884 = vpack.c.bf16 %v868, %v860
      %v885 = vpack.c.bf16 %v875, %v875
      %v886 = vpack.c.bf16 %v876, %v876
      %v888 = vsel %vm321, %v885, 0
      %v891 = vsel %vm321, %v886, 0
      %893 = vmatprep.subr.bf16.mxu0 %v878
      %894 = vmatpush1.bf16.msra.mxu0 %v877
      %895 = vmatprep.subr.bf16.mxu0 %v880
      %896 = vmatpush1.bf16.msra.mxu0 %v879
      %897 = vmatprep.subr.bf16.mxu0 %v882
      %898 = vmatpush1.bf16.msra.mxu0 %v881
      %899 = vmatprep.subr.bf16.mxu0 %v884
      %900 = vmatpush1.bf16.msra.mxu0 %v883
      %901 = vmatprep.subr.bf16.mxu0 %v891
      %902 = vmatpush1.bf16.msra.mxu0 %v888
      %903 = vmatprep.subr.bf16.mxu0 0
      %904 = vmatpush1.bf16.msra.mxu0 0
      %905 = vmatprep.subr.bf16.mxu0 0
      %906 = vmatpush1.bf16.msra.mxu0 0
      %907 = vmatprep.subr.bf16.mxu0 0
      %908 = vmatpush1.bf16.msra.mxu0 0
      %909 = vmatprep.subr.bf16.mxu0 0
      %910 = vmatpush1.bf16.msra.mxu0 0
      %911 = vmatprep.subr.bf16.mxu0 0
      %912 = vmatpush1.bf16.msra.mxu0 0
      %913 = vmatprep.subr.bf16.mxu0 0
      %914 = vmatpush1.bf16.msra.mxu0 0
      %915 = vmatprep.subr.bf16.mxu0 0
      %916 = vmatpush1.bf16.msra.mxu0 0
      %917 = vmatprep.subr.bf16.mxu0 0
      %918 = vmatpush1.bf16.msra.mxu0 0
      %919 = vmatprep.subr.bf16.mxu0 0
      %920 = vmatpush1.bf16.msra.mxu0 0
      %921 = vmatprep.subr.bf16.mxu0 0
      %922 = vmatpush1.bf16.msra.mxu0 0
      %923 = vmatprep.subr.bf16.mxu0 0
      %924 = vmatpush1.bf16.msra.mxu0 0
      %925 = vmatprep.mubr.bf16.mxu0 0
      %926 = vmatmul.mubr.bf16.gmra.mrb[0].mxu0 %v319
      %v927 = vpop.f32.mrb[0].mxu0
      %v928 = vadd.f32 %v87, %v927
      %v929 = vpop.f32.mrb[0].mxu0
      %v930 = vadd.f32 %v88, %v929
      %v931 = vpop.f32.mrb[0].mxu0
      %v932 = vpop.f32.mrb[0].mxu0
      %933 = vdwg.mxu0
      %v934 = vmul.f32 %v928, %v928
      %v935 = vmul.f32 %v930, %v930
      %936 = vmatprep.subr.mxu0 0.0
      %937 = vmatpush1.msra.mxu0 1.0
      %938 = vmatprep.subr.mxu0 0.0
      %939 = vmatpush1.msra.mxu0 1.0
      %940 = vmatprep.subr.mxu0 0.0
      %941 = vmatpush1.msra.mxu0 1.0
      %942 = vmatprep.subr.mxu0 0.0
      %943 = vmatpush1.msra.mxu0 1.0
      %944 = vmatprep.subr.mxu0 0.0
      %945 = vmatpush1.msra.mxu0 1.0
      %946 = vmatprep.subr.mxu0 0.0
      %947 = vmatpush1.msra.mxu0 1.0
      %948 = vmatprep.subr.mxu0 0.0
      %949 = vmatpush1.msra.mxu0 1.0
      %950 = vmatprep.subr.mxu0 0.0
      %951 = vmatpush1.msra.mxu0 1.0
      %952 = vmatprep.subr.mxu0 0.0
      %953 = vmatpush1.msra.mxu0 1.0
      %954 = vmatprep.subr.mxu0 0.0
      %955 = vmatpush1.msra.mxu0 1.0
      %956 = vmatprep.subr.mxu0 0.0
      %957 = vmatpush1.msra.mxu0 1.0
      %958 = vmatprep.subr.mxu0 0.0
      %959 = vmatpush1.msra.mxu0 1.0
      %960 = vmatprep.subr.mxu0 0.0
      %961 = vmatpush1.msra.mxu0 1.0
      %962 = vmatprep.subr.mxu0 0.0
      %963 = vmatpush1.msra.mxu0 1.0
      %964 = vmatprep.subr.mxu0 0.0
      %965 = vmatpush1.msra.mxu0 1.0
      %966 = vmatprep.subr.mxu0 0.0
      %967 = vmatpush1.msra.mxu0 1.0
      %968 = vmatprep.subr.mxu0 0.0
      %969 = vmatpush1.msra.mxu0 1.0
      %970 = vmatprep.subr.mxu0 0.0
      %971 = vmatpush1.msra.mxu0 1.0
      %972 = vmatprep.subr.mxu0 0.0
      %973 = vmatpush1.msra.mxu0 1.0
      %974 = vmatprep.subr.mxu0 0.0
      %975 = vmatpush1.msra.mxu0 1.0
      %976 = vmatprep.subr.mxu0 0.0
      %977 = vmatpush1.msra.mxu0 1.0
      %978 = vmatprep.subr.mxu0 0.0
      %979 = vmatpush1.msra.mxu0 1.0
      %980 = vmatprep.subr.mxu0 0.0
      %981 = vmatpush1.msra.mxu0 1.0
      %982 = vmatprep.subr.mxu0 0.0
      %983 = vmatpush1.msra.mxu0 1.0
      %984 = vmatprep.subr.mxu0 0.0
      %985 = vmatpush1.msra.mxu0 1.0
      %986 = vmatprep.subr.mxu0 0.0
      %987 = vmatpush1.msra.mxu0 1.0
      %988 = vmatprep.subr.mxu0 0.0
      %989 = vmatpush1.msra.mxu0 1.0
      %990 = vmatprep.subr.mxu0 0.0
      %991 = vmatpush1.msra.mxu0 1.0
      %992 = vmatprep.subr.mxu0 0.0
      %993 = vmatpush1.msra.mxu0 1.0
      %994 = vmatprep.subr.mxu0 0.0
      %995 = vmatpush1.msra.mxu0 1.0
      %996 = vmatprep.subr.mxu0 0.0
      %997 = vmatpush1.msra.mxu0 1.0
      %998 = vmatprep.subr.mxu0 0.0
      %999 = vmatpush1.msra.mxu0 1.0
      %1000 = vmatprep.mubr.f32.mxu0 %v930
      %1001 = vmatmul.mubr.f32.gmra.mrb[0].mxu0 %v928
      %v1002 = vpop.f32.mrb[0].mxu0
      %v1003 = vadd.f32 0.0, %v1002
      %v1004 = vpop.f32.mrb[0].mxu0
      %1005 = vmatprep.mubr.f32.mxu0 %v935
      %1006 = vmatmul.mubr.f32.gmra.mrb[0].mxu0 %v934
      %v1007 = vpop.f32.mrb[0].mxu0
      %v1008 = vadd.f32 0.0, %v1007
      %v1009 = vpop.f32.mrb[0].mxu0
      %1010 = vdwg.mxu0
      %v1011 = vmul.f32 %v1003, 0.00390625
      %v1012 = vmul.f32 %v1008, 0.00390625
      %v1013 = vmul.f32 %v1011, %v1011
      %v1014 = vsub.f32 %v1012, %v1013
      %v1015 = vmax.f32 %v1014, 0.0
      %v1016 = vadd.f32 %v1015, 1e-05
      %v1017 = vrsqrt.pop %v1016
      %v1018 = vmul.f32 %v452, %v1017
      %v1019 = vmul.f32 %v1011, %v1018
      %v1020 = vsub.f32 %v457, %v1019
      %1022 = vset.pattern.permute.xlu0 0
      %1023 = vperm.xlu0 %1022, %v1018
      %v1024 = vpop.permute.xlu0 %1023
      %v1026 = vmul.f32 %v928, %v1024
      %v1027 = vmul.f32 %v930, %v1024
      %1029 = vset.pattern.permute.xlu0 0
      %1030 = vperm.xlu0 %1029, %v1020
      %v1031 = vpop.permute.xlu0 %1030
      %v1033 = vadd.f32 %v1026, %v1031
      %v1034 = vadd.f32 %v1027, %v1031
      %v1035 = vmax.f32 %v1033, 0.0
      %v1036 = vmax.f32 %v1034, 0.0
      %1037 = vrot.lane.b32.xlu0 %v1035, 17
      %v1038 = vpop.permute.xlu0 %1037
      %1039 = vrot.lane.b32.xlu0 %v1036, 17
      %v1040 = vpop.permute.xlu0 %1039
      %v1041 = vsel %vm215, %v1038, %v1040
      %v1042 = vsel %vm215, %v1040, %v1038
      %v1043 = vmul.f32 %v218, %v1042
      %v1044 = vmul.f32 %v219, %v1041
      %1045 = vrot.lane.b32.xlu0 %v1035, 16
      %v1046 = vpop.permute.xlu0 %1045
      %1047 = vrot.lane.b32.xlu0 %v1036, 16
      %v1048 = vpop.permute.xlu0 %1047
      %v1049 = vsel %vm226, %v1046, %v1048
      %v1050 = vsel %vm226, %v1048, %v1046
      %v1051 = vmul.f32 %v230, %v1050
      %v1052 = vmul.f32 %v231, %v1049
      %1053 = vrot.lane.b32.xlu0 %v1035, 15
      %v1054 = vpop.permute.xlu0 %1053
      %1055 = vrot.lane.b32.xlu0 %v1036, 15
      %v1056 = vpop.permute.xlu0 %1055
      %v1057 = vsel %vm238, %v1054, %v1056
      %v1058 = vsel %vm238, %v1056, %v1054
      %v1059 = vmul.f32 %v242, %v1058
      %v1060 = vmul.f32 %v243, %v1057
      %1061 = vrot.lane.b32.xlu0 %v1035, 1
      %v1062 = vpop.permute.xlu0 %1061
      %1063 = vrot.lane.b32.xlu0 %v1036, 1
      %v1064 = vpop.permute.xlu0 %1063
      %v1065 = vsel %vm250, %v1062, %v1064
      %v1066 = vsel %vm250, %v1064, %v1062
      %v1067 = vmul.f32 %v254, %v1066
      %v1068 = vmul.f32 %v255, %v1065
      %1069 = vrot.lane.b32.xlu0 %v1035, 127
      %v1070 = vpop.permute.xlu0 %1069
      %1071 = vrot.lane.b32.xlu0 %v1036, 127
      %v1072 = vpop.permute.xlu0 %1071
      %v1073 = vsel %vm262, %v1070, %v1072
      %v1074 = vsel %vm262, %v1072, %v1070
      %v1075 = vmul.f32 %v266, %v1073
      %v1076 = vmul.f32 %v267, %v1074
      %1077 = vrot.lane.b32.xlu0 %v1035, 113
      %v1078 = vpop.permute.xlu0 %1077
      %1079 = vrot.lane.b32.xlu0 %v1036, 113
      %v1080 = vpop.permute.xlu0 %1079
      %v1081 = vsel %vm274, %v1078, %v1080
      %v1082 = vsel %vm274, %v1080, %v1078
      %v1083 = vmul.f32 %v278, %v1081
      %v1084 = vmul.f32 %v279, %v1082
      %1085 = vrot.lane.b32.xlu0 %v1035, 112
      %v1086 = vpop.permute.xlu0 %1085
      %1087 = vrot.lane.b32.xlu0 %v1036, 112
      %v1088 = vpop.permute.xlu0 %1087
      %v1089 = vsel %vm286, %v1086, %v1088
      %v1090 = vsel %vm286, %v1088, %v1086
      %v1091 = vmul.f32 %v290, %v1089
      %v1092 = vmul.f32 %v291, %v1090
      %1093 = vrot.lane.b32.xlu0 %v1035, 111
      %v1094 = vpop.permute.xlu0 %1093
      %1095 = vrot.lane.b32.xlu0 %v1036, 111
      %v1096 = vpop.permute.xlu0 %1095
      %v1097 = vsel %vm298, %v1094, %v1096
      %v1098 = vsel %vm298, %v1096, %v1094
      %v1099 = vmul.f32 %v302, %v1097
      %v1100 = vmul.f32 %v303, %v1098
      %v1101 = vpack.c.bf16 %v1051, %v1043
      %v1102 = vpack.c.bf16 %v1052, %v1044
      %v1103 = vpack.c.bf16 %v1067, %v1059
      %v1104 = vpack.c.bf16 %v1068, %v1060
      %v1105 = vpack.c.bf16 %v1075, %v1035
      %v1106 = vpack.c.bf16 %v1076, %v1036
      %v1107 = vpack.c.bf16 %v1091, %v1083
      %v1108 = vpack.c.bf16 %v1092, %v1084
      %v1109 = vpack.c.bf16 %v1099, %v1099
      %v1110 = vpack.c.bf16 %v1100, %v1100
      %v1112 = vsel %vm321, %v1109, 0
      %v1115 = vsel %vm321, %v1110, 0
      %1117 = vmatprep.subr.bf16.mxu0 %v1102
      %1118 = vmatpush1.bf16.msra.mxu0 %v1101
      %1119 = vmatprep.subr.bf16.mxu0 %v1104
      %1120 = vmatpush1.bf16.msra.mxu0 %v1103
      %1121 = vmatprep.subr.bf16.mxu0 %v1106
      %1122 = vmatpush1.bf16.msra.mxu0 %v1105
      %1123 = vmatprep.subr.bf16.mxu0 %v1108
      %1124 = vmatpush1.bf16.msra.mxu0 %v1107
      %1125 = vmatprep.subr.bf16.mxu0 %v1115
      %1126 = vmatpush1.bf16.msra.mxu0 %v1112
      %1127 = vmatprep.subr.bf16.mxu0 0
      %1128 = vmatpush1.bf16.msra.mxu0 0
      %1129 = vmatprep.subr.bf16.mxu0 0
      %1130 = vmatpush1.bf16.msra.mxu0 0
      %1131 = vmatprep.subr.bf16.mxu0 0
      %1132 = vmatpush1.bf16.msra.mxu0 0
      %1133 = vmatprep.subr.bf16.mxu0 0
      %1134 = vmatpush1.bf16.msra.mxu0 0
      %1135 = vmatprep.subr.bf16.mxu0 0
      %1136 = vmatpush1.bf16.msra.mxu0 0
      %1137 = vmatprep.subr.bf16.mxu0 0
      %1138 = vmatpush1.bf16.msra.mxu0 0
      %1139 = vmatprep.subr.bf16.mxu0 0
      %1140 = vmatpush1.bf16.msra.mxu0 0
      %1141 = vmatprep.subr.bf16.mxu0 0
      %1142 = vmatpush1.bf16.msra.mxu0 0
      %1143 = vmatprep.subr.bf16.mxu0 0
      %1144 = vmatpush1.bf16.msra.mxu0 0
      %1145 = vmatprep.subr.bf16.mxu0 0
      %1146 = vmatpush1.bf16.msra.mxu0 0
      %1147 = vmatprep.subr.bf16.mxu0 0
      %1148 = vmatpush1.bf16.msra.mxu0 0
      %1149 = vmatprep.mubr.bf16.mxu0 0
      %1150 = vmatmul.mubr.bf16.gmra.mrb[0].mxu0 %v552
      %v1151 = vpop.f32.mrb[0].mxu0
      %v1152 = vadd.f32 %v91, %v1151
      %v1153 = vpop.f32.mrb[0].mxu0
      %v1154 = vadd.f32 %v92, %v1153
      %v1155 = vpop.f32.mrb[0].mxu0
      %v1156 = vpop.f32.mrb[0].mxu0
      %1157 = vdwg.mxu0
      %v1158 = vmul.f32 %v1152, %v1152
      %v1159 = vmul.f32 %v1154, %v1154
      %1160 = vmatprep.subr.mxu0 0.0
      %1161 = vmatpush1.msra.mxu0 1.0
      %1162 = vmatprep.subr.mxu0 0.0
      %1163 = vmatpush1.msra.mxu0 1.0
      %1164 = vmatprep.subr.mxu0 0.0
      %1165 = vmatpush1.msra.mxu0 1.0
      %1166 = vmatprep.subr.mxu0 0.0
      %1167 = vmatpush1.msra.mxu0 1.0
      %1168 = vmatprep.subr.mxu0 0.0
      %1169 = vmatpush1.msra.mxu0 1.0
      %1170 = vmatprep.subr.mxu0 0.0
      %1171 = vmatpush1.msra.mxu0 1.0
      %1172 = vmatprep.subr.mxu0 0.0
      %1173 = vmatpush1.msra.mxu0 1.0
      %1174 = vmatprep.subr.mxu0 0.0
      %1175 = vmatpush1.msra.mxu0 1.0
      %1176 = vmatprep.subr.mxu0 0.0
      %1177 = vmatpush1.msra.mxu0 1.0
      %1178 = vmatprep.subr.mxu0 0.0
      %1179 = vmatpush1.msra.mxu0 1.0
      %1180 = vmatprep.subr.mxu0 0.0
      %1181 = vmatpush1.msra.mxu0 1.0
      %1182 = vmatprep.subr.mxu0 0.0
      %1183 = vmatpush1.msra.mxu0 1.0
      %1184 = vmatprep.subr.mxu0 0.0
      %1185 = vmatpush1.msra.mxu0 1.0
      %1186 = vmatprep.subr.mxu0 0.0
      %1187 = vmatpush1.msra.mxu0 1.0
      %1188 = vmatprep.subr.mxu0 0.0
      %1189 = vmatpush1.msra.mxu0 1.0
      %1190 = vmatprep.subr.mxu0 0.0
      %1191 = vmatpush1.msra.mxu0 1.0
      %1192 = vmatprep.subr.mxu0 0.0
      %1193 = vmatpush1.msra.mxu0 1.0
      %1194 = vmatprep.subr.mxu0 0.0
      %1195 = vmatpush1.msra.mxu0 1.0
      %1196 = vmatprep.subr.mxu0 0.0
      %1197 = vmatpush1.msra.mxu0 1.0
      %1198 = vmatprep.subr.mxu0 0.0
      %1199 = vmatpush1.msra.mxu0 1.0
      %1200 = vmatprep.subr.mxu0 0.0
      %1201 = vmatpush1.msra.mxu0 1.0
      %1202 = vmatprep.subr.mxu0 0.0
      %1203 = vmatpush1.msra.mxu0 1.0
      %1204 = vmatprep.subr.mxu0 0.0
      %1205 = vmatpush1.msra.mxu0 1.0
      %1206 = vmatprep.subr.mxu0 0.0
      %1207 = vmatpush1.msra.mxu0 1.0
      %1208 = vmatprep.subr.mxu0 0.0
      %1209 = vmatpush1.msra.mxu0 1.0
      %1210 = vmatprep.subr.mxu0 0.0
      %1211 = vmatpush1.msra.mxu0 1.0
      %1212 = vmatprep.subr.mxu0 0.0
      %1213 = vmatpush1.msra.mxu0 1.0
      %1214 = vmatprep.subr.mxu0 0.0
      %1215 = vmatpush1.msra.mxu0 1.0
      %1216 = vmatprep.subr.mxu0 0.0
      %1217 = vmatpush1.msra.mxu0 1.0
      %1218 = vmatprep.subr.mxu0 0.0
      %1219 = vmatpush1.msra.mxu0 1.0
      %1220 = vmatprep.subr.mxu0 0.0
      %1221 = vmatpush1.msra.mxu0 1.0
      %1222 = vmatprep.subr.mxu0 0.0
      %1223 = vmatpush1.msra.mxu0 1.0
      %1224 = vmatprep.mubr.f32.mxu0 %v1154
      %1225 = vmatmul.mubr.f32.gmra.mrb[0].mxu0 %v1152
      %v1226 = vpop.f32.mrb[0].mxu0
      %v1227 = vadd.f32 0.0, %v1226
      %v1228 = vpop.f32.mrb[0].mxu0
      %1229 = vmatprep.mubr.f32.mxu0 %v1159
      %1230 = vmatmul.mubr.f32.gmra.mrb[0].mxu0 %v1158
      %v1231 = vpop.f32.mrb[0].mxu0
      %v1232 = vadd.f32 0.0, %v1231
      %v1233 = vpop.f32.mrb[0].mxu0
      %1234 = vdwg.mxu0
      %v1235 = vmul.f32 %v1227, 0.00390625
      %v1236 = vmul.f32 %v1232, 0.00390625
      %v1237 = vmul.f32 %v1235, %v1235
      %v1238 = vsub.f32 %v1236, %v1237
      %v1239 = vmax.f32 %v1238, 0.0
      %v1240 = vadd.f32 %v1239, 1e-05
      %v1241 = vrsqrt.pop %v1240
      %v1242 = vmul.f32 %v684, %v1241
      %v1243 = vmul.f32 %v1235, %v1242
      %v1244 = vsub.f32 %v689, %v1243
      %1246 = vset.pattern.permute.xlu0 0
      %1247 = vperm.xlu0 %1246, %v1242
      %v1248 = vpop.permute.xlu0 %1247
      %v1250 = vmul.f32 %v1152, %v1248
      %v1251 = vmul.f32 %v1154, %v1248
      %1253 = vset.pattern.permute.xlu0 0
      %1254 = vperm.xlu0 %1253, %v1244
      %v1255 = vpop.permute.xlu0 %1254
      %v1257 = vadd.f32 %v1250, %v1255
      %v1258 = vadd.f32 %v1251, %v1255
      %v1259 = vmul.f32 %v1257, 0.125
      %v1260 = vmul.f32 %v1258, 0.125
      %v1261 = vadd.f32 %v53, %v1259
      %v1262 = vadd.f32 %v54, %v1260
      %v1263 = vmul.f32 %v1261, %v1261
      %v1264 = vmul.f32 %v1262, %v1262
      %1265 = vmatprep.subr.mxu0 0.0
      %1266 = vmatpush1.msra.mxu0 1.0
      %1267 = vmatprep.subr.mxu0 0.0
      %1268 = vmatpush1.msra.mxu0 1.0
      %1269 = vmatprep.subr.mxu0 0.0
      %1270 = vmatpush1.msra.mxu0 1.0
      %1271 = vmatprep.subr.mxu0 0.0
      %1272 = vmatpush1.msra.mxu0 1.0
      %1273 = vmatprep.subr.mxu0 0.0
      %1274 = vmatpush1.msra.mxu0 1.0
      %1275 = vmatprep.subr.mxu0 0.0
      %1276 = vmatpush1.msra.mxu0 1.0
      %1277 = vmatprep.subr.mxu0 0.0
      %1278 = vmatpush1.msra.mxu0 1.0
      %1279 = vmatprep.subr.mxu0 0.0
      %1280 = vmatpush1.msra.mxu0 1.0
      %1281 = vmatprep.subr.mxu0 0.0
      %1282 = vmatpush1.msra.mxu0 1.0
      %1283 = vmatprep.subr.mxu0 0.0
      %1284 = vmatpush1.msra.mxu0 1.0
      %1285 = vmatprep.subr.mxu0 0.0
      %1286 = vmatpush1.msra.mxu0 1.0
      %1287 = vmatprep.subr.mxu0 0.0
      %1288 = vmatpush1.msra.mxu0 1.0
      %1289 = vmatprep.subr.mxu0 0.0
      %1290 = vmatpush1.msra.mxu0 1.0
      %1291 = vmatprep.subr.mxu0 0.0
      %1292 = vmatpush1.msra.mxu0 1.0
      %1293 = vmatprep.subr.mxu0 0.0
      %1294 = vmatpush1.msra.mxu0 1.0
      %1295 = vmatprep.subr.mxu0 0.0
      %1296 = vmatpush1.msra.mxu0 1.0
      %1297 = vmatprep.subr.mxu0 0.0
      %1298 = vmatpush1.msra.mxu0 1.0
      %1299 = vmatprep.subr.mxu0 0.0
      %1300 = vmatpush1.msra.mxu0 1.0
      %1301 = vmatprep.subr.mxu0 0.0
      %1302 = vmatpush1.msra.mxu0 1.0
      %1303 = vmatprep.subr.mxu0 0.0
      %1304 = vmatpush1.msra.mxu0 1.0
      %1305 = vmatprep.subr.mxu0 0.0
      %1306 = vmatpush1.msra.mxu0 1.0
      %1307 = vmatprep.subr.mxu0 0.0
      %1308 = vmatpush1.msra.mxu0 1.0
      %1309 = vmatprep.subr.mxu0 0.0
      %1310 = vmatpush1.msra.mxu0 1.0
      %1311 = vmatprep.subr.mxu0 0.0
      %1312 = vmatpush1.msra.mxu0 1.0
      %1313 = vmatprep.subr.mxu0 0.0
      %1314 = vmatpush1.msra.mxu0 1.0
      %1315 = vmatprep.subr.mxu0 0.0
      %1316 = vmatpush1.msra.mxu0 1.0
      %1317 = vmatprep.subr.mxu0 0.0
      %1318 = vmatpush1.msra.mxu0 1.0
      %1319 = vmatprep.subr.mxu0 0.0
      %1320 = vmatpush1.msra.mxu0 1.0
      %1321 = vmatprep.subr.mxu0 0.0
      %1322 = vmatpush1.msra.mxu0 1.0
      %1323 = vmatprep.subr.mxu0 0.0
      %1324 = vmatpush1.msra.mxu0 1.0
      %1325 = vmatprep.subr.mxu0 0.0
      %1326 = vmatpush1.msra.mxu0 1.0
      %1327 = vmatprep.subr.mxu0 0.0
      %1328 = vmatpush1.msra.mxu0 1.0
      %1329 = vmatprep.mubr.f32.mxu0 %v1262
      %1330 = vmatmul.mubr.f32.gmra.mrb[0].mxu0 %v1261
      %v1331 = vpop.f32.mrb[0].mxu0
      %v1332 = vadd.f32 0.0, %v1331
      %v1333 = vpop.f32.mrb[0].mxu0
      %1334 = vmatprep.mubr.f32.mxu0 %v1264
      %1335 = vmatmul.mubr.f32.gmra.mrb[0].mxu0 %v1263
      %v1336 = vpop.f32.mrb[0].mxu0
      %v1337 = vadd.f32 0.0, %v1336
      %v1338 = vpop.f32.mrb[0].mxu0
      %1339 = vdwg.mxu0
      %v1340 = vmul.f32 %v1332, 0.00390625
      %v1341 = vmul.f32 %v1337, 0.00390625
      %v1342 = vmul.f32 %v1340, %v1340
      %v1343 = vsub.f32 %v1341, %v1342
      %v1344 = vmax.f32 %v1343, 0.0
      %v1345 = vadd.f32 %v1344, 1e-05
      %v1346 = vrsqrt.pop %v1345
      %v1347 = vmul.f32 %v185, %v1346
      %v1348 = vmul.f32 %v1340, %v1347
      %v1349 = vsub.f32 %v190, %v1348
      %1351 = vset.pattern.permute.xlu0 0
      %1352 = vperm.xlu0 %1351, %v1347
      %v1353 = vpop.permute.xlu0 %1352
      %v1355 = vmul.f32 %v1261, %v1353
      %v1356 = vmul.f32 %v1262, %v1353
      %1358 = vset.pattern.permute.xlu0 0
      %1359 = vperm.xlu0 %1358, %v1349
      %v1360 = vpop.permute.xlu0 %1359
      %v1362 = vadd.f32 %v1355, %v1360
      %v1363 = vadd.f32 %v1356, %v1360
      %v1364 = vmax.f32 %v1362, 0.0
      %v1365 = vmax.f32 %v1363, 0.0
      %1366 = vrot.lane.b32.xlu0 %v1364, 17
      %v1367 = vpop.permute.xlu0 %1366
      %1368 = vrot.lane.b32.xlu0 %v1365, 17
      %v1369 = vpop.permute.xlu0 %1368
      %v1370 = vsel %vm215, %v1367, %v1369
      %v1371 = vsel %vm215, %v1369, %v1367
      %v1372 = vmul.f32 %v218, %v1371
      %v1373 = vmul.f32 %v219, %v1370
      %1374 = vrot.lane.b32.xlu0 %v1364, 16
      %v1375 = vpop.permute.xlu0 %1374
      %1376 = vrot.lane.b32.xlu0 %v1365, 16
      %v1377 = vpop.permute.xlu0 %1376
      %v1378 = vsel %vm226, %v1375, %v1377
      %v1379 = vsel %vm226, %v1377, %v1375
      %v1380 = vmul.f32 %v230, %v1379
      %v1381 = vmul.f32 %v231, %v1378
      %1382 = vrot.lane.b32.xlu0 %v1364, 15
      %v1383 = vpop.permute.xlu0 %1382
      %1384 = vrot.lane.b32.xlu0 %v1365, 15
      %v1385 = vpop.permute.xlu0 %1384
      %v1386 = vsel %vm238, %v1383, %v1385
      %v1387 = vsel %vm238, %v1385, %v1383
      %v1388 = vmul.f32 %v242, %v1387
      %v1389 = vmul.f32 %v243, %v1386
      %1390 = vrot.lane.b32.xlu0 %v1364, 1
      %v1391 = vpop.permute.xlu0 %1390
      %1392 = vrot.lane.b32.xlu0 %v1365, 1
      %v1393 = vpop.permute.xlu0 %1392
      %v1394 = vsel %vm250, %v1391, %v1393
      %v1395 = vsel %vm250, %v1393, %v1391
      %v1396 = vmul.f32 %v254, %v1395
      %v1397 = vmul.f32 %v255, %v1394
      %1398 = vrot.lane.b32.xlu0 %v1364, 127
      %v1399 = vpop.permute.xlu0 %1398
      %1400 = vrot.lane.b32.xlu0 %v1365, 127
      %v1401 = vpop.permute.xlu0 %1400
      %v1402 = vsel %vm262, %v1399, %v1401
      %v1403 = vsel %vm262, %v1401, %v1399
      %v1404 = vmul.f32 %v266, %v1402
      %v1405 = vmul.f32 %v267, %v1403
      %1406 = vrot.lane.b32.xlu0 %v1364, 113
      %v1407 = vpop.permute.xlu0 %1406
      %1408 = vrot.lane.b32.xlu0 %v1365, 113
      %v1409 = vpop.permute.xlu0 %1408
      %v1410 = vsel %vm274, %v1407, %v1409
      %v1411 = vsel %vm274, %v1409, %v1407
      %v1412 = vmul.f32 %v278, %v1410
      %v1413 = vmul.f32 %v279, %v1411
      %1414 = vrot.lane.b32.xlu0 %v1364, 112
      %v1415 = vpop.permute.xlu0 %1414
      %1416 = vrot.lane.b32.xlu0 %v1365, 112
      %v1417 = vpop.permute.xlu0 %1416
      %v1418 = vsel %vm286, %v1415, %v1417
      %v1419 = vsel %vm286, %v1417, %v1415
      %v1420 = vmul.f32 %v290, %v1418
      %v1421 = vmul.f32 %v291, %v1419
      %1422 = vrot.lane.b32.xlu0 %v1364, 111
      %v1423 = vpop.permute.xlu0 %1422
      %1424 = vrot.lane.b32.xlu0 %v1365, 111
      %v1425 = vpop.permute.xlu0 %1424
      %v1426 = vsel %vm298, %v1423, %v1425
      %v1427 = vsel %vm298, %v1425, %v1423
      %v1428 = vmul.f32 %v302, %v1426
      %v1429 = vmul.f32 %v303, %v1427
      %v1430 = vpack.c.bf16 %v1380, %v1372
      %v1431 = vpack.c.bf16 %v1381, %v1373
      %v1432 = vpack.c.bf16 %v1396, %v1388
      %v1433 = vpack.c.bf16 %v1397, %v1389
      %v1434 = vpack.c.bf16 %v1404, %v1364
      %v1435 = vpack.c.bf16 %v1405, %v1365
      %v1436 = vpack.c.bf16 %v1420, %v1412
      %v1437 = vpack.c.bf16 %v1421, %v1413
      %v1438 = vpack.c.bf16 %v1428, %v1428
      %v1439 = vpack.c.bf16 %v1429, %v1429
      %v1441 = vsel %vm321, %v1438, 0
      %v1444 = vsel %vm321, %v1439, 0
      %1446 = vmatprep.subr.bf16.mxu0 %v1431
      %1447 = vmatpush1.bf16.msra.mxu0 %v1430
      %1448 = vmatprep.subr.bf16.mxu0 %v1433
      %1449 = vmatpush1.bf16.msra.mxu0 %v1432
      %1450 = vmatprep.subr.bf16.mxu0 %v1435
      %1451 = vmatpush1.bf16.msra.mxu0 %v1434
      %1452 = vmatprep.subr.bf16.mxu0 %v1437
      %1453 = vmatpush1.bf16.msra.mxu0 %v1436
      %1454 = vmatprep.subr.bf16.mxu0 %v1444
      %1455 = vmatpush1.bf16.msra.mxu0 %v1441
      %1456 = vmatprep.subr.bf16.mxu0 0
      %1457 = vmatpush1.bf16.msra.mxu0 0
      %1458 = vmatprep.subr.bf16.mxu0 0
      %1459 = vmatpush1.bf16.msra.mxu0 0
      %1460 = vmatprep.subr.bf16.mxu0 0
      %1461 = vmatpush1.bf16.msra.mxu0 0
      %1462 = vmatprep.subr.bf16.mxu0 0
      %1463 = vmatpush1.bf16.msra.mxu0 0
      %1464 = vmatprep.subr.bf16.mxu0 0
      %1465 = vmatpush1.bf16.msra.mxu0 0
      %1466 = vmatprep.subr.bf16.mxu0 0
      %1467 = vmatpush1.bf16.msra.mxu0 0
      %1468 = vmatprep.subr.bf16.mxu0 0
      %1469 = vmatpush1.bf16.msra.mxu0 0
      %1470 = vmatprep.subr.bf16.mxu0 0
      %1471 = vmatpush1.bf16.msra.mxu0 0
      %1472 = vmatprep.subr.bf16.mxu0 0
      %1473 = vmatpush1.bf16.msra.mxu0 0
      %1474 = vmatprep.subr.bf16.mxu0 0
      %1475 = vmatpush1.bf16.msra.mxu0 0
      %1476 = vmatprep.subr.bf16.mxu0 0
      %1477 = vmatpush1.bf16.msra.mxu0 0
      %1478 = vmatprep.mubr.bf16.mxu0 0
      %1479 = vmatmul.mubr.bf16.gmra.mrb[0].mxu0 %v319
      %v1480 = vpop.f32.mrb[0].mxu0
      %v1481 = vadd.f32 %v87, %v1480
      %v1482 = vpop.f32.mrb[0].mxu0
      %v1483 = vadd.f32 %v88, %v1482
      %v1484 = vpop.f32.mrb[0].mxu0
      %v1485 = vpop.f32.mrb[0].mxu0
      %1486 = vdwg.mxu0
      %v1487 = vmul.f32 %v1481, %v1481
      %v1488 = vmul.f32 %v1483, %v1483
      %1489 = vmatprep.subr.mxu0 0.0
      %1490 = vmatpush1.msra.mxu0 1.0
      %1491 = vmatprep.subr.mxu0 0.0
      %1492 = vmatpush1.msra.mxu0 1.0
      %1493 = vmatprep.subr.mxu0 0.0
      %1494 = vmatpush1.msra.mxu0 1.0
      %1495 = vmatprep.subr.mxu0 0.0
      %1496 = vmatpush1.msra.mxu0 1.0
      %1497 = vmatprep.subr.mxu0 0.0
      %1498 = vmatpush1.msra.mxu0 1.0
      %1499 = vmatprep.subr.mxu0 0.0
      %1500 = vmatpush1.msra.mxu0 1.0
      %1501 = vmatprep.subr.mxu0 0.0
      %1502 = vmatpush1.msra.mxu0 1.0
      %1503 = vmatprep.subr.mxu0 0.0
      %1504 = vmatpush1.msra.mxu0 1.0
      %1505 = vmatprep.subr.mxu0 0.0
      %1506 = vmatpush1.msra.mxu0 1.0
      %1507 = vmatprep.subr.mxu0 0.0
      %1508 = vmatpush1.msra.mxu0 1.0
      %1509 = vmatprep.subr.mxu0 0.0
      %1510 = vmatpush1.msra.mxu0 1.0
      %1511 = vmatprep.subr.mxu0 0.0
      %1512 = vmatpush1.msra.mxu0 1.0
      %1513 = vmatprep.subr.mxu0 0.0
      %1514 = vmatpush1.msra.mxu0 1.0
      %1515 = vmatprep.subr.mxu0 0.0
      %1516 = vmatpush1.msra.mxu0 1.0
      %1517 = vmatprep.subr.mxu0 0.0
      %1518 = vmatpush1.msra.mxu0 1.0
      %1519 = vmatprep.subr.mxu0 0.0
      %1520 = vmatpush1.msra.mxu0 1.0
      %1521 = vmatprep.subr.mxu0 0.0
      %1522 = vmatpush1.msra.mxu0 1.0
      %1523 = vmatprep.subr.mxu0 0.0
      %1524 = vmatpush1.msra.mxu0 1.0
      %1525 = vmatprep.subr.mxu0 0.0
      %1526 = vmatpush1.msra.mxu0 1.0
      %1527 = vmatprep.subr.mxu0 0.0
      %1528 = vmatpush1.msra.mxu0 1.0
      %1529 = vmatprep.subr.mxu0 0.0
      %1530 = vmatpush1.msra.mxu0 1.0
      %1531 = vmatprep.subr.mxu0 0.0
      %1532 = vmatpush1.msra.mxu0 1.0
      %1533 = vmatprep.subr.mxu0 0.0
      %1534 = vmatpush1.msra.mxu0 1.0
      %1535 = vmatprep.subr.mxu0 0.0
      %1536 = vmatpush1.msra.mxu0 1.0
      %1537 = vmatprep.subr.mxu0 0.0
      %1538 = vmatpush1.msra.mxu0 1.0
      %1539 = vmatprep.subr.mxu0 0.0
      %1540 = vmatpush1.msra.mxu0 1.0
      %1541 = vmatprep.subr.mxu0 0.0
      %1542 = vmatpush1.msra.mxu0 1.0
      %1543 = vmatprep.subr.mxu0 0.0
      %1544 = vmatpush1.msra.mxu0 1.0
      %1545 = vmatprep.subr.mxu0 0.0
      %1546 = vmatpush1.msra.mxu0 1.0
      %1547 = vmatprep.subr.mxu0 0.0
      %1548 = vmatpush1.msra.mxu0 1.0
      %1549 = vmatprep.subr.mxu0 0.0
      %1550 = vmatpush1.msra.mxu0 1.0
      %1551 = vmatprep.subr.mxu0 0.0
      %1552 = vmatpush1.msra.mxu0 1.0
      %1553 = vmatprep.mubr.f32.mxu0 %v1483
      %1554 = vmatmul.mubr.f32.gmra.mrb[0].mxu0 %v1481
      %v1555 = vpop.f32.mrb[0].mxu0
      %v1556 = vadd.f32 0.0, %v1555
      %v1557 = vpop.f32.mrb[0].mxu0
      %1558 = vmatprep.mubr.f32.mxu0 %v1488
      %1559 = vmatmul.mubr.f32.gmra.mrb[0].mxu0 %v1487
      %v1560 = vpop.f32.mrb[0].mxu0
      %v1561 = vadd.f32 0.0, %v1560
      %v1562 = vpop.f32.mrb[0].mxu0
      %1563 = vdwg.mxu0
      %v1564 = vmul.f32 %v1556, 0.00390625
      %v1565 = vmul.f32 %v1561, 0.00390625
      %v1566 = vmul.f32 %v1564, %v1564
      %v1567 = vsub.f32 %v1565, %v1566
      %v1568 = vmax.f32 %v1567, 0.0
      %v1569 = vadd.f32 %v1568, 1e-05
      %v1570 = vrsqrt.pop %v1569
      %v1571 = vmul.f32 %v452, %v1570
      %v1572 = vmul.f32 %v1564, %v1571
      %v1573 = vsub.f32 %v457, %v1572
      %1575 = vset.pattern.permute.xlu0 0
      %1576 = vperm.xlu0 %1575, %v1571
      %v1577 = vpop.permute.xlu0 %1576
      %v1579 = vmul.f32 %v1481, %v1577
      %v1580 = vmul.f32 %v1483, %v1577
      %1582 = vset.pattern.permute.xlu0 0
      %1583 = vperm.xlu0 %1582, %v1573
      %v1584 = vpop.permute.xlu0 %1583
      %v1586 = vadd.f32 %v1579, %v1584
      %v1587 = vadd.f32 %v1580, %v1584
      %v1588 = vmax.f32 %v1586, 0.0
      %v1589 = vmax.f32 %v1587, 0.0
      %1590 = vrot.lane.b32.xlu0 %v1588, 17
      %v1591 = vpop.permute.xlu0 %1590
      %1592 = vrot.lane.b32.xlu0 %v1589, 17
      %v1593 = vpop.permute.xlu0 %1592
      %v1594 = vsel %vm215, %v1591, %v1593
      %v1595 = vsel %vm215, %v1593, %v1591
      %v1596 = vmul.f32 %v218, %v1595
      %v1597 = vmul.f32 %v219, %v1594
      %1598 = vrot.lane.b32.xlu0 %v1588, 16
      %v1599 = vpop.permute.xlu0 %1598
      %1600 = vrot.lane.b32.xlu0 %v1589, 16
      %v1601 = vpop.permute.xlu0 %1600
      %v1602 = vsel %vm226, %v1599, %v1601
      %v1603 = vsel %vm226, %v1601, %v1599
      %v1604 = vmul.f32 %v230, %v1603
      %v1605 = vmul.f32 %v231, %v1602
      %1606 = vrot.lane.b32.xlu0 %v1588, 15
      %v1607 = vpop.permute.xlu0 %1606
      %1608 = vrot.lane.b32.xlu0 %v1589, 15
      %v1609 = vpop.permute.xlu0 %1608
      %v1610 = vsel %vm238, %v1607, %v1609
      %v1611 = vsel %vm238, %v1609, %v1607
      %v1612 = vmul.f32 %v242, %v1611
      %v1613 = vmul.f32 %v243, %v1610
      %1614 = vrot.lane.b32.xlu0 %v1588, 1
      %v1615 = vpop.permute.xlu0 %1614
      %1616 = vrot.lane.b32.xlu0 %v1589, 1
      %v1617 = vpop.permute.xlu0 %1616
      %v1618 = vsel %vm250, %v1615, %v1617
      %v1619 = vsel %vm250, %v1617, %v1615
      %v1620 = vmul.f32 %v254, %v1619
      %v1621 = vmul.f32 %v255, %v1618
      %1622 = vrot.lane.b32.xlu0 %v1588, 127
      %v1623 = vpop.permute.xlu0 %1622
      %1624 = vrot.lane.b32.xlu0 %v1589, 127
      %v1625 = vpop.permute.xlu0 %1624
      %v1626 = vsel %vm262, %v1623, %v1625
      %v1627 = vsel %vm262, %v1625, %v1623
      %v1628 = vmul.f32 %v266, %v1626
      %v1629 = vmul.f32 %v267, %v1627
      %1630 = vrot.lane.b32.xlu0 %v1588, 113
      %v1631 = vpop.permute.xlu0 %1630
      %1632 = vrot.lane.b32.xlu0 %v1589, 113
      %v1633 = vpop.permute.xlu0 %1632
      %v1634 = vsel %vm274, %v1631, %v1633
      %v1635 = vsel %vm274, %v1633, %v1631
      %v1636 = vmul.f32 %v278, %v1634
      %v1637 = vmul.f32 %v279, %v1635
      %1638 = vrot.lane.b32.xlu0 %v1588, 112
      %v1639 = vpop.permute.xlu0 %1638
      %1640 = vrot.lane.b32.xlu0 %v1589, 112
      %v1641 = vpop.permute.xlu0 %1640
      %v1642 = vsel %vm286, %v1639, %v1641
      %v1643 = vsel %vm286, %v1641, %v1639
      %v1644 = vmul.f32 %v290, %v1642
      %v1645 = vmul.f32 %v291, %v1643
      %1646 = vrot.lane.b32.xlu0 %v1588, 111
      %v1647 = vpop.permute.xlu0 %1646
      %1648 = vrot.lane.b32.xlu0 %v1589, 111
      %v1649 = vpop.permute.xlu0 %1648
      %v1650 = vsel %vm298, %v1647, %v1649
      %v1651 = vsel %vm298, %v1649, %v1647
      %v1652 = vmul.f32 %v302, %v1650
      %v1653 = vmul.f32 %v303, %v1651
      %v1654 = vpack.c.bf16 %v1604, %v1596
      %v1655 = vpack.c.bf16 %v1605, %v1597
      %v1656 = vpack.c.bf16 %v1620, %v1612
      %v1657 = vpack.c.bf16 %v1621, %v1613
      %v1658 = vpack.c.bf16 %v1628, %v1588
      %v1659 = vpack.c.bf16 %v1629, %v1589
      %v1660 = vpack.c.bf16 %v1644, %v1636
      %v1661 = vpack.c.bf16 %v1645, %v1637
      %v1662 = vpack.c.bf16 %v1652, %v1652
      %v1663 = vpack.c.bf16 %v1653, %v1653
      %v1665 = vsel %vm321, %v1662, 0
      %v1668 = vsel %vm321, %v1663, 0
      %1670 = vmatprep.subr.bf16.mxu0 %v1655
      %1671 = vmatpush1.bf16.msra.mxu0 %v1654
      %1672 = vmatprep.subr.bf16.mxu0 %v1657
      %1673 = vmatpush1.bf16.msra.mxu0 %v1656
      %1674 = vmatprep.subr.bf16.mxu0 %v1659
      %1675 = vmatpush1.bf16.msra.mxu0 %v1658
      %1676 = vmatprep.subr.bf16.mxu0 %v1661
      %1677 = vmatpush1.bf16.msra.mxu0 %v1660
      %1678 = vmatprep.subr.bf16.mxu0 %v1668
      %1679 = vmatpush1.bf16.msra.mxu0 %v1665
      %1680 = vmatprep.subr.bf16.mxu0 0
      %1681 = vmatpush1.bf16.msra.mxu0 0
      %1682 = vmatprep.subr.bf16.mxu0 0
      %1683 = vmatpush1.bf16.msra.mxu0 0
      %1684 = vmatprep.subr.bf16.mxu0 0
      %1685 = vmatpush1.bf16.msra.mxu0 0
      %1686 = vmatprep.subr.bf16.mxu0 0
      %1687 = vmatpush1.bf16.msra.mxu0 0
      %1688 = vmatprep.subr.bf16.mxu0 0
      %1689 = vmatpush1.bf16.msra.mxu0 0
      %1690 = vmatprep.subr.bf16.mxu0 0
      %1691 = vmatpush1.bf16.msra.mxu0 0
      %1692 = vmatprep.subr.bf16.mxu0 0
      %1693 = vmatpush1.bf16.msra.mxu0 0
      %1694 = vmatprep.subr.bf16.mxu0 0
      %1695 = vmatpush1.bf16.msra.mxu0 0
      %1696 = vmatprep.subr.bf16.mxu0 0
      %1697 = vmatpush1.bf16.msra.mxu0 0
      %1698 = vmatprep.subr.bf16.mxu0 0
      %1699 = vmatpush1.bf16.msra.mxu0 0
      %1700 = vmatprep.subr.bf16.mxu0 0
      %1701 = vmatpush1.bf16.msra.mxu0 0
      %1702 = vmatprep.mubr.bf16.mxu0 0
      %1703 = vmatmul.mubr.bf16.gmra.mrb[0].mxu0 %v552
      %v1704 = vpop.f32.mrb[0].mxu0
      %v1705 = vadd.f32 %v91, %v1704
      %v1706 = vpop.f32.mrb[0].mxu0
      %v1707 = vadd.f32 %v92, %v1706
      %v1708 = vpop.f32.mrb[0].mxu0
      %v1709 = vpop.f32.mrb[0].mxu0
      %1710 = vdwg.mxu0
      %v1711 = vmul.f32 %v1705, %v1705
      %v1712 = vmul.f32 %v1707, %v1707
      %1713 = vmatprep.subr.mxu0 0.0
      %1714 = vmatpush1.msra.mxu0 1.0
      %1715 = vmatprep.subr.mxu0 0.0
      %1716 = vmatpush1.msra.mxu0 1.0
      %1717 = vmatprep.subr.mxu0 0.0
      %1718 = vmatpush1.msra.mxu0 1.0
      %1719 = vmatprep.subr.mxu0 0.0
      %1720 = vmatpush1.msra.mxu0 1.0
      %1721 = vmatprep.subr.mxu0 0.0
      %1722 = vmatpush1.msra.mxu0 1.0
      %1723 = vmatprep.subr.mxu0 0.0
      %1724 = vmatpush1.msra.mxu0 1.0
      %1725 = vmatprep.subr.mxu0 0.0
      %1726 = vmatpush1.msra.mxu0 1.0
      %1727 = vmatprep.subr.mxu0 0.0
      %1728 = vmatpush1.msra.mxu0 1.0
      %1729 = vmatprep.subr.mxu0 0.0
      %1730 = vmatpush1.msra.mxu0 1.0
      %1731 = vmatprep.subr.mxu0 0.0
      %1732 = vmatpush1.msra.mxu0 1.0
      %1733 = vmatprep.subr.mxu0 0.0
      %1734 = vmatpush1.msra.mxu0 1.0
      %1735 = vmatprep.subr.mxu0 0.0
      %1736 = vmatpush1.msra.mxu0 1.0
      %1737 = vmatprep.subr.mxu0 0.0
      %1738 = vmatpush1.msra.mxu0 1.0
      %1739 = vmatprep.subr.mxu0 0.0
      %1740 = vmatpush1.msra.mxu0 1.0
      %1741 = vmatprep.subr.mxu0 0.0
      %1742 = vmatpush1.msra.mxu0 1.0
      %1743 = vmatprep.subr.mxu0 0.0
      %1744 = vmatpush1.msra.mxu0 1.0
      %1745 = vmatprep.subr.mxu0 0.0
      %1746 = vmatpush1.msra.mxu0 1.0
      %1747 = vmatprep.subr.mxu0 0.0
      %1748 = vmatpush1.msra.mxu0 1.0
      %1749 = vmatprep.subr.mxu0 0.0
      %1750 = vmatpush1.msra.mxu0 1.0
      %1751 = vmatprep.subr.mxu0 0.0
      %1752 = vmatpush1.msra.mxu0 1.0
      %1753 = vmatprep.subr.mxu0 0.0
      %1754 = vmatpush1.msra.mxu0 1.0
      %1755 = vmatprep.subr.mxu0 0.0
      %1756 = vmatpush1.msra.mxu0 1.0
      %1757 = vmatprep.subr.mxu0 0.0
      %1758 = vmatpush1.msra.mxu0 1.0
      %1759 = vmatprep.subr.mxu0 0.0
      %1760 = vmatpush1.msra.mxu0 1.0
      %1761 = vmatprep.subr.mxu0 0.0
      %1762 = vmatpush1.msra.mxu0 1.0
      %1763 = vmatprep.subr.mxu0 0.0
      %1764 = vmatpush1.msra.mxu0 1.0
      %1765 = vmatprep.subr.mxu0 0.0
      %1766 = vmatpush1.msra.mxu0 1.0
      %1767 = vmatprep.subr.mxu0 0.0
      %1768 = vmatpush1.msra.mxu0 1.0
      %1769 = vmatprep.subr.mxu0 0.0
      %1770 = vmatpush1.msra.mxu0 1.0
      %1771 = vmatprep.subr.mxu0 0.0
      %1772 = vmatpush1.msra.mxu0 1.0
      %1773 = vmatprep.subr.mxu0 0.0
      %1774 = vmatpush1.msra.mxu0 1.0
      %1775 = vmatprep.subr.mxu0 0.0
      %1776 = vmatpush1.msra.mxu0 1.0
      %1777 = vmatprep.mubr.f32.mxu0 %v1707
      %1778 = vmatmul.mubr.f32.gmra.mrb[0].mxu0 %v1705
      %v1779 = vpop.f32.mrb[0].mxu0
      %v1780 = vadd.f32 0.0, %v1779
      %v1781 = vpop.f32.mrb[0].mxu0
      %1782 = vmatprep.mubr.f32.mxu0 %v1712
      %1783 = vmatmul.mubr.f32.gmra.mrb[0].mxu0 %v1711
      %v1784 = vpop.f32.mrb[0].mxu0
      %v1785 = vadd.f32 0.0, %v1784
      %v1786 = vpop.f32.mrb[0].mxu0
      %1787 = vdwg.mxu0
      %v1788 = vmul.f32 %v1780, 0.00390625
      %v1789 = vmul.f32 %v1785, 0.00390625
      %v1790 = vmul.f32 %v1788, %v1788
      %v1791 = vsub.f32 %v1789, %v1790
      %v1792 = vmax.f32 %v1791, 0.0
      %v1793 = vadd.f32 %v1792, 1e-05
      %v1794 = vrsqrt.pop %v1793
      %v1795 = vmul.f32 %v684, %v1794
      %v1796 = vmul.f32 %v1788, %v1795
      %v1797 = vsub.f32 %v689, %v1796
      %1799 = vset.pattern.permute.xlu0 0
      %1800 = vperm.xlu0 %1799, %v1795
      %v1801 = vpop.permute.xlu0 %1800
      %v1803 = vmul.f32 %v1705, %v1801
      %v1804 = vmul.f32 %v1707, %v1801
      %1806 = vset.pattern.permute.xlu0 0
      %1807 = vperm.xlu0 %1806, %v1797
      %v1808 = vpop.permute.xlu0 %1807
      %v1810 = vadd.f32 %v1803, %v1808
      %v1811 = vadd.f32 %v1804, %v1808
      %v1812 = vmul.f32 %v1810, 0.25
      %v1813 = vmul.f32 %v1811, 0.25
      %v1814 = vadd.f32 %v53, %v1812
      %v1815 = vadd.f32 %v54, %v1813
      %v1816 = vmul.f32 %v1814, %v1814
      %v1817 = vmul.f32 %v1815, %v1815
      %1818 = vmatprep.subr.mxu0 0.0
      %1819 = vmatpush1.msra.mxu0 1.0
      %1820 = vmatprep.subr.mxu0 0.0
      %1821 = vmatpush1.msra.mxu0 1.0
      %1822 = vmatprep.subr.mxu0 0.0
      %1823 = vmatpush1.msra.mxu0 1.0
      %1824 = vmatprep.subr.mxu0 0.0
      %1825 = vmatpush1.msra.mxu0 1.0
      %1826 = vmatprep.subr.mxu0 0.0
      %1827 = vmatpush1.msra.mxu0 1.0
      %1828 = vmatprep.subr.mxu0 0.0
      %1829 = vmatpush1.msra.mxu0 1.0
      %1830 = vmatprep.subr.mxu0 0.0
      %1831 = vmatpush1.msra.mxu0 1.0
      %1832 = vmatprep.subr.mxu0 0.0
      %1833 = vmatpush1.msra.mxu0 1.0
      %1834 = vmatprep.subr.mxu0 0.0
      %1835 = vmatpush1.msra.mxu0 1.0
      %1836 = vmatprep.subr.mxu0 0.0
      %1837 = vmatpush1.msra.mxu0 1.0
      %1838 = vmatprep.subr.mxu0 0.0
      %1839 = vmatpush1.msra.mxu0 1.0
      %1840 = vmatprep.subr.mxu0 0.0
      %1841 = vmatpush1.msra.mxu0 1.0
      %1842 = vmatprep.subr.mxu0 0.0
      %1843 = vmatpush1.msra.mxu0 1.0
      %1844 = vmatprep.subr.mxu0 0.0
      %1845 = vmatpush1.msra.mxu0 1.0
      %1846 = vmatprep.subr.mxu0 0.0
      %1847 = vmatpush1.msra.mxu0 1.0
      %1848 = vmatprep.subr.mxu0 0.0
      %1849 = vmatpush1.msra.mxu0 1.0
      %1850 = vmatprep.subr.mxu0 0.0
      %1851 = vmatpush1.msra.mxu0 1.0
      %1852 = vmatprep.subr.mxu0 0.0
      %1853 = vmatpush1.msra.mxu0 1.0
      %1854 = vmatprep.subr.mxu0 0.0
      %1855 = vmatpush1.msra.mxu0 1.0
      %1856 = vmatprep.subr.mxu0 0.0
      %1857 = vmatpush1.msra.mxu0 1.0
      %1858 = vmatprep.subr.mxu0 0.0
      %1859 = vmatpush1.msra.mxu0 1.0
      %1860 = vmatprep.subr.mxu0 0.0
      %1861 = vmatpush1.msra.mxu0 1.0
      %1862 = vmatprep.subr.mxu0 0.0
      %1863 = vmatpush1.msra.mxu0 1.0
      %1864 = vmatprep.subr.mxu0 0.0
      %1865 = vmatpush1.msra.mxu0 1.0
      %1866 = vmatprep.subr.mxu0 0.0
      %1867 = vmatpush1.msra.mxu0 1.0
      %1868 = vmatprep.subr.mxu0 0.0
      %1869 = vmatpush1.msra.mxu0 1.0
      %1870 = vmatprep.subr.mxu0 0.0
      %1871 = vmatpush1.msra.mxu0 1.0
      %1872 = vmatprep.subr.mxu0 0.0
      %1873 = vmatpush1.msra.mxu0 1.0
      %1874 = vmatprep.subr.mxu0 0.0
      %1875 = vmatpush1.msra.mxu0 1.0
      %1876 = vmatprep.subr.mxu0 0.0
      %1877 = vmatpush1.msra.mxu0 1.0
      %1878 = vmatprep.subr.mxu0 0.0
      %1879 = vmatpush1.msra.mxu0 1.0
      %1880 = vmatprep.subr.mxu0 0.0
      %1881 = vmatpush1.msra.mxu0 1.0
      %1882 = vmatprep.mubr.f32.mxu0 %v1815
      %1883 = vmatmul.mubr.f32.gmra.mrb[0].mxu0 %v1814
      %v1884 = vpop.f32.mrb[0].mxu0
      %v1885 = vadd.f32 0.0, %v1884
      %v1886 = vpop.f32.mrb[0].mxu0
      %1887 = vmatprep.mubr.f32.mxu0 %v1817
      %1888 = vmatmul.mubr.f32.gmra.mrb[0].mxu0 %v1816
      %v1889 = vpop.f32.mrb[0].mxu0
      %v1890 = vadd.f32 0.0, %v1889
      %v1891 = vpop.f32.mrb[0].mxu0
      %1892 = vdwg.mxu0
      %v1893 = vmul.f32 %v1885, 0.00390625
      %v1894 = vmul.f32 %v1890, 0.00390625
      %v1895 = vmul.f32 %v1893, %v1893
      %v1896 = vsub.f32 %v1894, %v1895
      %v1897 = vmax.f32 %v1896, 0.0
      %v1898 = vadd.f32 %v1897, 1e-05
      %v1899 = vrsqrt.pop %v1898
      %v1900 = vmul.f32 %v185, %v1899
      %v1901 = vmul.f32 %v1893, %v1900
      %v1902 = vsub.f32 %v190, %v1901
      %1904 = vset.pattern.permute.xlu0 0
      %1905 = vperm.xlu0 %1904, %v1900
      %v1906 = vpop.permute.xlu0 %1905
      %v1908 = vmul.f32 %v1814, %v1906
      %v1909 = vmul.f32 %v1815, %v1906
      %1911 = vset.pattern.permute.xlu0 0
      %1912 = vperm.xlu0 %1911, %v1902
      %v1913 = vpop.permute.xlu0 %1912
      %v1915 = vadd.f32 %v1908, %v1913
      %v1916 = vadd.f32 %v1909, %v1913
      %v1917 = vmax.f32 %v1915, 0.0
      %v1918 = vmax.f32 %v1916, 0.0
      %1919 = vrot.lane.b32.xlu0 %v1917, 17
      %v1920 = vpop.permute.xlu0 %1919
      %1921 = vrot.lane.b32.xlu0 %v1918, 17
      %v1922 = vpop.permute.xlu0 %1921
      %v1923 = vsel %vm215, %v1920, %v1922
      %v1924 = vsel %vm215, %v1922, %v1920
      %v1925 = vmul.f32 %v218, %v1924
      %v1926 = vmul.f32 %v219, %v1923
      %1927 = vrot.lane.b32.xlu0 %v1917, 16
      %v1928 = vpop.permute.xlu0 %1927
      %1929 = vrot.lane.b32.xlu0 %v1918, 16
      %v1930 = vpop.permute.xlu0 %1929
      %v1931 = vsel %vm226, %v1928, %v1930
      %v1932 = vsel %vm226, %v1930, %v1928
      %v1933 = vmul.f32 %v230, %v1932
      %v1934 = vmul.f32 %v231, %v1931
      %1935 = vrot.lane.b32.xlu0 %v1917, 15
      %v1936 = vpop.permute.xlu0 %1935
      %1937 = vrot.lane.b32.xlu0 %v1918, 15
      %v1938 = vpop.permute.xlu0 %1937
      %v1939 = vsel %vm238, %v1936, %v1938
      %v1940 = vsel %vm238, %v1938, %v1936
      %v1941 = vmul.f32 %v242, %v1940
      %v1942 = vmul.f32 %v243, %v1939
      %1943 = vrot.lane.b32.xlu0 %v1917, 1
      %v1944 = vpop.permute.xlu0 %1943
      %1945 = vrot.lane.b32.xlu0 %v1918, 1
      %v1946 = vpop.permute.xlu0 %1945
      %v1947 = vsel %vm250, %v1944, %v1946
      %v1948 = vsel %vm250, %v1946, %v1944
      %v1949 = vmul.f32 %v254, %v1948
      %v1950 = vmul.f32 %v255, %v1947
      %1951 = vrot.lane.b32.xlu0 %v1917, 127
      %v1952 = vpop.permute.xlu0 %1951
      %1953 = vrot.lane.b32.xlu0 %v1918, 127
      %v1954 = vpop.permute.xlu0 %1953
      %v1955 = vsel %vm262, %v1952, %v1954
      %v1956 = vsel %vm262, %v1954, %v1952
      %v1957 = vmul.f32 %v266, %v1955
      %v1958 = vmul.f32 %v267, %v1956
      %1959 = vrot.lane.b32.xlu0 %v1917, 113
      %v1960 = vpop.permute.xlu0 %1959
      %1961 = vrot.lane.b32.xlu0 %v1918, 113
      %v1962 = vpop.permute.xlu0 %1961
      %v1963 = vsel %vm274, %v1960, %v1962
      %v1964 = vsel %vm274, %v1962, %v1960
      %v1965 = vmul.f32 %v278, %v1963
      %v1966 = vmul.f32 %v279, %v1964
      %1967 = vrot.lane.b32.xlu0 %v1917, 112
      %v1968 = vpop.permute.xlu0 %1967
      %1969 = vrot.lane.b32.xlu0 %v1918, 112
      %v1970 = vpop.permute.xlu0 %1969
      %v1971 = vsel %vm286, %v1968, %v1970
      %v1972 = vsel %vm286, %v1970, %v1968
      %v1973 = vmul.f32 %v290, %v1971
      %v1974 = vmul.f32 %v291, %v1972
      %1975 = vrot.lane.b32.xlu0 %v1917, 111
      %v1976 = vpop.permute.xlu0 %1975
      %1977 = vrot.lane.b32.xlu0 %v1918, 111
      %v1978 = vpop.permute.xlu0 %1977
      %v1979 = vsel %vm298, %v1976, %v1978
      %v1980 = vsel %vm298, %v1978, %v1976
      %v1981 = vmul.f32 %v302, %v1979
      %v1982 = vmul.f32 %v303, %v1980
      %v1983 = vpack.c.bf16 %v1933, %v1925
      %v1984 = vpack.c.bf16 %v1934, %v1926
      %v1985 = vpack.c.bf16 %v1949, %v1941
      %v1986 = vpack.c.bf16 %v1950, %v1942
      %v1987 = vpack.c.bf16 %v1957, %v1917
      %v1988 = vpack.c.bf16 %v1958, %v1918
      %v1989 = vpack.c.bf16 %v1973, %v1965
      %v1990 = vpack.c.bf16 %v1974, %v1966
      %v1991 = vpack.c.bf16 %v1981, %v1981
      %v1992 = vpack.c.bf16 %v1982, %v1982
      %v1994 = vsel %vm321, %v1991, 0
      %v1997 = vsel %vm321, %v1992, 0
      %1999 = vmatprep.subr.bf16.mxu0 %v1984
      %2000 = vmatpush1.bf16.msra.mxu0 %v1983
      %2001 = vmatprep.subr.bf16.mxu0 %v1986
      %2002 = vmatpush1.bf16.msra.mxu0 %v1985
      %2003 = vmatprep.subr.bf16.mxu0 %v1988
      %2004 = vmatpush1.bf16.msra.mxu0 %v1987
      %2005 = vmatprep.subr.bf16.mxu0 %v1990
      %2006 = vmatpush1.bf16.msra.mxu0 %v1989
      %2007 = vmatprep.subr.bf16.mxu0 %v1997
      %2008 = vmatpush1.bf16.msra.mxu0 %v1994
      %2009 = vmatprep.subr.bf16.mxu0 0
      %2010 = vmatpush1.bf16.msra.mxu0 0
      %2011 = vmatprep.subr.bf16.mxu0 0
      %2012 = vmatpush1.bf16.msra.mxu0 0
      %2013 = vmatprep.subr.bf16.mxu0 0
      %2014 = vmatpush1.bf16.msra.mxu0 0
      %2015 = vmatprep.subr.bf16.mxu0 0
      %2016 = vmatpush1.bf16.msra.mxu0 0
      %2017 = vmatprep.subr.bf16.mxu0 0
      %2018 = vmatpush1.bf16.msra.mxu0 0
      %2019 = vmatprep.subr.bf16.mxu0 0
      %2020 = vmatpush1.bf16.msra.mxu0 0
      %2021 = vmatprep.subr.bf16.mxu0 0
      %2022 = vmatpush1.bf16.msra.mxu0 0
      %2023 = vmatprep.subr.bf16.mxu0 0
      %2024 = vmatpush1.bf16.msra.mxu0 0
      %2025 = vmatprep.subr.bf16.mxu0 0
      %2026 = vmatpush1.bf16.msra.mxu0 0
      %2027 = vmatprep.subr.bf16.mxu0 0
      %2028 = vmatpush1.bf16.msra.mxu0 0
      %2029 = vmatprep.subr.bf16.mxu0 0
      %2030 = vmatpush1.bf16.msra.mxu0 0
      %2031 = vmatprep.mubr.bf16.mxu0 0
      %2032 = vmatmul.mubr.bf16.gmra.mrb[0].mxu0 %v319
      %v2033 = vpop.f32.mrb[0].mxu0
      %v2034 = vadd.f32 %v97, %v2033
      %v2035 = vpop.f32.mrb[0].mxu0
      %v2036 = vadd.f32 %v98, %v2035
      %v2037 = vpop.f32.mrb[0].mxu0
      %v2038 = vpop.f32.mrb[0].mxu0
      %2039 = vdwg.mxu0
      %v2040 = vmul.f32 %v2034, %v2034
      %v2041 = vmul.f32 %v2036, %v2036
      %2042 = vmatprep.subr.mxu0 0.0
      %2043 = vmatpush1.msra.mxu0 1.0
      %2044 = vmatprep.subr.mxu0 0.0
      %2045 = vmatpush1.msra.mxu0 1.0
      %2046 = vmatprep.subr.mxu0 0.0
      %2047 = vmatpush1.msra.mxu0 1.0
      %2048 = vmatprep.subr.mxu0 0.0
      %2049 = vmatpush1.msra.mxu0 1.0
      %2050 = vmatprep.subr.mxu0 0.0
      %2051 = vmatpush1.msra.mxu0 1.0
      %2052 = vmatprep.subr.mxu0 0.0
      %2053 = vmatpush1.msra.mxu0 1.0
      %2054 = vmatprep.subr.mxu0 0.0
      %2055 = vmatpush1.msra.mxu0 1.0
      %2056 = vmatprep.subr.mxu0 0.0
      %2057 = vmatpush1.msra.mxu0 1.0
      %2058 = vmatprep.subr.mxu0 0.0
      %2059 = vmatpush1.msra.mxu0 1.0
      %2060 = vmatprep.subr.mxu0 0.0
      %2061 = vmatpush1.msra.mxu0 1.0
      %2062 = vmatprep.subr.mxu0 0.0
      %2063 = vmatpush1.msra.mxu0 1.0
      %2064 = vmatprep.subr.mxu0 0.0
      %2065 = vmatpush1.msra.mxu0 1.0
      %2066 = vmatprep.subr.mxu0 0.0
      %2067 = vmatpush1.msra.mxu0 1.0
      %2068 = vmatprep.subr.mxu0 0.0
      %2069 = vmatpush1.msra.mxu0 1.0
      %2070 = vmatprep.subr.mxu0 0.0
      %2071 = vmatpush1.msra.mxu0 1.0
      %2072 = vmatprep.subr.mxu0 0.0
      %2073 = vmatpush1.msra.mxu0 1.0
      %2074 = vmatprep.subr.mxu0 0.0
      %2075 = vmatpush1.msra.mxu0 1.0
      %2076 = vmatprep.subr.mxu0 0.0
      %2077 = vmatpush1.msra.mxu0 1.0
      %2078 = vmatprep.subr.mxu0 0.0
      %2079 = vmatpush1.msra.mxu0 1.0
      %2080 = vmatprep.subr.mxu0 0.0
      %2081 = vmatpush1.msra.mxu0 1.0
      %2082 = vmatprep.subr.mxu0 0.0
      %2083 = vmatpush1.msra.mxu0 1.0
      %2084 = vmatprep.subr.mxu0 0.0
      %2085 = vmatpush1.msra.mxu0 1.0
      %2086 = vmatprep.subr.mxu0 0.0
      %2087 = vmatpush1.msra.mxu0 1.0
      %2088 = vmatprep.subr.mxu0 0.0
      %2089 = vmatpush1.msra.mxu0 1.0
      %2090 = vmatprep.subr.mxu0 0.0
      %2091 = vmatpush1.msra.mxu0 1.0
      %2092 = vmatprep.subr.mxu0 0.0
      %2093 = vmatpush1.msra.mxu0 1.0
      %2094 = vmatprep.subr.mxu0 0.0
      %2095 = vmatpush1.msra.mxu0 1.0
      %2096 = vmatprep.subr.mxu0 0.0
      %2097 = vmatpush1.msra.mxu0 1.0
      %2098 = vmatprep.subr.mxu0 0.0
      %2099 = vmatpush1.msra.mxu0 1.0
      %2100 = vmatprep.subr.mxu0 0.0
      %2101 = vmatpush1.msra.mxu0 1.0
      %2102 = vmatprep.subr.mxu0 0.0
      %2103 = vmatpush1.msra.mxu0 1.0
      %2104 = vmatprep.subr.mxu0 0.0
      %2105 = vmatpush1.msra.mxu0 1.0
      %2106 = vmatprep.mubr.f32.mxu0 %v2036
      %2107 = vmatmul.mubr.f32.gmra.mrb[0].mxu0 %v2034
      %v2108 = vpop.f32.mrb[0].mxu0
      %v2109 = vadd.f32 0.0, %v2108
      %v2110 = vpop.f32.mrb[0].mxu0
      %2111 = vmatprep.mubr.f32.mxu0 %v2041
      %2112 = vmatmul.mubr.f32.gmra.mrb[0].mxu0 %v2040
      %v2113 = vpop.f32.mrb[0].mxu0
      %v2114 = vadd.f32 0.0, %v2113
      %v2115 = vpop.f32.mrb[0].mxu0
      %2116 = vdwg.mxu0
      %v2117 = vmul.f32 %v2109, 0.00390625
      %v2118 = vmul.f32 %v2114, 0.00390625
      %v2119 = vmul.f32 %v2117, %v2117
      %v2120 = vsub.f32 %v2118, %v2119
      %v2121 = vmax.f32 %v2120, 0.0
      %v2122 = vadd.f32 %v2121, 1e-05
      %v2123 = vrsqrt.pop %v2122
      %v2124 = vmul.f32 %v452, %v2123
      %v2125 = vmul.f32 %v2117, %v2124
      %v2126 = vsub.f32 %v457, %v2125
      %2128 = vset.pattern.permute.xlu0 0
      %2129 = vperm.xlu0 %2128, %v2124
      %v2130 = vpop.permute.xlu0 %2129
      %v2132 = vmul.f32 %v2034, %v2130
      %v2133 = vmul.f32 %v2036, %v2130
      %2135 = vset.pattern.permute.xlu0 0
      %2136 = vperm.xlu0 %2135, %v2126
      %v2137 = vpop.permute.xlu0 %2136
      %v2139 = vadd.f32 %v2132, %v2137
      %v2140 = vadd.f32 %v2133, %v2137
      %v2141 = vmax.f32 %v2139, 0.0
      %v2142 = vmax.f32 %v2140, 0.0
      %2143 = vrot.lane.b32.xlu0 %v2141, 17
      %v2144 = vpop.permute.xlu0 %2143
      %2145 = vrot.lane.b32.xlu0 %v2142, 17
      %v2146 = vpop.permute.xlu0 %2145
      %v2147 = vsel %vm215, %v2144, %v2146
      %v2148 = vsel %vm215, %v2146, %v2144
      %v2149 = vmul.f32 %v218, %v2148
      %v2150 = vmul.f32 %v219, %v2147
      %2151 = vrot.lane.b32.xlu0 %v2141, 16
      %v2152 = vpop.permute.xlu0 %2151
      %2153 = vrot.lane.b32.xlu0 %v2142, 16
      %v2154 = vpop.permute.xlu0 %2153
      %v2155 = vsel %vm226, %v2152, %v2154
      %v2156 = vsel %vm226, %v2154, %v2152
      %v2157 = vmul.f32 %v230, %v2156
      %v2158 = vmul.f32 %v231, %v2155
      %2159 = vrot.lane.b32.xlu0 %v2141, 15
      %v2160 = vpop.permute.xlu0 %2159
      %2161 = vrot.lane.b32.xlu0 %v2142, 15
      %v2162 = vpop.permute.xlu0 %2161
      %v2163 = vsel %vm238, %v2160, %v2162
      %v2164 = vsel %vm238, %v2162, %v2160
      %v2165 = vmul.f32 %v242, %v2164
      %v2166 = vmul.f32 %v243, %v2163
      %2167 = vrot.lane.b32.xlu0 %v2141, 1
      %v2168 = vpop.permute.xlu0 %2167
      %2169 = vrot.lane.b32.xlu0 %v2142, 1
      %v2170 = vpop.permute.xlu0 %2169
      %v2171 = vsel %vm250, %v2168, %v2170
      %v2172 = vsel %vm250, %v2170, %v2168
      %v2173 = vmul.f32 %v254, %v2172
      %v2174 = vmul.f32 %v255, %v2171
      %2175 = vrot.lane.b32.xlu0 %v2141, 127
      %v2176 = vpop.permute.xlu0 %2175
      %2177 = vrot.lane.b32.xlu0 %v2142, 127
      %v2178 = vpop.permute.xlu0 %2177
      %v2179 = vsel %vm262, %v2176, %v2178
      %v2180 = vsel %vm262, %v2178, %v2176
      %v2181 = vmul.f32 %v266, %v2179
      %v2182 = vmul.f32 %v267, %v2180
      %2183 = vrot.lane.b32.xlu0 %v2141, 113
      %v2184 = vpop.permute.xlu0 %2183
      %2185 = vrot.lane.b32.xlu0 %v2142, 113
      %v2186 = vpop.permute.xlu0 %2185
      %v2187 = vsel %vm274, %v2184, %v2186
      %v2188 = vsel %vm274, %v2186, %v2184
      %v2189 = vmul.f32 %v278, %v2187
      %v2190 = vmul.f32 %v279, %v2188
      %2191 = vrot.lane.b32.xlu0 %v2141, 112
      %v2192 = vpop.permute.xlu0 %2191
      %2193 = vrot.lane.b32.xlu0 %v2142, 112
      %v2194 = vpop.permute.xlu0 %2193
      %v2195 = vsel %vm286, %v2192, %v2194
      %v2196 = vsel %vm286, %v2194, %v2192
      %v2197 = vmul.f32 %v290, %v2195
      %v2198 = vmul.f32 %v291, %v2196
      %2199 = vrot.lane.b32.xlu0 %v2141, 111
      %v2200 = vpop.permute.xlu0 %2199
      %2201 = vrot.lane.b32.xlu0 %v2142, 111
      %v2202 = vpop.permute.xlu0 %2201
      %v2203 = vsel %vm298, %v2200, %v2202
      %v2204 = vsel %vm298, %v2202, %v2200
      %v2205 = vmul.f32 %v302, %v2203
      %v2206 = vmul.f32 %v303, %v2204
      %v2207 = vpack.c.bf16 %v2157, %v2149
      %v2208 = vpack.c.bf16 %v2158, %v2150
      %v2209 = vpack.c.bf16 %v2173, %v2165
      %v2210 = vpack.c.bf16 %v2174, %v2166
      %v2211 = vpack.c.bf16 %v2181, %v2141
      %v2212 = vpack.c.bf16 %v2182, %v2142
      %v2213 = vpack.c.bf16 %v2197, %v2189
      %v2214 = vpack.c.bf16 %v2198, %v2190
      %v2215 = vpack.c.bf16 %v2205, %v2205
      %v2216 = vpack.c.bf16 %v2206, %v2206
      %v2218 = vsel %vm321, %v2215, 0
      %v2221 = vsel %vm321, %v2216, 0
      %2223 = vmatprep.subr.bf16.mxu0 %v2208
      %2224 = vmatpush1.bf16.msra.mxu0 %v2207
      %2225 = vmatprep.subr.bf16.mxu0 %v2210
      %2226 = vmatpush1.bf16.msra.mxu0 %v2209
      %2227 = vmatprep.subr.bf16.mxu0 %v2212
      %2228 = vmatpush1.bf16.msra.mxu0 %v2211
      %2229 = vmatprep.subr.bf16.mxu0 %v2214
      %2230 = vmatpush1.bf16.msra.mxu0 %v2213
      %2231 = vmatprep.subr.bf16.mxu0 %v2221
      %2232 = vmatpush1.bf16.msra.mxu0 %v2218
      %2233 = vmatprep.subr.bf16.mxu0 0
      %2234 = vmatpush1.bf16.msra.mxu0 0
      %2235 = vmatprep.subr.bf16.mxu0 0
      %2236 = vmatpush1.bf16.msra.mxu0 0
      %2237 = vmatprep.subr.bf16.mxu0 0
      %2238 = vmatpush1.bf16.msra.mxu0 0
      %2239 = vmatprep.subr.bf16.mxu0 0
      %2240 = vmatpush1.bf16.msra.mxu0 0
      %2241 = vmatprep.subr.bf16.mxu0 0
      %2242 = vmatpush1.bf16.msra.mxu0 0
      %2243 = vmatprep.subr.bf16.mxu0 0
      %2244 = vmatpush1.bf16.msra.mxu0 0
      %2245 = vmatprep.subr.bf16.mxu0 0
      %2246 = vmatpush1.bf16.msra.mxu0 0
      %2247 = vmatprep.subr.bf16.mxu0 0
      %2248 = vmatpush1.bf16.msra.mxu0 0
      %2249 = vmatprep.subr.bf16.mxu0 0
      %2250 = vmatpush1.bf16.msra.mxu0 0
      %2251 = vmatprep.subr.bf16.mxu0 0
      %2252 = vmatpush1.bf16.msra.mxu0 0
      %2253 = vmatprep.subr.bf16.mxu0 0
      %2254 = vmatpush1.bf16.msra.mxu0 0
      %2255 = vmatprep.mubr.bf16.mxu0 0
      %2256 = vmatmul.mubr.bf16.gmra.mrb[0].mxu0 %v552
      %v2257 = vpop.f32.mrb[0].mxu0
      %v2258 = vadd.f32 %v101, %v2257
      %v2259 = vpop.f32.mrb[0].mxu0
      %v2260 = vadd.f32 %v102, %v2259
      %v2261 = vpop.f32.mrb[0].mxu0
      %v2262 = vpop.f32.mrb[0].mxu0
      %2263 = vdwg.mxu0
      %v2264 = vmul.f32 %v2258, %v2258
      %v2265 = vmul.f32 %v2260, %v2260
      %2266 = vmatprep.subr.mxu0 0.0
      %2267 = vmatpush1.msra.mxu0 1.0
      %2268 = vmatprep.subr.mxu0 0.0
      %2269 = vmatpush1.msra.mxu0 1.0
      %2270 = vmatprep.subr.mxu0 0.0
      %2271 = vmatpush1.msra.mxu0 1.0
      %2272 = vmatprep.subr.mxu0 0.0
      %2273 = vmatpush1.msra.mxu0 1.0
      %2274 = vmatprep.subr.mxu0 0.0
      %2275 = vmatpush1.msra.mxu0 1.0
      %2276 = vmatprep.subr.mxu0 0.0
      %2277 = vmatpush1.msra.mxu0 1.0
      %2278 = vmatprep.subr.mxu0 0.0
      %2279 = vmatpush1.msra.mxu0 1.0
      %2280 = vmatprep.subr.mxu0 0.0
      %2281 = vmatpush1.msra.mxu0 1.0
      %2282 = vmatprep.subr.mxu0 0.0
      %2283 = vmatpush1.msra.mxu0 1.0
      %2284 = vmatprep.subr.mxu0 0.0
      %2285 = vmatpush1.msra.mxu0 1.0
      %2286 = vmatprep.subr.mxu0 0.0
      %2287 = vmatpush1.msra.mxu0 1.0
      %2288 = vmatprep.subr.mxu0 0.0
      %2289 = vmatpush1.msra.mxu0 1.0
      %2290 = vmatprep.subr.mxu0 0.0
      %2291 = vmatpush1.msra.mxu0 1.0
      %2292 = vmatprep.subr.mxu0 0.0
      %2293 = vmatpush1.msra.mxu0 1.0
      %2294 = vmatprep.subr.mxu0 0.0
      %2295 = vmatpush1.msra.mxu0 1.0
      %2296 = vmatprep.subr.mxu0 0.0
      %2297 = vmatpush1.msra.mxu0 1.0
      %2298 = vmatprep.subr.mxu0 0.0
      %2299 = vmatpush1.msra.mxu0 1.0
      %2300 = vmatprep.subr.mxu0 0.0
      %2301 = vmatpush1.msra.mxu0 1.0
      %2302 = vmatprep.subr.mxu0 0.0
      %2303 = vmatpush1.msra.mxu0 1.0
      %2304 = vmatprep.subr.mxu0 0.0
      %2305 = vmatpush1.msra.mxu0 1.0
      %2306 = vmatprep.subr.mxu0 0.0
      %2307 = vmatpush1.msra.mxu0 1.0
      %2308 = vmatprep.subr.mxu0 0.0
      %2309 = vmatpush1.msra.mxu0 1.0
      %2310 = vmatprep.subr.mxu0 0.0
      %2311 = vmatpush1.msra.mxu0 1.0
      %2312 = vmatprep.subr.mxu0 0.0
      %2313 = vmatpush1.msra.mxu0 1.0
      %2314 = vmatprep.subr.mxu0 0.0
      %2315 = vmatpush1.msra.mxu0 1.0
      %2316 = vmatprep.subr.mxu0 0.0
      %2317 = vmatpush1.msra.mxu0 1.0
      %2318 = vmatprep.subr.mxu0 0.0
      %2319 = vmatpush1.msra.mxu0 1.0
      %2320 = vmatprep.subr.mxu0 0.0
      %2321 = vmatpush1.msra.mxu0 1.0
      %2322 = vmatprep.subr.mxu0 0.0
      %2323 = vmatpush1.msra.mxu0 1.0
      %2324 = vmatprep.subr.mxu0 0.0
      %2325 = vmatpush1.msra.mxu0 1.0
      %2326 = vmatprep.subr.mxu0 0.0
      %2327 = vmatpush1.msra.mxu0 1.0
      %2328 = vmatprep.subr.mxu0 0.0
      %2329 = vmatpush1.msra.mxu0 1.0
      %2330 = vmatprep.mubr.f32.mxu0 %v2260
      %2331 = vmatmul.mubr.f32.gmra.mrb[0].mxu0 %v2258
      %v2332 = vpop.f32.mrb[0].mxu0
      %v2333 = vadd.f32 0.0, %v2332
      %v2334 = vpop.f32.mrb[0].mxu0
      %2335 = vmatprep.mubr.f32.mxu0 %v2265
      %2336 = vmatmul.mubr.f32.gmra.mrb[0].mxu0 %v2264
      %v2337 = vpop.f32.mrb[0].mxu0
      %v2338 = vadd.f32 0.0, %v2337
      %v2339 = vpop.f32.mrb[0].mxu0
      %2340 = vdwg.mxu0
      %v2341 = vmul.f32 %v2333, 0.00390625
      %v2342 = vmul.f32 %v2338, 0.00390625
      %v2343 = vmul.f32 %v2341, %v2341
      %v2344 = vsub.f32 %v2342, %v2343
      %v2345 = vmax.f32 %v2344, 0.0
      %v2346 = vadd.f32 %v2345, 1e-05
      %v2347 = vrsqrt.pop %v2346
      %v2348 = vmul.f32 %v684, %v2347
      %v2349 = vmul.f32 %v2341, %v2348
      %v2350 = vsub.f32 %v689, %v2349
      %2352 = vset.pattern.permute.xlu0 0
      %2353 = vperm.xlu0 %2352, %v2348
      %v2354 = vpop.permute.xlu0 %2353
      %v2356 = vmul.f32 %v2258, %v2354
      %v2357 = vmul.f32 %v2260, %v2354
      %2359 = vset.pattern.permute.xlu0 0
      %2360 = vperm.xlu0 %2359, %v2350
      %v2361 = vpop.permute.xlu0 %2360
      %v2363 = vadd.f32 %v2356, %v2361
      %v2364 = vadd.f32 %v2357, %v2361
      %v2365 = vmul.f32 %v1257, 2.0
      %v2366 = vmul.f32 %v1258, 2.0
      %v2367 = vadd.f32 %v704, %v2365
      %v2368 = vadd.f32 %v705, %v2366
      %v2369 = vmul.f32 %v1810, 2.0
      %v2370 = vmul.f32 %v1811, 2.0
      %v2371 = vadd.f32 %v2367, %v2369
      %v2372 = vadd.f32 %v2368, %v2370
      %v2373 = vadd.f32 %v2371, %v2363
      %v2374 = vadd.f32 %v2372, %v2364
      %v2375 = vmul.f32 %v2373, 0.041666668
      %v2376 = vmul.f32 %v2374, 0.041666668
      %v2377 = vadd.f32 %v53, %v2375
      %v2378 = vadd.f32 %v54, %v2376
    $region42: #{tpu_custom_call.1} parent=1 // loop_footer
      %s52 = sadd.s32 1, %s48
    $region43: #{tpu_custom_call.1} parent=1 // loop_footer_branch
      %47 = sbr.rel target = $region39
    $region44: #{tpu_custom_call.1} parent=1 // loop_exit
      _
    %2379 = vst [vmem:[#allocation5] sm:$0xff] %v53
    %2380 = vst [vmem:[#allocation5 + $0x8] sm:$0xff] %v54
    // Predicated region
    $region45: #{tpu_custom_call.1} parent=1 // pred_check
      _
    $region46: #{tpu_custom_call.1} parent=1 // pred_check_branch
      %2382 = sbr.rel (0) target = $region48
    $region47: #{tpu_custom_call.1} parent=1 // pred_region
      %s2384 = ssub.s32 256, 256
      %2385 = vsyncadd [#allocation4], %s2384
      %s2387 = sshll.u32 [#allocation5], 4
      %s2388 = int_to_ptr.vmem [resolvable:$true] %s2387
      %2390 = dma.vmem_to_hbm [thread:$0]  %s2388, 256, %s8, [#allocation4]
    $region48: #{tpu_custom_call.1} parent=1 // pred_fallthru
      _
    // Predicated region
    $region49: #{tpu_custom_call.1} parent=1 // pred_check
      _
    $region50: #{tpu_custom_call.1} parent=1 // pred_check_branch
      %2392 = sbr.rel (0) target = $region52
    $region51: #{tpu_custom_call.1} parent=1 // pred_region
      %2393 = dma.done [#allocation4], 256
    $region52: #{tpu_custom_call.1} parent=1 // pred_fallthru
      _
    %2394 = vsyncpa [#allocation3], 1
    %2395 = vsyncpa [#allocation4], 1

</llo_original>
